<compile_context>
chip_gen: v7x
topology: tpu7x:2x2x1
jax: 0.10.0
libtpu: 0.0.40
codegen_flags: <defaults>
</compile_context>

<pallas_src>
import jax
import jax.numpy as jnp
from jax.experimental import pallas as pl
from jax.experimental.pallas import tpu as pltpu

H1, H2, H3 = 1024, 512, 256
OUT_PAD = 128                        # lane-dense padded width of the final layer
SHIFT_W = H1 + H2 + H3 + OUT_PAD     # 1920 lanes of packed shifts / final bias


def mlp_kernel(x_ref, w1_ref, w2_ref, w3_ref, w4_ref, sh_ref, o_ref):
    """One batch tile: relu(x@W1+s1) -> relu(@W2+s2) -> relu(@W3+s3) -> @W4+b4."""
    s1 = sh_ref[:, 0:H1]
    s2 = sh_ref[:, H1:H1 + H2]
    s3 = sh_ref[:, H1 + H2:H1 + H2 + H3]
    b4 = sh_ref[:, H1 + H2 + H3:SHIFT_W]

    # x is already bf16 (cast in the wrapper); all matmuls accumulate in f32 on the MXU.
    h = jnp.dot(x_ref[...], w1_ref[...], preferred_element_type=jnp.float32)
    h = jnp.maximum(h + s1, 0.0).astype(jnp.bfloat16)   # Dropout(0.3): identity in eval

    h = jnp.dot(h, w2_ref[...], preferred_element_type=jnp.float32)
    h = jnp.maximum(h + s2, 0.0).astype(jnp.bfloat16)   # Dropout(0.3): identity in eval

    h = jnp.dot(h, w3_ref[...], preferred_element_type=jnp.float32)
    h = jnp.maximum(h + s3, 0.0).astype(jnp.bfloat16)   # Dropout(0, 3): identity

    o_ref[...] = jnp.dot(h, w4_ref[...], preferred_element_type=jnp.float32) + b4


def multilabel_mlp_forward(x, packed, output_dim, *, batch_tile=256):
    """x: (B, d_in) f32/bf16.  packed: (W1,W2,W3,W4_pad bf16, shifts f32).  -> (B, output_dim) f32."""
    w1, w2, w3, w4, shifts = packed
    B, d_in = x.shape

    # Sublane-friendly batch tile + ragged-batch padding (masked rows are sliced off below).
    b8 = ((B + 7) // 8) * 8
    tb = min(((batch_tile + 7) // 8) * 8, b8)
    b_full = pl.cdiv(b8, tb) * tb
    if b_full != B:
        x = jnp.pad(x, ((0, b_full - B), (0, 0)))
    x = x.astype(jnp.bfloat16)           # bf16-fed MXU path; halves x HBM bytes

    flops = 2 * b_full * (d_in * H1 + H1 * H2 + H2 * H3 + H3 * OUT_PAD)
    bytes_accessed = (2 * (w1.size + w2.size + w3.size + w4.size)   # bf16 weights
                      + 4 * shifts.size
                      + 2 * b_full * d_in                            # bf16 x
                      + 4 * b_full * OUT_PAD)                        # f32 out

    def resident(shape):
        # Same block every grid step -> keep resident in VMEM, single-buffered
        # (the default double buffer would be a dead second copy of ~1.4 MiB of weights).
        return pl.BlockSpec(shape, lambda i: (0, 0), pipeline_mode=pl.Buffered(1))

    out_padded = pl.pallas_call(
        mlp_kernel,
        out_shape=jax.ShapeDtypeStruct((b_full, OUT_PAD), jnp.float32),
        grid=(b_full // tb,),
        in_specs=[
            pl.BlockSpec((tb, d_in), lambda i: (i, 0)),   # x: tiled over batch
            resident(w1.shape),
            resident(w2.shape),
            resident(w3.shape),
            resident(w4.shape),
            resident(shifts.shape),
        ],
        out_specs=pl.BlockSpec((tb, OUT_PAD), lambda i: (i, 0)),
        compiler_params=pltpu.CompilerParams(
            # Weight-DMA bound: do NOT ask for a 2-TC split (it would duplicate the
            # dominant weight fetch into each core's private VMEM on v7x).
            dimension_semantics=("arbitrary",)),
        cost_estimate=pl.CostEstimate(flops=flops, transcendentals=0,
                                      bytes_accessed=bytes_accessed),
    )(x, w1, w2, w3, w4, shifts)
    return out_padded[:B, :output_dim]


def init_params(key, input_dim, output_dim, eps=1e-5):
    """Build PyTorch-style raw params and the folded/packed bf16 kernel params."""
    dims = [input_dim, H1, H2, H3, output_dim]
    keys = jax.random.split(key, 14)
    ki = iter(range(14))

    def linear(k_w, k_b, din, dout):
        bound = 1.0 / jnp.sqrt(jnp.float32(din))
        w = jax.random.uniform(k_w, (din, dout), jnp.float32, -bound, bound)
        b = jax.random.uniform(k_b, (dout,), jnp.float32, -bound, bound)
        return w, b

    raw = []
    packed_w = []
    packed_shift = []
    for layer in range(3):
        din, dout = dims[layer], dims[layer + 1]
        w, b = linear(keys[next(ki)], keys[next(ki)], din, dout)
        # Deterministic, non-trivial BN stats/affine so the BN math is exercised.
        gamma = 1.0 + 0.1 * jax.random.normal(keys[next(ki)], (dout,), jnp.float32)
        beta = 0.1 * jax.random.normal(keys[next(ki)], (dout,), jnp.float32)
        mean = 0.05 * jnp.arange(dout, dtype=jnp.float32) / dout
        var = 1.0 + 0.5 * (jnp.arange(dout, dtype=jnp.float32) / dout)
        raw.append((w, b, gamma, beta, mean, var))

        scale = gamma / jnp.sqrt(var + eps)
        packed_w.append((w * scale[None, :]).astype(jnp.bfloat16))
        packed_shift.append((b - mean) * scale + beta)

    w4, b4 = linear(keys[next(ki)], keys[next(ki)], dims[3], dims[4])
    raw.append((w4, b4))
    w4_pad = jnp.zeros((dims[3], OUT_PAD), jnp.float32).at[:, :output_dim].set(w4)
    b4_pad = jnp.zeros((OUT_PAD,), jnp.float32).at[:output_dim].set(b4)
    packed_shift.append(b4_pad)

    shifts = jnp.concatenate(packed_shift)[None, :]            # (1, 1920) float32
    packed = (packed_w[0], packed_w[1], packed_w[2],
              w4_pad.astype(jnp.bfloat16), shifts)
    return packed, raw


def reference_forward(x, raw, eps=1e-5):
    """Eval-mode PyTorch semantics in plain f32 JAX (BN on running stats, dropout = identity)."""
    h = x
    for (w, b, gamma, beta, mean, var) in raw[:3]:
        h = h @ w + b
        h = (h - mean) / jnp.sqrt(var + eps) * gamma + beta
        h = jnp.maximum(h, 0.0)
    w4, b4 = raw[3]
    return h @ w4 + b4


if __name__ == "__main__":
    key = jax.random.PRNGKey(0)
    k_x, k_p = jax.random.split(key)

    batch = 128          # single grid step (tb = B) -> no per-step overhead
    input_dim = 32       # tabular feature vector
    output_dim = 16      # multilabel targets

    x = jax.random.normal(k_x, (batch, input_dim), jnp.float32)
    packed, raw = init_params(k_p, input_dim, output_dim)

    out = multilabel_mlp_forward(x, packed, output_dim)
    out = jax.block_until_ready(out)

    ref = reference_forward(x, raw)
    assert out.shape == (batch, output_dim)
    # bf16 weights/activations inside the kernel -> allow ~1% relative error vs f32 reference.
    assert jnp.allclose(out, ref, atol=5e-2, rtol=5e-2), \
        float(jnp.max(jnp.abs(out - ref)))

    print("KERNEL_OK")
</pallas_src>

<mosaic_0001>
module attributes {stable_mosaic.version = 11 : i64} {
  func.func @mlp_kernel(%arg0: i32, %arg1: memref<128x32xbf16, #tpu.memory_space<vmem>>, %arg2: memref<32x1024xbf16, #tpu.memory_space<vmem>>, %arg3: memref<1024x512xbf16, #tpu.memory_space<vmem>>, %arg4: memref<512x256xbf16, #tpu.memory_space<vmem>>, %arg5: memref<256x128xbf16, #tpu.memory_space<vmem>>, %arg6: memref<1x1920xf32, #tpu.memory_space<vmem>>, %arg7: memref<128x128xf32, #tpu.memory_space<vmem>>) attributes {dimension_semantics = [#tpu.dimension_semantics<arbitrary>], iteration_bounds = array<i64: 1>, scalar_prefetch = 0 : i64, scratch_operands = 0 : i64, tpu.core_type = #tpu.core_type<tc>, window_params = [{transform_indices = @transform_0, window_bounds = array<i64: 128, 32>}, {pipeline_mode = #tpu.pipeline_mode<synchronous>, transform_indices = @transform_1, window_bounds = array<i64: 32, 1024>}, {pipeline_mode = #tpu.pipeline_mode<synchronous>, transform_indices = @transform_2, window_bounds = array<i64: 1024, 512>}, {pipeline_mode = #tpu.pipeline_mode<synchronous>, transform_indices = @transform_3, window_bounds = array<i64: 512, 256>}, {pipeline_mode = #tpu.pipeline_mode<synchronous>, transform_indices = @transform_4, window_bounds = array<i64: 256, 128>}, {pipeline_mode = #tpu.pipeline_mode<synchronous>, transform_indices = @transform_5, window_bounds = array<i64: 1, 1920>}, {transform_indices = @transform_6, window_bounds = array<i64: 128, 128>}]} {
    %c0 = arith.constant 0 : index
    %c0_0 = arith.constant 0 : index
    %0 = vector.load %arg6[%c0, %c0_0] : memref<1x1920xf32, #tpu.memory_space<vmem>>, vector<1x1024xf32>
    %c0_1 = arith.constant 0 : index
    %c1024 = arith.constant 1024 : index
    %1 = vector.load %arg6[%c0_1, %c1024] : memref<1x1920xf32, #tpu.memory_space<vmem>>, vector<1x512xf32>
    %c0_2 = arith.constant 0 : index
    %c1536 = arith.constant 1536 : index
    %2 = vector.load %arg6[%c0_2, %c1536] : memref<1x1920xf32, #tpu.memory_space<vmem>>, vector<1x256xf32>
    %c0_3 = arith.constant 0 : index
    %c1792 = arith.constant 1792 : index
    %3 = vector.load %arg6[%c0_3, %c1792] : memref<1x1920xf32, #tpu.memory_space<vmem>>, vector<1x128xf32>
    %c0_4 = arith.constant 0 : index
    %c0_5 = arith.constant 0 : index
    %4 = vector.load %arg1[%c0_4, %c0_5] : memref<128x32xbf16, #tpu.memory_space<vmem>>, vector<128x32xbf16>
    %c0_6 = arith.constant 0 : index
    %c0_7 = arith.constant 0 : index
    %5 = vector.load %arg2[%c0_6, %c0_7] : memref<32x1024xbf16, #tpu.memory_space<vmem>>, vector<32x1024xbf16>
    %cst = arith.constant dense<0.000000e+00> : vector<128x1024xf32>
    %6 = tpu.matmul %4, %5, %cst {dimension_numbers = #tpu.dot_dimension_numbers<[1], [0], [0], [1], [0, 0, 1, 1], [], []>} : vector<128x32xbf16>, vector<32x1024xbf16>, vector<128x1024xf32> -> vector<128x1024xf32>
    %7 = vector.broadcast %0 : vector<1x1024xf32> to vector<128x1024xf32>
    %8 = arith.addf %6, %7 : vector<128x1024xf32>
    %cst_8 = arith.constant 0.000000e+00 : f32
    %9 = vector.broadcast %cst_8 : f32 to vector<128x1024xf32>
    %10 = arith.maximumf %8, %9 : vector<128x1024xf32>
    %11 = arith.truncf %10 : vector<128x1024xf32> to vector<128x1024xbf16>
    %c0_9 = arith.constant 0 : index
    %c0_10 = arith.constant 0 : index
    %12 = vector.load %arg3[%c0_9, %c0_10] : memref<1024x512xbf16, #tpu.memory_space<vmem>>, vector<1024x512xbf16>
    %cst_11 = arith.constant dense<0.000000e+00> : vector<128x512xf32>
    %13 = tpu.matmul %11, %12, %cst_11 {dimension_numbers = #tpu.dot_dimension_numbers<[1], [0], [0], [1], [0, 0, 1, 1], [], []>} : vector<128x1024xbf16>, vector<1024x512xbf16>, vector<128x512xf32> -> vector<128x512xf32>
    %14 = vector.broadcast %1 : vector<1x512xf32> to vector<128x512xf32>
    %15 = arith.addf %13, %14 : vector<128x512xf32>
    %cst_12 = arith.constant 0.000000e+00 : f32
    %16 = vector.broadcast %cst_12 : f32 to vector<128x512xf32>
    %17 = arith.maximumf %15, %16 : vector<128x512xf32>
    %18 = arith.truncf %17 : vector<128x512xf32> to vector<128x512xbf16>
    %c0_13 = arith.constant 0 : index
    %c0_14 = arith.constant 0 : index
    %19 = vector.load %arg4[%c0_13, %c0_14] : memref<512x256xbf16, #tpu.memory_space<vmem>>, vector<512x256xbf16>
    %cst_15 = arith.constant dense<0.000000e+00> : vector<128x256xf32>
    %20 = tpu.matmul %18, %19, %cst_15 {dimension_numbers = #tpu.dot_dimension_numbers<[1], [0], [0], [1], [0, 0, 1, 1], [], []>} : vector<128x512xbf16>, vector<512x256xbf16>, vector<128x256xf32> -> vector<128x256xf32>
    %21 = vector.broadcast %2 : vector<1x256xf32> to vector<128x256xf32>
    %22 = arith.addf %20, %21 : vector<128x256xf32>
    %cst_16 = arith.constant 0.000000e+00 : f32
    %23 = vector.broadcast %cst_16 : f32 to vector<128x256xf32>
    %24 = arith.maximumf %22, %23 : vector<128x256xf32>
    %25 = arith.truncf %24 : vector<128x256xf32> to vector<128x256xbf16>
    %c0_17 = arith.constant 0 : index
    %c0_18 = arith.constant 0 : index
    %26 = vector.load %arg5[%c0_17, %c0_18] : memref<256x128xbf16, #tpu.memory_space<vmem>>, vector<256x128xbf16>
    %cst_19 = arith.constant dense<0.000000e+00> : vector<128x128xf32>
    %27 = tpu.matmul %25, %26, %cst_19 {dimension_numbers = #tpu.dot_dimension_numbers<[1], [0], [0], [1], [0, 0, 1, 1], [], []>} : vector<128x256xbf16>, vector<256x128xbf16>, vector<128x128xf32> -> vector<128x128xf32>
    %28 = vector.broadcast %3 : vector<1x128xf32> to vector<128x128xf32>
    %29 = arith.addf %27, %28 : vector<128x128xf32>
    %c0_20 = arith.constant 0 : index
    %c0_21 = arith.constant 0 : index
    %30 = vector.load %arg7[%c0_20, %c0_21] : memref<128x128xf32, #tpu.memory_space<vmem>>, vector<128x128xf32>
    tpu.vector_store %arg7[%c0_20, %c0_21], %29 {strides = array<i32>} : memref<128x128xf32, #tpu.memory_space<vmem>>, vector<128x128xf32>,
    return
  }
  func.func @transform_0(%arg0: i32) -> (i32, i32) {
    %c0_i32 = arith.constant 0 : i32
    %c0_i32_0 = arith.constant 0 : i32
    return %arg0, %c0_i32 : i32, i32
  }
  func.func @transform_1(%arg0: i32) -> (i32, i32) {
    %c0_i32 = arith.constant 0 : i32
    %c0_i32_0 = arith.constant 0 : i32
    %c0_i32_1 = arith.constant 0 : i32
    return %c0_i32, %c0_i32_0 : i32, i32
  }
  func.func @transform_2(%arg0: i32) -> (i32, i32) {
    %c0_i32 = arith.constant 0 : i32
    %c0_i32_0 = arith.constant 0 : i32
    %c0_i32_1 = arith.constant 0 : i32
    return %c0_i32, %c0_i32_0 : i32, i32
  }
  func.func @transform_3(%arg0: i32) -> (i32, i32) {
    %c0_i32 = arith.constant 0 : i32
    %c0_i32_0 = arith.constant 0 : i32
    %c0_i32_1 = arith.constant 0 : i32
    return %c0_i32, %c0_i32_0 : i32, i32
  }
  func.func @transform_4(%arg0: i32) -> (i32, i32) {
    %c0_i32 = arith.constant 0 : i32
    %c0_i32_0 = arith.constant 0 : i32
    %c0_i32_1 = arith.constant 0 : i32
    return %c0_i32, %c0_i32_0 : i32, i32
  }
  func.func @transform_5(%arg0: i32) -> (i32, i32) {
    %c0_i32 = arith.constant 0 : i32
    %c0_i32_0 = arith.constant 0 : i32
    %c0_i32_1 = arith.constant 0 : i32
    return %c0_i32, %c0_i32_0 : i32, i32
  }
  func.func @transform_6(%arg0: i32) -> (i32, i32) {
    %c0_i32 = arith.constant 0 : i32
    %c0_i32_0 = arith.constant 0 : i32
    return %arg0, %c0_i32 : i32, i32
  }
}

</mosaic_0001>

<llo_original>
// kernel: tpu_custom_call.1
$region0: #{tpu_custom_call.1}
  #allocation0 [shape = 'u32[]', space=smem, size = 0x4, offset = 0x4, fixed_abs, tag = 'smem constant byte address 0x4 - core index']
  #allocation1 [shape = 'u32[144,128]{1,0:T(1,128)}', space=vmem, size = 0x12000, scoped, tag = 'internal scratch']
  %s0 = inlined_call_operand.vmem [shape: bf16[128,32], index: 0, kind: input, shape index: {}]
  %s1 = inlined_call_operand.hbm [shape: bf16[32,1024], index: 1, kind: input, shape index: {}]
  %s2 = inlined_call_operand.hbm [shape: bf16[1024,512], index: 2, kind: input, shape index: {}]
  %s3 = inlined_call_operand.hbm [shape: bf16[512,256], index: 3, kind: input, shape index: {}]
  %s4 = inlined_call_operand.hbm [shape: bf16[256,128], index: 4, kind: input, shape index: {}]
  %s5 = inlined_call_operand.vmem [shape: f32[1,1920], index: 5, kind: input, shape index: {}]
  %s6 = inlined_call_operand.hbm [shape: f32[128,128], index: 6, kind: output, shape index: {}]
  %s7 = sld [smem:[#allocation0]]
  $region50: #{tpu_custom_call.1} parent=0
    _
  %s9 = ssub.s32 1, %s7
  %s10 = scalar_select 0, %s9, %s7
  $region1: #{tpu_custom_call.1} parent=0
    #allocation2 [shape = 'u8[65536]{0}', space=vmem, size = 0x10000, scoped, tag = 'input window, operand 1, single buffered']
    #allocation3 [shape = 's32[1]{0}', space=sflag, size = 0x4, scoped, tag = 'scoped memory for tpu_custom_call.1']
    #allocation4 [shape = 's32[1]{0}', space=sflag, size = 0x4, scoped, tag = 'scoped memory for tpu_custom_call.1']
    #allocation5 [shape = 'u8[1048576]{0}', space=vmem, size = 0x100000, scoped, tag = 'input window, operand 2, single buffered']
    #allocation6 [shape = 's32[1]{0}', space=sflag, size = 0x4, scoped, tag = 'scoped memory for tpu_custom_call.1']
    #allocation7 [shape = 'u8[262144]{0}', space=vmem, size = 0x40000, scoped, tag = 'input window, operand 3, single buffered']
    #allocation8 [shape = 'u8[65536]{0}', space=vmem, size = 0x10000, scoped, tag = 'input window, operand 4, single buffered']
    #allocation9 [shape = 's32[1]{0}', space=sflag, size = 0x4, scoped, tag = 'scoped memory for tpu_custom_call.1']
    #allocation10 [shape = 'u8[65536]{0}', space=vmem, size = 0x10000, scoped, tag = 'output window, operand 0, single buffered']
    %11 = vsyncpa [#allocation3], 0
    %12 = vsyncpa [#allocation6], 0
    %13 = vsyncpa [#allocation9], 0
    %14 = vsyncpa [#allocation4], 0
    // Predicated region
    $region2: #{tpu_custom_call.1} parent=1 // pred_check
      _
    $region3: #{tpu_custom_call.1} parent=1 // pred_check_branch
      %16 = sbr.rel (0) target = $region5
    $region4: #{tpu_custom_call.1} parent=1 // pred_region
      _
    $region5: #{tpu_custom_call.1} parent=1 // pred_fallthru
      _
    // Predicated region
    $region6: #{tpu_custom_call.1} parent=1 // pred_check
      _
    $region7: #{tpu_custom_call.1} parent=1 // pred_check_branch
      %18 = sbr.rel (0) target = $region9
    $region8: #{tpu_custom_call.1} parent=1 // pred_region
      %s20 = ssub.s32 2048, 2048
      %21 = vsyncadd [#allocation3], %s20
      %s22 = sshll.u32 [#allocation2], 4
      %s23 = int_to_ptr.vmem [resolvable:$true] %s22
      %28 = dma.hbm_to_vmem [thread:$0]  %s1, 2048, %s23, [#allocation3], 512, 512, 32
    $region9: #{tpu_custom_call.1} parent=1 // pred_fallthru
      _
    // Predicated region
    $region10: #{tpu_custom_call.1} parent=1 // pred_check
      _
    $region11: #{tpu_custom_call.1} parent=1 // pred_check_branch
      %30 = sbr.rel (0) target = $region13
    $region12: #{tpu_custom_call.1} parent=1 // pred_region
      %s32 = ssub.s32 32768, 32768
      %33 = vsyncadd [#allocation6], %s32
      %s34 = sshll.u32 [#allocation5], 4
      %s35 = int_to_ptr.vmem [resolvable:$true] %s34
      %40 = dma.hbm_to_vmem [thread:$0]  %s2, 32768, %s35, [#allocation6], 256, 256, 16
    $region13: #{tpu_custom_call.1} parent=1 // pred_fallthru
      _
    // Predicated region
    $region14: #{tpu_custom_call.1} parent=1 // pred_check
      _
    $region15: #{tpu_custom_call.1} parent=1 // pred_check_branch
      %42 = sbr.rel (0) target = $region17
    $region16: #{tpu_custom_call.1} parent=1 // pred_region
      %s44 = ssub.s32 8192, 8192
      %45 = vsyncadd [#allocation6], %s44
      %s46 = sshll.u32 [#allocation7], 4
      %s47 = int_to_ptr.vmem [resolvable:$true] %s46
      %52 = dma.hbm_to_vmem [thread:$0]  %s3, 8192, %s47, [#allocation6], 128, 128, 8
    $region17: #{tpu_custom_call.1} parent=1 // pred_fallthru
      _
    // Predicated region
    $region18: #{tpu_custom_call.1} parent=1 // pred_check
      _
    $region19: #{tpu_custom_call.1} parent=1 // pred_check_branch
      %54 = sbr.rel (0) target = $region21
    $region20: #{tpu_custom_call.1} parent=1 // pred_region
      %s56 = ssub.s32 2048, 2048
      %57 = vsyncadd [#allocation9], %s56
      %s58 = sshll.u32 [#allocation8], 4
      %s59 = int_to_ptr.vmem [resolvable:$true] %s58
      %64 = dma.hbm_to_vmem [thread:$0]  %s4, 2048, %s59, [#allocation9], 64, 64, 4
    $region21: #{tpu_custom_call.1} parent=1 // pred_fallthru
      _
    // Predicated region
    $region22: #{tpu_custom_call.1} parent=1 // pred_check
      _
    $region23: #{tpu_custom_call.1} parent=1 // pred_check_branch
      %66 = sbr.rel (0) target = $region25
    $region24: #{tpu_custom_call.1} parent=1 // pred_region
      _
    $region25: #{tpu_custom_call.1} parent=1 // pred_fallthru
      _
    // Predicated region
    $region26: #{tpu_custom_call.1} parent=1 // pred_check
      _
    $region27: #{tpu_custom_call.1} parent=1 // pred_check_branch
      %68 = sbr.rel (0) target = $region29
    $region28: #{tpu_custom_call.1} parent=1 // pred_region
      %69 = dma.done [#allocation3], 2048
    $region29: #{tpu_custom_call.1} parent=1 // pred_fallthru
      _
    // Predicated region
    $region30: #{tpu_custom_call.1} parent=1 // pred_check
      _
    $region31: #{tpu_custom_call.1} parent=1 // pred_check_branch
      %71 = sbr.rel (0) target = $region33
    $region32: #{tpu_custom_call.1} parent=1 // pred_region
      %72 = dma.done [#allocation6], 32768
    $region33: #{tpu_custom_call.1} parent=1 // pred_fallthru
      _
    // Predicated region
    $region34: #{tpu_custom_call.1} parent=1 // pred_check
      _
    $region35: #{tpu_custom_call.1} parent=1 // pred_check_branch
      %74 = sbr.rel (0) target = $region37
    $region36: #{tpu_custom_call.1} parent=1 // pred_region
      %75 = dma.done [#allocation6], 8192
    $region37: #{tpu_custom_call.1} parent=1 // pred_fallthru
      _
    // Predicated region
    $region38: #{tpu_custom_call.1} parent=1 // pred_check
      _
    $region39: #{tpu_custom_call.1} parent=1 // pred_check_branch
      %77 = sbr.rel (0) target = $region41
    $region40: #{tpu_custom_call.1} parent=1 // pred_region
      %78 = dma.done [#allocation9], 2048
    $region41: #{tpu_custom_call.1} parent=1 // pred_fallthru
      _
    %v80 = vld [vmem:[%s5] sm:$0xff]
    %v81 = vld [vmem:[%s5 + $0x8] sm:$0xf]
    %v82 = vld [vmem:[%s5 + $0xc] sm:$0x3]
    %v83 = vld [vmem:[%s5 + $0xe] sm:$0x1]
    %v84 = vld [vmem:[%s0] sm:$0xf]
    %v85 = vld [vmem:[%s0 + $0x4] sm:$0xf]
    %v86 = vld [vmem:[%s0 + $0x8] sm:$0xf]
    %v87 = vld [vmem:[%s0 + $0xc] sm:$0xf]
    %v88 = vld [vmem:[%s0 + $0x10] sm:$0xf]
    %v89 = vld [vmem:[%s0 + $0x14] sm:$0xf]
    %v90 = vld [vmem:[%s0 + $0x18] sm:$0xf]
    %v91 = vld [vmem:[%s0 + $0x1c] sm:$0xf]
    %v92 = vld [vmem:[%s0 + $0x20] sm:$0xf]
    %v93 = vld [vmem:[%s0 + $0x24] sm:$0xf]
    %v94 = vld [vmem:[%s0 + $0x28] sm:$0xf]
    %v95 = vld [vmem:[%s0 + $0x2c] sm:$0xf]
    %v96 = vld [vmem:[%s0 + $0x30] sm:$0xf]
    %v97 = vld [vmem:[%s0 + $0x34] sm:$0xf]
    %v98 = vld [vmem:[%s0 + $0x38] sm:$0xf]
    %v99 = vld [vmem:[%s0 + $0x3c] sm:$0xf]
    %v100 = vld [vmem:[#allocation2] sm:$0xff]
    %v101 = vld [vmem:[#allocation2 + $0x8] sm:$0xff]
    %v102 = vld [vmem:[#allocation2 + $0x10] sm:$0xff]
    %v103 = vld [vmem:[#allocation2 + $0x18] sm:$0xff]
    %v104 = vld [vmem:[#allocation2 + $0x20] sm:$0xff]
    %v105 = vld [vmem:[#allocation2 + $0x28] sm:$0xff]
    %v106 = vld [vmem:[#allocation2 + $0x30] sm:$0xff]
    %v107 = vld [vmem:[#allocation2 + $0x38] sm:$0xff]
    %v108 = vld [vmem:[#allocation2 + $0x40] sm:$0xff]
    %v109 = vld [vmem:[#allocation2 + $0x48] sm:$0xff]
    %v110 = vld [vmem:[#allocation2 + $0x50] sm:$0xff]
    %v111 = vld [vmem:[#allocation2 + $0x58] sm:$0xff]
    %v112 = vld [vmem:[#allocation2 + $0x60] sm:$0xff]
    %v113 = vld [vmem:[#allocation2 + $0x68] sm:$0xff]
    %v114 = vld [vmem:[#allocation2 + $0x70] sm:$0xff]
    %v115 = vld [vmem:[#allocation2 + $0x78] sm:$0xff]
    %v117 = vlaneseq
    %v118 = vshrl.u32 %v117, 7
    %v119 = vsub.s32 0, %v118
    %v120 = vrot.slane %v80, %v119
    %v121 = vlaneseq
    %v122 = vshrl.u32 %v121, 7
    %v123 = vsub.s32 1, %v122
    %v124 = vrot.slane %v80, %v123
    %v125 = vlaneseq
    %v126 = vshrl.u32 %v125, 7
    %v127 = vsub.s32 2, %v126
    %v128 = vrot.slane %v80, %v127
    %v129 = vlaneseq
    %v130 = vshrl.u32 %v129, 7
    %v131 = vsub.s32 3, %v130
    %v132 = vrot.slane %v80, %v131
    %v133 = vlaneseq
    %v134 = vshrl.u32 %v133, 7
    %v135 = vsub.s32 4, %v134
    %v136 = vrot.slane %v80, %v135
    %v137 = vlaneseq
    %v138 = vshrl.u32 %v137, 7
    %v139 = vsub.s32 5, %v138
    %v140 = vrot.slane %v80, %v139
    %v141 = vlaneseq
    %v142 = vshrl.u32 %v141, 7
    %v143 = vsub.s32 6, %v142
    %v144 = vrot.slane %v80, %v143
    %v145 = vlaneseq
    %v146 = vshrl.u32 %v145, 7
    %v147 = vsub.s32 7, %v146
    %v148 = vrot.slane %v80, %v147
    %v173 = vunpack.c.l.b16 %v84
    %v174 = vunpack.c.l.b16 %v85
    %v175 = vunpack.c.l.b16 %v86
    %v176 = vunpack.c.l.b16 %v87
    %v177 = vunpack.c.l.b16 %v88
    %v178 = vunpack.c.l.b16 %v89
    %v179 = vunpack.c.l.b16 %v90
    %v180 = vunpack.c.l.b16 %v91
    %v181 = vunpack.c.l.b16 %v92
    %v182 = vunpack.c.l.b16 %v93
    %v183 = vunpack.c.l.b16 %v94
    %v184 = vunpack.c.l.b16 %v95
    %v185 = vunpack.c.l.b16 %v96
    %v186 = vunpack.c.l.b16 %v97
    %v187 = vunpack.c.l.b16 %v98
    %v188 = vunpack.c.l.b16 %v99
    %v189 = vpack.c.b16 %v174, %v173
    %v190 = vpack.c.b16 %v176, %v175
    %v191 = vpack.c.b16 %v178, %v177
    %v192 = vpack.c.b16 %v180, %v179
    %v193 = vpack.c.b16 %v182, %v181
    %v194 = vpack.c.b16 %v184, %v183
    %v195 = vpack.c.b16 %v186, %v185
    %v196 = vpack.c.b16 %v188, %v187
    %v213 = vunpack.c.l.b16 %v100
    %v214 = vunpack.c.h.b16 %v100
    %v215 = vunpack.c.l.b16 %v101
    %v216 = vunpack.c.h.b16 %v101
    %v217 = vunpack.c.l.b16 %v102
    %v218 = vunpack.c.h.b16 %v102
    %v219 = vunpack.c.l.b16 %v103
    %v220 = vunpack.c.h.b16 %v103
    %v221 = vunpack.c.l.b16 %v104
    %v222 = vunpack.c.h.b16 %v104
    %v223 = vunpack.c.l.b16 %v105
    %v224 = vunpack.c.h.b16 %v105
    %v225 = vunpack.c.l.b16 %v106
    %v226 = vunpack.c.h.b16 %v106
    %v227 = vunpack.c.l.b16 %v107
    %v228 = vunpack.c.h.b16 %v107
    %v229 = vunpack.c.l.b16 %v108
    %v230 = vunpack.c.h.b16 %v108
    %v231 = vunpack.c.l.b16 %v109
    %v232 = vunpack.c.h.b16 %v109
    %v233 = vunpack.c.l.b16 %v110
    %v234 = vunpack.c.h.b16 %v110
    %v235 = vunpack.c.l.b16 %v111
    %v236 = vunpack.c.h.b16 %v111
    %v237 = vunpack.c.l.b16 %v112
    %v238 = vunpack.c.h.b16 %v112
    %v239 = vunpack.c.l.b16 %v113
    %v240 = vunpack.c.h.b16 %v113
    %v241 = vunpack.c.l.b16 %v114
    %v242 = vunpack.c.h.b16 %v114
    %v243 = vunpack.c.l.b16 %v115
    %v244 = vunpack.c.h.b16 %v115
    %v245 = vpack.c.b16 %v221, %v213
    %v246 = vpack.c.b16 %v222, %v214
    %v247 = vpack.c.b16 %v223, %v215
    %v248 = vpack.c.b16 %v224, %v216
    %v249 = vpack.c.b16 %v225, %v217
    %v250 = vpack.c.b16 %v226, %v218
    %v251 = vpack.c.b16 %v227, %v219
    %v252 = vpack.c.b16 %v228, %v220
    %v253 = vpack.c.b16 %v237, %v229
    %v254 = vpack.c.b16 %v238, %v230
    %v255 = vpack.c.b16 %v239, %v231
    %v256 = vpack.c.b16 %v240, %v232
    %v257 = vpack.c.b16 %v241, %v233
    %v258 = vpack.c.b16 %v242, %v234
    %v259 = vpack.c.b16 %v243, %v235
    %v260 = vpack.c.b16 %v244, %v236
    %vm277 = vcmask 261120
    %v279 = vsel %vm277, %v189, 0
    %v282 = vsel %vm277, %v190, 0
    %v285 = vsel %vm277, %v191, 0
    %v288 = vsel %vm277, %v192, 0
    %v291 = vsel %vm277, %v193, 0
    %v294 = vsel %vm277, %v194, 0
    %v297 = vsel %vm277, %v195, 0
    %v300 = vsel %vm277, %v196, 0
    %302 = vmatprep.subr.bf16.mxu0 %v246
    %303 = vmatpush1.bf16.msra.mxu0 %v245
    %304 = vmatprep.subr.bf16.mxu0 %v254
    %305 = vmatpush1.bf16.msra.mxu0 %v253
    %306 = vmatprep.subr.bf16.mxu0 0
    %307 = vmatpush1.bf16.msra.mxu0 0
    %308 = vmatprep.subr.bf16.mxu0 0
    %309 = vmatpush1.bf16.msra.mxu0 0
    %310 = vmatprep.subr.bf16.mxu0 0
    %311 = vmatpush1.bf16.msra.mxu0 0
    %312 = vmatprep.subr.bf16.mxu0 0
    %313 = vmatpush1.bf16.msra.mxu0 0
    %314 = vmatprep.subr.bf16.mxu0 0
    %315 = vmatpush1.bf16.msra.mxu0 0
    %316 = vmatprep.subr.bf16.mxu0 0
    %317 = vmatpush1.bf16.msra.mxu0 0
    %318 = vmatprep.subr.bf16.mxu0 0
    %319 = vmatpush1.bf16.msra.mxu0 0
    %320 = vmatprep.subr.bf16.mxu0 0
    %321 = vmatpush1.bf16.msra.mxu0 0
    %322 = vmatprep.subr.bf16.mxu0 0
    %323 = vmatpush1.bf16.msra.mxu0 0
    %324 = vmatprep.subr.bf16.mxu0 0
    %325 = vmatpush1.bf16.msra.mxu0 0
    %326 = vmatprep.subr.bf16.mxu0 0
    %327 = vmatpush1.bf16.msra.mxu0 0
    %328 = vmatprep.subr.bf16.mxu0 0
    %329 = vmatpush1.bf16.msra.mxu0 0
    %330 = vmatprep.subr.bf16.mxu0 0
    %331 = vmatpush1.bf16.msra.mxu0 0
    %332 = vmatprep.subr.bf16.mxu0 0
    %333 = vmatpush1.bf16.msra.mxu0 0
    %334 = vmatprep.mubr.bf16.mxu0 0
    %335 = vmatmul.mubr.bf16.gmra.mrb[0].mxu0 %v279
    %v336 = vpop.f32.mrb[0].mxu0
    %v337 = vadd.f32 %v120, %v336
    %v338 = vpop.f32.mrb[0].mxu0
    %v339 = vadd.f32 %v124, %v338
    %v340 = vpop.f32.mrb[0].mxu0
    %v341 = vadd.f32 %v120, %v340
    %v342 = vpop.f32.mrb[0].mxu0
    %v343 = vadd.f32 %v124, %v342
    %344 = vmatprep.mubr.bf16.mxu0 0
    %345 = vmatmul.mubr.bf16.gmra.mrb[0].mxu0 %v282
    %v346 = vpop.f32.mrb[0].mxu0
    %v347 = vadd.f32 %v120, %v346
    %v348 = vpop.f32.mrb[0].mxu0
    %v349 = vadd.f32 %v124, %v348
    %v350 = vpop.f32.mrb[0].mxu0
    %v351 = vadd.f32 %v120, %v350
    %v352 = vpop.f32.mrb[0].mxu0
    %v353 = vadd.f32 %v124, %v352
    %354 = vmatprep.mubr.bf16.mxu0 0
    %355 = vmatmul.mubr.bf16.gmra.mrb[0].mxu0 %v285
    %v356 = vpop.f32.mrb[0].mxu0
    %v357 = vadd.f32 %v120, %v356
    %v358 = vpop.f32.mrb[0].mxu0
    %v359 = vadd.f32 %v124, %v358
    %v360 = vpop.f32.mrb[0].mxu0
    %v361 = vadd.f32 %v120, %v360
    %v362 = vpop.f32.mrb[0].mxu0
    %v363 = vadd.f32 %v124, %v362
    %364 = vmatprep.mubr.bf16.mxu0 0
    %365 = vmatmul.mubr.bf16.gmra.mrb[0].mxu0 %v288
    %v366 = vpop.f32.mrb[0].mxu0
    %v367 = vadd.f32 %v120, %v366
    %v368 = vpop.f32.mrb[0].mxu0
    %v369 = vadd.f32 %v124, %v368
    %v370 = vpop.f32.mrb[0].mxu0
    %v371 = vadd.f32 %v120, %v370
    %v372 = vpop.f32.mrb[0].mxu0
    %v373 = vadd.f32 %v124, %v372
    %374 = vmatprep.mubr.bf16.mxu0 0
    %375 = vmatmul.mubr.bf16.gmra.mrb[0].mxu0 %v291
    %v376 = vpop.f32.mrb[0].mxu0
    %v377 = vadd.f32 %v120, %v376
    %v378 = vpop.f32.mrb[0].mxu0
    %v379 = vadd.f32 %v124, %v378
    %v380 = vpop.f32.mrb[0].mxu0
    %v381 = vadd.f32 %v120, %v380
    %v382 = vpop.f32.mrb[0].mxu0
    %v383 = vadd.f32 %v124, %v382
    %384 = vmatprep.mubr.bf16.mxu0 0
    %385 = vmatmul.mubr.bf16.gmra.mrb[0].mxu0 %v294
    %v386 = vpop.f32.mrb[0].mxu0
    %v387 = vadd.f32 %v120, %v386
    %v388 = vpop.f32.mrb[0].mxu0
    %v389 = vadd.f32 %v124, %v388
    %v390 = vpop.f32.mrb[0].mxu0
    %v391 = vadd.f32 %v120, %v390
    %v392 = vpop.f32.mrb[0].mxu0
    %v393 = vadd.f32 %v124, %v392
    %394 = vmatprep.mubr.bf16.mxu0 0
    %395 = vmatmul.mubr.bf16.gmra.mrb[0].mxu0 %v297
    %v396 = vpop.f32.mrb[0].mxu0
    %v397 = vadd.f32 %v120, %v396
    %v398 = vpop.f32.mrb[0].mxu0
    %v399 = vadd.f32 %v124, %v398
    %v400 = vpop.f32.mrb[0].mxu0
    %v401 = vadd.f32 %v120, %v400
    %v402 = vpop.f32.mrb[0].mxu0
    %v403 = vadd.f32 %v124, %v402
    %404 = vmatprep.mubr.bf16.mxu0 0
    %405 = vmatmul.mubr.bf16.gmra.mrb[0].mxu0 %v300
    %v406 = vpop.f32.mrb[0].mxu0
    %v407 = vadd.f32 %v120, %v406
    %v408 = vpop.f32.mrb[0].mxu0
    %v409 = vadd.f32 %v124, %v408
    %v410 = vpop.f32.mrb[0].mxu0
    %v411 = vadd.f32 %v120, %v410
    %v412 = vpop.f32.mrb[0].mxu0
    %v413 = vadd.f32 %v124, %v412
    %414 = vdwg.mxu0
    %415 = vmatprep.subr.bf16.mxu0 %v248
    %416 = vmatpush1.bf16.msra.mxu0 %v247
    %417 = vmatprep.subr.bf16.mxu0 %v256
    %418 = vmatpush1.bf16.msra.mxu0 %v255
    %419 = vmatprep.subr.bf16.mxu0 0
    %420 = vmatpush1.bf16.msra.mxu0 0
    %421 = vmatprep.subr.bf16.mxu0 0
    %422 = vmatpush1.bf16.msra.mxu0 0
    %423 = vmatprep.subr.bf16.mxu0 0
    %424 = vmatpush1.bf16.msra.mxu0 0
    %425 = vmatprep.subr.bf16.mxu0 0
    %426 = vmatpush1.bf16.msra.mxu0 0
    %427 = vmatprep.subr.bf16.mxu0 0
    %428 = vmatpush1.bf16.msra.mxu0 0
    %429 = vmatprep.subr.bf16.mxu0 0
    %430 = vmatpush1.bf16.msra.mxu0 0
    %431 = vmatprep.subr.bf16.mxu0 0
    %432 = vmatpush1.bf16.msra.mxu0 0
    %433 = vmatprep.subr.bf16.mxu0 0
    %434 = vmatpush1.bf16.msra.mxu0 0
    %435 = vmatprep.subr.bf16.mxu0 0
    %436 = vmatpush1.bf16.msra.mxu0 0
    %437 = vmatprep.subr.bf16.mxu0 0
    %438 = vmatpush1.bf16.msra.mxu0 0
    %439 = vmatprep.subr.bf16.mxu0 0
    %440 = vmatpush1.bf16.msra.mxu0 0
    %441 = vmatprep.subr.bf16.mxu0 0
    %442 = vmatpush1.bf16.msra.mxu0 0
    %443 = vmatprep.subr.bf16.mxu0 0
    %444 = vmatpush1.bf16.msra.mxu0 0
    %445 = vmatprep.subr.bf16.mxu0 0
    %446 = vmatpush1.bf16.msra.mxu0 0
    %447 = vmatprep.mubr.bf16.mxu0 0
    %448 = vmatmul.mubr.bf16.gmra.mrb[0].mxu0 %v279
    %v449 = vpop.f32.mrb[0].mxu0
    %v450 = vadd.f32 %v128, %v449
    %v451 = vpop.f32.mrb[0].mxu0
    %v452 = vadd.f32 %v132, %v451
    %v453 = vpop.f32.mrb[0].mxu0
    %v454 = vadd.f32 %v128, %v453
    %v455 = vpop.f32.mrb[0].mxu0
    %v456 = vadd.f32 %v132, %v455
    %457 = vmatprep.mubr.bf16.mxu0 0
    %458 = vmatmul.mubr.bf16.gmra.mrb[0].mxu0 %v282
    %v459 = vpop.f32.mrb[0].mxu0
    %v460 = vadd.f32 %v128, %v459
    %v461 = vpop.f32.mrb[0].mxu0
    %v462 = vadd.f32 %v132, %v461
    %v463 = vpop.f32.mrb[0].mxu0
    %v464 = vadd.f32 %v128, %v463
    %v465 = vpop.f32.mrb[0].mxu0
    %v466 = vadd.f32 %v132, %v465
    %467 = vmatprep.mubr.bf16.mxu0 0
    %468 = vmatmul.mubr.bf16.gmra.mrb[0].mxu0 %v285
    %v469 = vpop.f32.mrb[0].mxu0
    %v470 = vadd.f32 %v128, %v469
    %v471 = vpop.f32.mrb[0].mxu0
    %v472 = vadd.f32 %v132, %v471
    %v473 = vpop.f32.mrb[0].mxu0
    %v474 = vadd.f32 %v128, %v473
    %v475 = vpop.f32.mrb[0].mxu0
    %v476 = vadd.f32 %v132, %v475
    %477 = vmatprep.mubr.bf16.mxu0 0
    %478 = vmatmul.mubr.bf16.gmra.mrb[0].mxu0 %v288
    %v479 = vpop.f32.mrb[0].mxu0
    %v480 = vadd.f32 %v128, %v479
    %v481 = vpop.f32.mrb[0].mxu0
    %v482 = vadd.f32 %v132, %v481
    %v483 = vpop.f32.mrb[0].mxu0
    %v484 = vadd.f32 %v128, %v483
    %v485 = vpop.f32.mrb[0].mxu0
    %v486 = vadd.f32 %v132, %v485
    %487 = vmatprep.mubr.bf16.mxu0 0
    %488 = vmatmul.mubr.bf16.gmra.mrb[0].mxu0 %v291
    %v489 = vpop.f32.mrb[0].mxu0
    %v490 = vadd.f32 %v128, %v489
    %v491 = vpop.f32.mrb[0].mxu0
    %v492 = vadd.f32 %v132, %v491
    %v493 = vpop.f32.mrb[0].mxu0
    %v494 = vadd.f32 %v128, %v493
    %v495 = vpop.f32.mrb[0].mxu0
    %v496 = vadd.f32 %v132, %v495
    %497 = vmatprep.mubr.bf16.mxu0 0
    %498 = vmatmul.mubr.bf16.gmra.mrb[0].mxu0 %v294
    %v499 = vpop.f32.mrb[0].mxu0
    %v500 = vadd.f32 %v128, %v499
    %v501 = vpop.f32.mrb[0].mxu0
    %v502 = vadd.f32 %v132, %v501
    %v503 = vpop.f32.mrb[0].mxu0
    %v504 = vadd.f32 %v128, %v503
    %v505 = vpop.f32.mrb[0].mxu0
    %v506 = vadd.f32 %v132, %v505
    %507 = vmatprep.mubr.bf16.mxu0 0
    %508 = vmatmul.mubr.bf16.gmra.mrb[0].mxu0 %v297
    %v509 = vpop.f32.mrb[0].mxu0
    %v510 = vadd.f32 %v128, %v509
    %v511 = vpop.f32.mrb[0].mxu0
    %v512 = vadd.f32 %v132, %v511
    %v513 = vpop.f32.mrb[0].mxu0
    %v514 = vadd.f32 %v128, %v513
    %v515 = vpop.f32.mrb[0].mxu0
    %v516 = vadd.f32 %v132, %v515
    %517 = vmatprep.mubr.bf16.mxu0 0
    %518 = vmatmul.mubr.bf16.gmra.mrb[0].mxu0 %v300
    %v519 = vpop.f32.mrb[0].mxu0
    %v520 = vadd.f32 %v128, %v519
    %v521 = vpop.f32.mrb[0].mxu0
    %v522 = vadd.f32 %v132, %v521
    %v523 = vpop.f32.mrb[0].mxu0
    %v524 = vadd.f32 %v128, %v523
    %v525 = vpop.f32.mrb[0].mxu0
    %v526 = vadd.f32 %v132, %v525
    %527 = vdwg.mxu0
    %528 = vmatprep.subr.bf16.mxu0 %v250
    %529 = vmatpush1.bf16.msra.mxu0 %v249
    %530 = vmatprep.subr.bf16.mxu0 %v258
    %531 = vmatpush1.bf16.msra.mxu0 %v257
    %532 = vmatprep.subr.bf16.mxu0 0
    %533 = vmatpush1.bf16.msra.mxu0 0
    %534 = vmatprep.subr.bf16.mxu0 0
    %535 = vmatpush1.bf16.msra.mxu0 0
    %536 = vmatprep.subr.bf16.mxu0 0
    %537 = vmatpush1.bf16.msra.mxu0 0
    %538 = vmatprep.subr.bf16.mxu0 0
    %539 = vmatpush1.bf16.msra.mxu0 0
    %540 = vmatprep.subr.bf16.mxu0 0
    %541 = vmatpush1.bf16.msra.mxu0 0
    %542 = vmatprep.subr.bf16.mxu0 0
    %543 = vmatpush1.bf16.msra.mxu0 0
    %544 = vmatprep.subr.bf16.mxu0 0
    %545 = vmatpush1.bf16.msra.mxu0 0
    %546 = vmatprep.subr.bf16.mxu0 0
    %547 = vmatpush1.bf16.msra.mxu0 0
    %548 = vmatprep.subr.bf16.mxu0 0
    %549 = vmatpush1.bf16.msra.mxu0 0
    %550 = vmatprep.subr.bf16.mxu0 0
    %551 = vmatpush1.bf16.msra.mxu0 0
    %552 = vmatprep.subr.bf16.mxu0 0
    %553 = vmatpush1.bf16.msra.mxu0 0
    %554 = vmatprep.subr.bf16.mxu0 0
    %555 = vmatpush1.bf16.msra.mxu0 0
    %556 = vmatprep.subr.bf16.mxu0 0
    %557 = vmatpush1.bf16.msra.mxu0 0
    %558 = vmatprep.subr.bf16.mxu0 0
    %559 = vmatpush1.bf16.msra.mxu0 0
    %560 = vmatprep.mubr.bf16.mxu0 0
    %561 = vmatmul.mubr.bf16.gmra.mrb[0].mxu0 %v279
    %v562 = vpop.f32.mrb[0].mxu0
    %v563 = vadd.f32 %v136, %v562
    %v564 = vpop.f32.mrb[0].mxu0
    %v565 = vadd.f32 %v140, %v564
    %v566 = vpop.f32.mrb[0].mxu0
    %v567 = vadd.f32 %v136, %v566
    %v568 = vpop.f32.mrb[0].mxu0
    %v569 = vadd.f32 %v140, %v568
    %570 = vmatprep.mubr.bf16.mxu0 0
    %571 = vmatmul.mubr.bf16.gmra.mrb[0].mxu0 %v282
    %v572 = vpop.f32.mrb[0].mxu0
    %v573 = vadd.f32 %v136, %v572
    %v574 = vpop.f32.mrb[0].mxu0
    %v575 = vadd.f32 %v140, %v574
    %v576 = vpop.f32.mrb[0].mxu0
    %v577 = vadd.f32 %v136, %v576
    %v578 = vpop.f32.mrb[0].mxu0
    %v579 = vadd.f32 %v140, %v578
    %580 = vmatprep.mubr.bf16.mxu0 0
    %581 = vmatmul.mubr.bf16.gmra.mrb[0].mxu0 %v285
    %v582 = vpop.f32.mrb[0].mxu0
    %v583 = vadd.f32 %v136, %v582
    %v584 = vpop.f32.mrb[0].mxu0
    %v585 = vadd.f32 %v140, %v584
    %v586 = vpop.f32.mrb[0].mxu0
    %v587 = vadd.f32 %v136, %v586
    %v588 = vpop.f32.mrb[0].mxu0
    %v589 = vadd.f32 %v140, %v588
    %590 = vmatprep.mubr.bf16.mxu0 0
    %591 = vmatmul.mubr.bf16.gmra.mrb[0].mxu0 %v288
    %v592 = vpop.f32.mrb[0].mxu0
    %v593 = vadd.f32 %v136, %v592
    %v594 = vpop.f32.mrb[0].mxu0
    %v595 = vadd.f32 %v140, %v594
    %v596 = vpop.f32.mrb[0].mxu0
    %v597 = vadd.f32 %v136, %v596
    %v598 = vpop.f32.mrb[0].mxu0
    %v599 = vadd.f32 %v140, %v598
    %600 = vmatprep.mubr.bf16.mxu0 0
    %601 = vmatmul.mubr.bf16.gmra.mrb[0].mxu0 %v291
    %v602 = vpop.f32.mrb[0].mxu0
    %v603 = vadd.f32 %v136, %v602
    %v604 = vpop.f32.mrb[0].mxu0
    %v605 = vadd.f32 %v140, %v604
    %v606 = vpop.f32.mrb[0].mxu0
    %v607 = vadd.f32 %v136, %v606
    %v608 = vpop.f32.mrb[0].mxu0
    %v609 = vadd.f32 %v140, %v608
    %610 = vmatprep.mubr.bf16.mxu0 0
    %611 = vmatmul.mubr.bf16.gmra.mrb[0].mxu0 %v294
    %v612 = vpop.f32.mrb[0].mxu0
    %v613 = vadd.f32 %v136, %v612
    %v614 = vpop.f32.mrb[0].mxu0
    %v615 = vadd.f32 %v140, %v614
    %v616 = vpop.f32.mrb[0].mxu0
    %v617 = vadd.f32 %v136, %v616
    %v618 = vpop.f32.mrb[0].mxu0
    %v619 = vadd.f32 %v140, %v618
    %620 = vmatprep.mubr.bf16.mxu0 0
    %621 = vmatmul.mubr.bf16.gmra.mrb[0].mxu0 %v297
    %v622 = vpop.f32.mrb[0].mxu0
    %v623 = vadd.f32 %v136, %v622
    %v624 = vpop.f32.mrb[0].mxu0
    %v625 = vadd.f32 %v140, %v624
    %v626 = vpop.f32.mrb[0].mxu0
    %v627 = vadd.f32 %v136, %v626
    %v628 = vpop.f32.mrb[0].mxu0
    %v629 = vadd.f32 %v140, %v628
    %630 = vmatprep.mubr.bf16.mxu0 0
    %631 = vmatmul.mubr.bf16.gmra.mrb[0].mxu0 %v300
    %v632 = vpop.f32.mrb[0].mxu0
    %v633 = vadd.f32 %v136, %v632
    %v634 = vpop.f32.mrb[0].mxu0
    %v635 = vadd.f32 %v140, %v634
    %v636 = vpop.f32.mrb[0].mxu0
    %v637 = vadd.f32 %v136, %v636
    %v638 = vpop.f32.mrb[0].mxu0
    %v639 = vadd.f32 %v140, %v638
    %640 = vdwg.mxu0
    %641 = vmatprep.subr.bf16.mxu0 %v252
    %642 = vmatpush1.bf16.msra.mxu0 %v251
    %643 = vmatprep.subr.bf16.mxu0 %v260
    %644 = vmatpush1.bf16.msra.mxu0 %v259
    %645 = vmatprep.subr.bf16.mxu0 0
    %646 = vmatpush1.bf16.msra.mxu0 0
    %647 = vmatprep.subr.bf16.mxu0 0
    %648 = vmatpush1.bf16.msra.mxu0 0
    %649 = vmatprep.subr.bf16.mxu0 0
    %650 = vmatpush1.bf16.msra.mxu0 0
    %651 = vmatprep.subr.bf16.mxu0 0
    %652 = vmatpush1.bf16.msra.mxu0 0
    %653 = vmatprep.subr.bf16.mxu0 0
    %654 = vmatpush1.bf16.msra.mxu0 0
    %655 = vmatprep.subr.bf16.mxu0 0
    %656 = vmatpush1.bf16.msra.mxu0 0
    %657 = vmatprep.subr.bf16.mxu0 0
    %658 = vmatpush1.bf16.msra.mxu0 0
    %659 = vmatprep.subr.bf16.mxu0 0
    %660 = vmatpush1.bf16.msra.mxu0 0
    %661 = vmatprep.subr.bf16.mxu0 0
    %662 = vmatpush1.bf16.msra.mxu0 0
    %663 = vmatprep.subr.bf16.mxu0 0
    %664 = vmatpush1.bf16.msra.mxu0 0
    %665 = vmatprep.subr.bf16.mxu0 0
    %666 = vmatpush1.bf16.msra.mxu0 0
    %667 = vmatprep.subr.bf16.mxu0 0
    %668 = vmatpush1.bf16.msra.mxu0 0
    %669 = vmatprep.subr.bf16.mxu0 0
    %670 = vmatpush1.bf16.msra.mxu0 0
    %671 = vmatprep.subr.bf16.mxu0 0
    %672 = vmatpush1.bf16.msra.mxu0 0
    %673 = vmatprep.mubr.bf16.mxu0 0
    %674 = vmatmul.mubr.bf16.gmra.mrb[0].mxu0 %v279
    %v675 = vpop.f32.mrb[0].mxu0
    %v676 = vadd.f32 %v144, %v675
    %v677 = vpop.f32.mrb[0].mxu0
    %v678 = vadd.f32 %v148, %v677
    %v679 = vpop.f32.mrb[0].mxu0
    %v680 = vadd.f32 %v144, %v679
    %v681 = vpop.f32.mrb[0].mxu0
    %v682 = vadd.f32 %v148, %v681
    %683 = vmatprep.mubr.bf16.mxu0 0
    %684 = vmatmul.mubr.bf16.gmra.mrb[0].mxu0 %v282
    %v685 = vpop.f32.mrb[0].mxu0
    %v686 = vadd.f32 %v144, %v685
    %v687 = vpop.f32.mrb[0].mxu0
    %v688 = vadd.f32 %v148, %v687
    %v689 = vpop.f32.mrb[0].mxu0
    %v690 = vadd.f32 %v144, %v689
    %v691 = vpop.f32.mrb[0].mxu0
    %v692 = vadd.f32 %v148, %v691
    %693 = vmatprep.mubr.bf16.mxu0 0
    %694 = vmatmul.mubr.bf16.gmra.mrb[0].mxu0 %v285
    %v695 = vpop.f32.mrb[0].mxu0
    %v696 = vadd.f32 %v144, %v695
    %v697 = vpop.f32.mrb[0].mxu0
    %v698 = vadd.f32 %v148, %v697
    %v699 = vpop.f32.mrb[0].mxu0
    %v700 = vadd.f32 %v144, %v699
    %v701 = vpop.f32.mrb[0].mxu0
    %v702 = vadd.f32 %v148, %v701
    %703 = vmatprep.mubr.bf16.mxu0 0
    %704 = vmatmul.mubr.bf16.gmra.mrb[0].mxu0 %v288
    %v705 = vpop.f32.mrb[0].mxu0
    %v706 = vadd.f32 %v144, %v705
    %v707 = vpop.f32.mrb[0].mxu0
    %v708 = vadd.f32 %v148, %v707
    %v709 = vpop.f32.mrb[0].mxu0
    %v710 = vadd.f32 %v144, %v709
    %v711 = vpop.f32.mrb[0].mxu0
    %v712 = vadd.f32 %v148, %v711
    %713 = vmatprep.mubr.bf16.mxu0 0
    %714 = vmatmul.mubr.bf16.gmra.mrb[0].mxu0 %v291
    %v715 = vpop.f32.mrb[0].mxu0
    %v716 = vadd.f32 %v144, %v715
    %v717 = vpop.f32.mrb[0].mxu0
    %v718 = vadd.f32 %v148, %v717
    %v719 = vpop.f32.mrb[0].mxu0
    %v720 = vadd.f32 %v144, %v719
    %v721 = vpop.f32.mrb[0].mxu0
    %v722 = vadd.f32 %v148, %v721
    %723 = vmatprep.mubr.bf16.mxu0 0
    %724 = vmatmul.mubr.bf16.gmra.mrb[0].mxu0 %v294
    %v725 = vpop.f32.mrb[0].mxu0
    %v726 = vadd.f32 %v144, %v725
    %v727 = vpop.f32.mrb[0].mxu0
    %v728 = vadd.f32 %v148, %v727
    %v729 = vpop.f32.mrb[0].mxu0
    %v730 = vadd.f32 %v144, %v729
    %v731 = vpop.f32.mrb[0].mxu0
    %v732 = vadd.f32 %v148, %v731
    %733 = vmatprep.mubr.bf16.mxu0 0
    %734 = vmatmul.mubr.bf16.gmra.mrb[0].mxu0 %v297
    %v735 = vpop.f32.mrb[0].mxu0
    %v736 = vadd.f32 %v144, %v735
    %v737 = vpop.f32.mrb[0].mxu0
    %v738 = vadd.f32 %v148, %v737
    %v739 = vpop.f32.mrb[0].mxu0
    %v740 = vadd.f32 %v144, %v739
    %v741 = vpop.f32.mrb[0].mxu0
    %v742 = vadd.f32 %v148, %v741
    %743 = vmatprep.mubr.bf16.mxu0 0
    %744 = vmatmul.mubr.bf16.gmra.mrb[0].mxu0 %v300
    %v745 = vpop.f32.mrb[0].mxu0
    %v746 = vadd.f32 %v144, %v745
    %v747 = vpop.f32.mrb[0].mxu0
    %v748 = vadd.f32 %v148, %v747
    %v749 = vpop.f32.mrb[0].mxu0
    %v750 = vadd.f32 %v144, %v749
    %v751 = vpop.f32.mrb[0].mxu0
    %v752 = vadd.f32 %v148, %v751
    %753 = vdwg.mxu0
    %v754 = vmax.f32 %v337, 0.0
    %v755 = vmax.f32 %v339, 0.0
    %v756 = vmax.f32 %v450, 0.0
    %v757 = vmax.f32 %v452, 0.0
    %v758 = vmax.f32 %v563, 0.0
    %v759 = vmax.f32 %v565, 0.0
    %v760 = vmax.f32 %v676, 0.0
    %v761 = vmax.f32 %v678, 0.0
    %v762 = vmax.f32 %v341, 0.0
    %v763 = vmax.f32 %v343, 0.0
    %v764 = vmax.f32 %v454, 0.0
    %v765 = vmax.f32 %v456, 0.0
    %v766 = vmax.f32 %v567, 0.0
    %v767 = vmax.f32 %v569, 0.0
    %v768 = vmax.f32 %v680, 0.0
    %v769 = vmax.f32 %v682, 0.0
    %v770 = vmax.f32 %v347, 0.0
    %v771 = vmax.f32 %v349, 0.0
    %v772 = vmax.f32 %v460, 0.0
    %v773 = vmax.f32 %v462, 0.0
    %v774 = vmax.f32 %v573, 0.0
    %v775 = vmax.f32 %v575, 0.0
    %v776 = vmax.f32 %v686, 0.0
    %v777 = vmax.f32 %v688, 0.0
    %v778 = vmax.f32 %v351, 0.0
    %v779 = vmax.f32 %v353, 0.0
    %v780 = vmax.f32 %v464, 0.0
    %v781 = vmax.f32 %v466, 0.0
    %v782 = vmax.f32 %v577, 0.0
    %v783 = vmax.f32 %v579, 0.0
    %v784 = vmax.f32 %v690, 0.0
    %v785 = vmax.f32 %v692, 0.0
    %v786 = vmax.f32 %v357, 0.0
    %v787 = vmax.f32 %v359, 0.0
    %v788 = vmax.f32 %v470, 0.0
    %v789 = vmax.f32 %v472, 0.0
    %v790 = vmax.f32 %v583, 0.0
    %v791 = vmax.f32 %v585, 0.0
    %v792 = vmax.f32 %v696, 0.0
    %v793 = vmax.f32 %v698, 0.0
    %v794 = vmax.f32 %v361, 0.0
    %v795 = vmax.f32 %v363, 0.0
    %v796 = vmax.f32 %v474, 0.0
    %v797 = vmax.f32 %v476, 0.0
    %v798 = vmax.f32 %v587, 0.0
    %v799 = vmax.f32 %v589, 0.0
    %v800 = vmax.f32 %v700, 0.0
    %v801 = vmax.f32 %v702, 0.0
    %v802 = vmax.f32 %v367, 0.0
    %v803 = vmax.f32 %v369, 0.0
    %v804 = vmax.f32 %v480, 0.0
    %v805 = vmax.f32 %v482, 0.0
    %v806 = vmax.f32 %v593, 0.0
    %v807 = vmax.f32 %v595, 0.0
    %v808 = vmax.f32 %v706, 0.0
    %v809 = vmax.f32 %v708, 0.0
    %v810 = vmax.f32 %v371, 0.0
    %v811 = vmax.f32 %v373, 0.0
    %v812 = vmax.f32 %v484, 0.0
    %v813 = vmax.f32 %v486, 0.0
    %v814 = vmax.f32 %v597, 0.0
    %v815 = vmax.f32 %v599, 0.0
    %v816 = vmax.f32 %v710, 0.0
    %v817 = vmax.f32 %v712, 0.0
    %v818 = vmax.f32 %v377, 0.0
    %v819 = vmax.f32 %v379, 0.0
    %v820 = vmax.f32 %v490, 0.0
    %v821 = vmax.f32 %v492, 0.0
    %v822 = vmax.f32 %v603, 0.0
    %v823 = vmax.f32 %v605, 0.0
    %v824 = vmax.f32 %v716, 0.0
    %v825 = vmax.f32 %v718, 0.0
    %v826 = vmax.f32 %v381, 0.0
    %v827 = vmax.f32 %v383, 0.0
    %v828 = vmax.f32 %v494, 0.0
    %v829 = vmax.f32 %v496, 0.0
    %v830 = vmax.f32 %v607, 0.0
    %v831 = vmax.f32 %v609, 0.0
    %v832 = vmax.f32 %v720, 0.0
    %v833 = vmax.f32 %v722, 0.0
    %v834 = vmax.f32 %v387, 0.0
    %v835 = vmax.f32 %v389, 0.0
    %v836 = vmax.f32 %v500, 0.0
    %v837 = vmax.f32 %v502, 0.0
    %v838 = vmax.f32 %v613, 0.0
    %v839 = vmax.f32 %v615, 0.0
    %v840 = vmax.f32 %v726, 0.0
    %v841 = vmax.f32 %v728, 0.0
    %v842 = vmax.f32 %v391, 0.0
    %v843 = vmax.f32 %v393, 0.0
    %v844 = vmax.f32 %v504, 0.0
    %v845 = vmax.f32 %v506, 0.0
    %v846 = vmax.f32 %v617, 0.0
    %v847 = vmax.f32 %v619, 0.0
    %v848 = vmax.f32 %v730, 0.0
    %v849 = vmax.f32 %v732, 0.0
    %v850 = vmax.f32 %v397, 0.0
    %v851 = vmax.f32 %v399, 0.0
    %v852 = vmax.f32 %v510, 0.0
    %v853 = vmax.f32 %v512, 0.0
    %v854 = vmax.f32 %v623, 0.0
    %v855 = vmax.f32 %v625, 0.0
    %v856 = vmax.f32 %v736, 0.0
    %v857 = vmax.f32 %v738, 0.0
    %v858 = vmax.f32 %v401, 0.0
    %v859 = vmax.f32 %v403, 0.0
    %v860 = vmax.f32 %v514, 0.0
    %v861 = vmax.f32 %v516, 0.0
    %v862 = vmax.f32 %v627, 0.0
    %v863 = vmax.f32 %v629, 0.0
    %v864 = vmax.f32 %v740, 0.0
    %v865 = vmax.f32 %v742, 0.0
    %v866 = vmax.f32 %v407, 0.0
    %v867 = vmax.f32 %v409, 0.0
    %v868 = vmax.f32 %v520, 0.0
    %v869 = vmax.f32 %v522, 0.0
    %v870 = vmax.f32 %v633, 0.0
    %v871 = vmax.f32 %v635, 0.0
    %v872 = vmax.f32 %v746, 0.0
    %v873 = vmax.f32 %v748, 0.0
    %v874 = vmax.f32 %v411, 0.0
    %v875 = vmax.f32 %v413, 0.0
    %v876 = vmax.f32 %v524, 0.0
    %v877 = vmax.f32 %v526, 0.0
    %v878 = vmax.f32 %v637, 0.0
    %v879 = vmax.f32 %v639, 0.0
    %v880 = vmax.f32 %v750, 0.0
    %v881 = vmax.f32 %v752, 0.0
    %v882 = vpack.c.bf16 %v762, %v754
    %v883 = vpack.c.bf16 %v763, %v755
    %v884 = vpack.c.bf16 %v764, %v756
    %v885 = vpack.c.bf16 %v765, %v757
    %v886 = vpack.c.bf16 %v766, %v758
    %v887 = vpack.c.bf16 %v767, %v759
    %v888 = vpack.c.bf16 %v768, %v760
    %v889 = vpack.c.bf16 %v769, %v761
    %v890 = vpack.c.bf16 %v778, %v770
    %v891 = vpack.c.bf16 %v779, %v771
    %v892 = vpack.c.bf16 %v780, %v772
    %v893 = vpack.c.bf16 %v781, %v773
    %v894 = vpack.c.bf16 %v782, %v774
    %v895 = vpack.c.bf16 %v783, %v775
    %v896 = vpack.c.bf16 %v784, %v776
    %v897 = vpack.c.bf16 %v785, %v777
    %v898 = vpack.c.bf16 %v794, %v786
    %v899 = vpack.c.bf16 %v795, %v787
    %v900 = vpack.c.bf16 %v796, %v788
    %v901 = vpack.c.bf16 %v797, %v789
    %v902 = vpack.c.bf16 %v798, %v790
    %v903 = vpack.c.bf16 %v799, %v791
    %v904 = vpack.c.bf16 %v800, %v792
    %v905 = vpack.c.bf16 %v801, %v793
    %v906 = vpack.c.bf16 %v810, %v802
    %v907 = vpack.c.bf16 %v811, %v803
    %v908 = vpack.c.bf16 %v812, %v804
    %v909 = vpack.c.bf16 %v813, %v805
    %v910 = vpack.c.bf16 %v814, %v806
    %v911 = vpack.c.bf16 %v815, %v807
    %v912 = vpack.c.bf16 %v816, %v808
    %v913 = vpack.c.bf16 %v817, %v809
    %v914 = vpack.c.bf16 %v826, %v818
    %v915 = vpack.c.bf16 %v827, %v819
    %v916 = vpack.c.bf16 %v828, %v820
    %v917 = vpack.c.bf16 %v829, %v821
    %v918 = vpack.c.bf16 %v830, %v822
    %v919 = vpack.c.bf16 %v831, %v823
    %v920 = vpack.c.bf16 %v832, %v824
    %v921 = vpack.c.bf16 %v833, %v825
    %v922 = vpack.c.bf16 %v842, %v834
    %v923 = vpack.c.bf16 %v843, %v835
    %v924 = vpack.c.bf16 %v844, %v836
    %v925 = vpack.c.bf16 %v845, %v837
    %v926 = vpack.c.bf16 %v846, %v838
    %v927 = vpack.c.bf16 %v847, %v839
    %v928 = vpack.c.bf16 %v848, %v840
    %v929 = vpack.c.bf16 %v849, %v841
    %v930 = vpack.c.bf16 %v858, %v850
    %v931 = vpack.c.bf16 %v859, %v851
    %v932 = vpack.c.bf16 %v860, %v852
    %v933 = vpack.c.bf16 %v861, %v853
    %v934 = vpack.c.bf16 %v862, %v854
    %v935 = vpack.c.bf16 %v863, %v855
    %v936 = vpack.c.bf16 %v864, %v856
    %v937 = vpack.c.bf16 %v865, %v857
    %v938 = vpack.c.bf16 %v874, %v866
    %v939 = vpack.c.bf16 %v875, %v867
    %v940 = vpack.c.bf16 %v876, %v868
    %v941 = vpack.c.bf16 %v877, %v869
    %v942 = vpack.c.bf16 %v878, %v870
    %v943 = vpack.c.bf16 %v879, %v871
    %v944 = vpack.c.bf16 %v880, %v872
    %v945 = vpack.c.bf16 %v881, %v873
    %v946 = vld [vmem:[#allocation5] sm:$0xff]
    %v947 = vld [vmem:[#allocation5 + $0x8] sm:$0xff]
    %v948 = vld [vmem:[#allocation5 + $0x10] sm:$0xff]
    %v949 = vld [vmem:[#allocation5 + $0x18] sm:$0xff]
    %v950 = vld [vmem:[#allocation5 + $0x20] sm:$0xff]
    %v951 = vld [vmem:[#allocation5 + $0x28] sm:$0xff]
    %v952 = vld [vmem:[#allocation5 + $0x30] sm:$0xff]
    %v953 = vld [vmem:[#allocation5 + $0x38] sm:$0xff]
    %v954 = vld [vmem:[#allocation5 + $0x40] sm:$0xff]
    %v955 = vld [vmem:[#allocation5 + $0x48] sm:$0xff]
    %v956 = vld [vmem:[#allocation5 + $0x50] sm:$0xff]
    %v957 = vld [vmem:[#allocation5 + $0x58] sm:$0xff]
    %v958 = vld [vmem:[#allocation5 + $0x60] sm:$0xff]
    %v959 = vld [vmem:[#allocation5 + $0x68] sm:$0xff]
    %v960 = vld [vmem:[#allocation5 + $0x70] sm:$0xff]
    %v961 = vld [vmem:[#allocation5 + $0x78] sm:$0xff]
    %v962 = vld [vmem:[#allocation5 + $0x80] sm:$0xff]
    %v963 = vld [vmem:[#allocation5 + $0x88] sm:$0xff]
    %v964 = vld [vmem:[#allocation5 + $0x90] sm:$0xff]
    %v965 = vld [vmem:[#allocation5 + $0x98] sm:$0xff]
    %v966 = vld [vmem:[#allocation5 + $0xa0] sm:$0xff]
    %v967 = vld [vmem:[#allocation5 + $0xa8] sm:$0xff]
    %v968 = vld [vmem:[#allocation5 + $0xb0] sm:$0xff]
    %v969 = vld [vmem:[#allocation5 + $0xb8] sm:$0xff]
    %v970 = vld [vmem:[#allocation5 + $0xc0] sm:$0xff]
    %v971 = vld [vmem:[#allocation5 + $0xc8] sm:$0xff]
    %v972 = vld [vmem:[#allocation5 + $0xd0] sm:$0xff]
    %v973 = vld [vmem:[#allocation5 + $0xd8] sm:$0xff]
    %v974 = vld [vmem:[#allocation5 + $0xe0] sm:$0xff]
    %v975 = vld [vmem:[#allocation5 + $0xe8] sm:$0xff]
    %v976 = vld [vmem:[#allocation5 + $0xf0] sm:$0xff]
    %v977 = vld [vmem:[#allocation5 + $0xf8] sm:$0xff]
    %v978 = vld [vmem:[#allocation5 + $0x100] sm:$0xff]
    %v979 = vld [vmem:[#allocation5 + $0x108] sm:$0xff]
    %v980 = vld [vmem:[#allocation5 + $0x110] sm:$0xff]
    %v981 = vld [vmem:[#allocation5 + $0x118] sm:$0xff]
    %v982 = vld [vmem:[#allocation5 + $0x120] sm:$0xff]
    %v983 = vld [vmem:[#allocation5 + $0x128] sm:$0xff]
    %v984 = vld [vmem:[#allocation5 + $0x130] sm:$0xff]
    %v985 = vld [vmem:[#allocation5 + $0x138] sm:$0xff]
    %v986 = vld [vmem:[#allocation5 + $0x140] sm:$0xff]
    %v987 = vld [vmem:[#allocation5 + $0x148] sm:$0xff]
    %v988 = vld [vmem:[#allocation5 + $0x150] sm:$0xff]
    %v989 = vld [vmem:[#allocation5 + $0x158] sm:$0xff]
    %v990 = vld [vmem:[#allocation5 + $0x160] sm:$0xff]
    %v991 = vld [vmem:[#allocation5 + $0x168] sm:$0xff]
    %v992 = vld [vmem:[#allocation5 + $0x170] sm:$0xff]
    %v993 = vld [vmem:[#allocation5 + $0x178] sm:$0xff]
    %v994 = vld [vmem:[#allocation5 + $0x180] sm:$0xff]
    %v995 = vld [vmem:[#allocation5 + $0x188] sm:$0xff]
    %v996 = vld [vmem:[#allocation5 + $0x190] sm:$0xff]
    %v997 = vld [vmem:[#allocation5 + $0x198] sm:$0xff]
    %v998 = vld [vmem:[#allocation5 + $0x1a0] sm:$0xff]
    %v999 = vld [vmem:[#allocation5 + $0x1a8] sm:$0xff]
    %v1000 = vld [vmem:[#allocation5 + $0x1b0] sm:$0xff]
    %v1001 = vld [vmem:[#allocation5 + $0x1b8] sm:$0xff]
    %v1002 = vld [vmem:[#allocation5 + $0x1c0] sm:$0xff]
    %v1003 = vld [vmem:[#allocation5 + $0x1c8] sm:$0xff]
    %v1004 = vld [vmem:[#allocation5 + $0x1d0] sm:$0xff]
    %v1005 = vld [vmem:[#allocation5 + $0x1d8] sm:$0xff]
    %v1006 = vld [vmem:[#allocation5 + $0x1e0] sm:$0xff]
    %v1007 = vld [vmem:[#allocation5 + $0x1e8] sm:$0xff]
    %v1008 = vld [vmem:[#allocation5 + $0x1f0] sm:$0xff]
    %v1009 = vld [vmem:[#allocation5 + $0x1f8] sm:$0xff]
    %v1010 = vld [vmem:[#allocation5 + $0x200] sm:$0xff]
    %v1011 = vld [vmem:[#allocation5 + $0x208] sm:$0xff]
    %v1012 = vld [vmem:[#allocation5 + $0x210] sm:$0xff]
    %v1013 = vld [vmem:[#allocation5 + $0x218] sm:$0xff]
    %v1014 = vld [vmem:[#allocation5 + $0x220] sm:$0xff]
    %v1015 = vld [vmem:[#allocation5 + $0x228] sm:$0xff]
    %v1016 = vld [vmem:[#allocation5 + $0x230] sm:$0xff]
    %v1017 = vld [vmem:[#allocation5 + $0x238] sm:$0xff]
    %v1018 = vld [vmem:[#allocation5 + $0x240] sm:$0xff]
    %v1019 = vld [vmem:[#allocation5 + $0x248] sm:$0xff]
    %v1020 = vld [vmem:[#allocation5 + $0x250] sm:$0xff]
    %v1021 = vld [vmem:[#allocation5 + $0x258] sm:$0xff]
    %v1022 = vld [vmem:[#allocation5 + $0x260] sm:$0xff]
    %v1023 = vld [vmem:[#allocation5 + $0x268] sm:$0xff]
    %v1024 = vld [vmem:[#allocation5 + $0x270] sm:$0xff]
    %v1025 = vld [vmem:[#allocation5 + $0x278] sm:$0xff]
    %v1026 = vld [vmem:[#allocation5 + $0x280] sm:$0xff]
    %v1027 = vld [vmem:[#allocation5 + $0x288] sm:$0xff]
    %v1028 = vld [vmem:[#allocation5 + $0x290] sm:$0xff]
    %v1029 = vld [vmem:[#allocation5 + $0x298] sm:$0xff]
    %v1030 = vld [vmem:[#allocation5 + $0x2a0] sm:$0xff]
    %v1031 = vld [vmem:[#allocation5 + $0x2a8] sm:$0xff]
    %v1032 = vld [vmem:[#allocation5 + $0x2b0] sm:$0xff]
    %v1033 = vld [vmem:[#allocation5 + $0x2b8] sm:$0xff]
    %v1034 = vld [vmem:[#allocation5 + $0x2c0] sm:$0xff]
    %v1035 = vld [vmem:[#allocation5 + $0x2c8] sm:$0xff]
    %v1036 = vld [vmem:[#allocation5 + $0x2d0] sm:$0xff]
    %v1037 = vld [vmem:[#allocation5 + $0x2d8] sm:$0xff]
    %v1038 = vld [vmem:[#allocation5 + $0x2e0] sm:$0xff]
    %v1039 = vld [vmem:[#allocation5 + $0x2e8] sm:$0xff]
    %v1040 = vld [vmem:[#allocation5 + $0x2f0] sm:$0xff]
    %v1041 = vld [vmem:[#allocation5 + $0x2f8] sm:$0xff]
    %v1042 = vld [vmem:[#allocation5 + $0x300] sm:$0xff]
    %v1043 = vld [vmem:[#allocation5 + $0x308] sm:$0xff]
    %v1044 = vld [vmem:[#allocation5 + $0x310] sm:$0xff]
    %v1045 = vld [vmem:[#allocation5 + $0x318] sm:$0xff]
    %v1046 = vld [vmem:[#allocation5 + $0x320] sm:$0xff]
    %v1047 = vld [vmem:[#allocation5 + $0x328] sm:$0xff]
    %v1048 = vld [vmem:[#allocation5 + $0x330] sm:$0xff]
    %v1049 = vld [vmem:[#allocation5 + $0x338] sm:$0xff]
    %v1050 = vld [vmem:[#allocation5 + $0x340] sm:$0xff]
    %v1051 = vld [vmem:[#allocation5 + $0x348] sm:$0xff]
    %v1052 = vld [vmem:[#allocation5 + $0x350] sm:$0xff]
    %v1053 = vld [vmem:[#allocation5 + $0x358] sm:$0xff]
    %v1054 = vld [vmem:[#allocation5 + $0x360] sm:$0xff]
    %v1055 = vld [vmem:[#allocation5 + $0x368] sm:$0xff]
    %v1056 = vld [vmem:[#allocation5 + $0x370] sm:$0xff]
    %v1057 = vld [vmem:[#allocation5 + $0x378] sm:$0xff]
    %v1058 = vld [vmem:[#allocation5 + $0x380] sm:$0xff]
    %v1059 = vld [vmem:[#allocation5 + $0x388] sm:$0xff]
    %v1060 = vld [vmem:[#allocation5 + $0x390] sm:$0xff]
    %v1061 = vld [vmem:[#allocation5 + $0x398] sm:$0xff]
    %v1062 = vld [vmem:[#allocation5 + $0x3a0] sm:$0xff]
    %v1063 = vld [vmem:[#allocation5 + $0x3a8] sm:$0xff]
    %v1064 = vld [vmem:[#allocation5 + $0x3b0] sm:$0xff]
    %v1065 = vld [vmem:[#allocation5 + $0x3b8] sm:$0xff]
    %v1066 = vld [vmem:[#allocation5 + $0x3c0] sm:$0xff]
    %v1067 = vld [vmem:[#allocation5 + $0x3c8] sm:$0xff]
    %v1068 = vld [vmem:[#allocation5 + $0x3d0] sm:$0xff]
    %v1069 = vld [vmem:[#allocation5 + $0x3d8] sm:$0xff]
    %v1070 = vld [vmem:[#allocation5 + $0x3e0] sm:$0xff]
    %v1071 = vld [vmem:[#allocation5 + $0x3e8] sm:$0xff]
    %v1072 = vld [vmem:[#allocation5 + $0x3f0] sm:$0xff]
    %v1073 = vld [vmem:[#allocation5 + $0x3f8] sm:$0xff]
    %v1074 = vld [vmem:[#allocation5 + $0x400] sm:$0xff]
    %v1075 = vld [vmem:[#allocation5 + $0x408] sm:$0xff]
    %v1076 = vld [vmem:[#allocation5 + $0x410] sm:$0xff]
    %v1077 = vld [vmem:[#allocation5 + $0x418] sm:$0xff]
    %v1078 = vld [vmem:[#allocation5 + $0x420] sm:$0xff]
    %v1079 = vld [vmem:[#allocation5 + $0x428] sm:$0xff]
    %v1080 = vld [vmem:[#allocation5 + $0x430] sm:$0xff]
    %v1081 = vld [vmem:[#allocation5 + $0x438] sm:$0xff]
    %v1082 = vld [vmem:[#allocation5 + $0x440] sm:$0xff]
    %v1083 = vld [vmem:[#allocation5 + $0x448] sm:$0xff]
    %v1084 = vld [vmem:[#allocation5 + $0x450] sm:$0xff]
    %v1085 = vld [vmem:[#allocation5 + $0x458] sm:$0xff]
    %v1086 = vld [vmem:[#allocation5 + $0x460] sm:$0xff]
    %v1087 = vld [vmem:[#allocation5 + $0x468] sm:$0xff]
    %v1088 = vld [vmem:[#allocation5 + $0x470] sm:$0xff]
    %v1089 = vld [vmem:[#allocation5 + $0x478] sm:$0xff]
    %v1090 = vld [vmem:[#allocation5 + $0x480] sm:$0xff]
    %v1091 = vld [vmem:[#allocation5 + $0x488] sm:$0xff]
    %v1092 = vld [vmem:[#allocation5 + $0x490] sm:$0xff]
    %v1093 = vld [vmem:[#allocation5 + $0x498] sm:$0xff]
    %v1094 = vld [vmem:[#allocation5 + $0x4a0] sm:$0xff]
    %v1095 = vld [vmem:[#allocation5 + $0x4a8] sm:$0xff]
    %v1096 = vld [vmem:[#allocation5 + $0x4b0] sm:$0xff]
    %v1097 = vld [vmem:[#allocation5 + $0x4b8] sm:$0xff]
    %v1098 = vld [vmem:[#allocation5 + $0x4c0] sm:$0xff]
    %v1099 = vld [vmem:[#allocation5 + $0x4c8] sm:$0xff]
    %v1100 = vld [vmem:[#allocation5 + $0x4d0] sm:$0xff]
    %v1101 = vld [vmem:[#allocation5 + $0x4d8] sm:$0xff]
    %v1102 = vld [vmem:[#allocation5 + $0x4e0] sm:$0xff]
    %v1103 = vld [vmem:[#allocation5 + $0x4e8] sm:$0xff]
    %v1104 = vld [vmem:[#allocation5 + $0x4f0] sm:$0xff]
    %v1105 = vld [vmem:[#allocation5 + $0x4f8] sm:$0xff]
    %v1106 = vld [vmem:[#allocation5 + $0x500] sm:$0xff]
    %v1107 = vld [vmem:[#allocation5 + $0x508] sm:$0xff]
    %v1108 = vld [vmem:[#allocation5 + $0x510] sm:$0xff]
    %v1109 = vld [vmem:[#allocation5 + $0x518] sm:$0xff]
    %v1110 = vld [vmem:[#allocation5 + $0x520] sm:$0xff]
    %v1111 = vld [vmem:[#allocation5 + $0x528] sm:$0xff]
    %v1112 = vld [vmem:[#allocation5 + $0x530] sm:$0xff]
    %v1113 = vld [vmem:[#allocation5 + $0x538] sm:$0xff]
    %v1114 = vld [vmem:[#allocation5 + $0x540] sm:$0xff]
    %v1115 = vld [vmem:[#allocation5 + $0x548] sm:$0xff]
    %v1116 = vld [vmem:[#allocation5 + $0x550] sm:$0xff]
    %v1117 = vld [vmem:[#allocation5 + $0x558] sm:$0xff]
    %v1118 = vld [vmem:[#allocation5 + $0x560] sm:$0xff]
    %v1119 = vld [vmem:[#allocation5 + $0x568] sm:$0xff]
    %v1120 = vld [vmem:[#allocation5 + $0x570] sm:$0xff]
    %v1121 = vld [vmem:[#allocation5 + $0x578] sm:$0xff]
    %v1122 = vld [vmem:[#allocation5 + $0x580] sm:$0xff]
    %v1123 = vld [vmem:[#allocation5 + $0x588] sm:$0xff]
    %v1124 = vld [vmem:[#allocation5 + $0x590] sm:$0xff]
    %v1125 = vld [vmem:[#allocation5 + $0x598] sm:$0xff]
    %v1126 = vld [vmem:[#allocation5 + $0x5a0] sm:$0xff]
    %v1127 = vld [vmem:[#allocation5 + $0x5a8] sm:$0xff]
    %v1128 = vld [vmem:[#allocation5 + $0x5b0] sm:$0xff]
    %v1129 = vld [vmem:[#allocation5 + $0x5b8] sm:$0xff]
    %v1130 = vld [vmem:[#allocation5 + $0x5c0] sm:$0xff]
    %v1131 = vld [vmem:[#allocation5 + $0x5c8] sm:$0xff]
    %v1132 = vld [vmem:[#allocation5 + $0x5d0] sm:$0xff]
    %v1133 = vld [vmem:[#allocation5 + $0x5d8] sm:$0xff]
    %v1134 = vld [vmem:[#allocation5 + $0x5e0] sm:$0xff]
    %v1135 = vld [vmem:[#allocation5 + $0x5e8] sm:$0xff]
    %v1136 = vld [vmem:[#allocation5 + $0x5f0] sm:$0xff]
    %v1137 = vld [vmem:[#allocation5 + $0x5f8] sm:$0xff]
    %v1138 = vld [vmem:[#allocation5 + $0x600] sm:$0xff]
    %v1139 = vld [vmem:[#allocation5 + $0x608] sm:$0xff]
    %v1140 = vld [vmem:[#allocation5 + $0x610] sm:$0xff]
    %v1141 = vld [vmem:[#allocation5 + $0x618] sm:$0xff]
    %v1142 = vld [vmem:[#allocation5 + $0x620] sm:$0xff]
    %v1143 = vld [vmem:[#allocation5 + $0x628] sm:$0xff]
    %v1144 = vld [vmem:[#allocation5 + $0x630] sm:$0xff]
    %v1145 = vld [vmem:[#allocation5 + $0x638] sm:$0xff]
    %v1146 = vld [vmem:[#allocation5 + $0x640] sm:$0xff]
    %v1147 = vld [vmem:[#allocation5 + $0x648] sm:$0xff]
    %v1148 = vld [vmem:[#allocation5 + $0x650] sm:$0xff]
    %v1149 = vld [vmem:[#allocation5 + $0x658] sm:$0xff]
    %v1150 = vld [vmem:[#allocation5 + $0x660] sm:$0xff]
    %v1151 = vld [vmem:[#allocation5 + $0x668] sm:$0xff]
    %v1152 = vld [vmem:[#allocation5 + $0x670] sm:$0xff]
    %v1153 = vld [vmem:[#allocation5 + $0x678] sm:$0xff]
    %v1154 = vld [vmem:[#allocation5 + $0x680] sm:$0xff]
    %v1155 = vld [vmem:[#allocation5 + $0x688] sm:$0xff]
    %v1156 = vld [vmem:[#allocation5 + $0x690] sm:$0xff]
    %v1157 = vld [vmem:[#allocation5 + $0x698] sm:$0xff]
    %v1158 = vld [vmem:[#allocation5 + $0x6a0] sm:$0xff]
    %v1159 = vld [vmem:[#allocation5 + $0x6a8] sm:$0xff]
    %v1160 = vld [vmem:[#allocation5 + $0x6b0] sm:$0xff]
    %v1161 = vld [vmem:[#allocation5 + $0x6b8] sm:$0xff]
    %v1162 = vld [vmem:[#allocation5 + $0x6c0] sm:$0xff]
    %v1163 = vld [vmem:[#allocation5 + $0x6c8] sm:$0xff]
    %v1164 = vld [vmem:[#allocation5 + $0x6d0] sm:$0xff]
    %v1165 = vld [vmem:[#allocation5 + $0x6d8] sm:$0xff]
    %v1166 = vld [vmem:[#allocation5 + $0x6e0] sm:$0xff]
    %v1167 = vld [vmem:[#allocation5 + $0x6e8] sm:$0xff]
    %v1168 = vld [vmem:[#allocation5 + $0x6f0] sm:$0xff]
    %v1169 = vld [vmem:[#allocation5 + $0x6f8] sm:$0xff]
    %v1170 = vld [vmem:[#allocation5 + $0x700] sm:$0xff]
    %v1171 = vld [vmem:[#allocation5 + $0x708] sm:$0xff]
    %v1172 = vld [vmem:[#allocation5 + $0x710] sm:$0xff]
    %v1173 = vld [vmem:[#allocation5 + $0x718] sm:$0xff]
    %v1174 = vld [vmem:[#allocation5 + $0x720] sm:$0xff]
    %v1175 = vld [vmem:[#allocation5 + $0x728] sm:$0xff]
    %v1176 = vld [vmem:[#allocation5 + $0x730] sm:$0xff]
    %v1177 = vld [vmem:[#allocation5 + $0x738] sm:$0xff]
    %v1178 = vld [vmem:[#allocation5 + $0x740] sm:$0xff]
    %v1179 = vld [vmem:[#allocation5 + $0x748] sm:$0xff]
    %v1180 = vld [vmem:[#allocation5 + $0x750] sm:$0xff]
    %v1181 = vld [vmem:[#allocation5 + $0x758] sm:$0xff]
    %v1182 = vld [vmem:[#allocation5 + $0x760] sm:$0xff]
    %v1183 = vld [vmem:[#allocation5 + $0x768] sm:$0xff]
    %v1184 = vld [vmem:[#allocation5 + $0x770] sm:$0xff]
    %v1185 = vld [vmem:[#allocation5 + $0x778] sm:$0xff]
    %v1186 = vld [vmem:[#allocation5 + $0x780] sm:$0xff]
    %v1187 = vld [vmem:[#allocation5 + $0x788] sm:$0xff]
    %v1188 = vld [vmem:[#allocation5 + $0x790] sm:$0xff]
    %v1189 = vld [vmem:[#allocation5 + $0x798] sm:$0xff]
    %v1190 = vld [vmem:[#allocation5 + $0x7a0] sm:$0xff]
    %v1191 = vld [vmem:[#allocation5 + $0x7a8] sm:$0xff]
    %v1192 = vld [vmem:[#allocation5 + $0x7b0] sm:$0xff]
    %v1193 = vld [vmem:[#allocation5 + $0x7b8] sm:$0xff]
    %v1194 = vld [vmem:[#allocation5 + $0x7c0] sm:$0xff]
    %v1195 = vld [vmem:[#allocation5 + $0x7c8] sm:$0xff]
    %v1196 = vld [vmem:[#allocation5 + $0x7d0] sm:$0xff]
    %v1197 = vld [vmem:[#allocation5 + $0x7d8] sm:$0xff]
    %v1198 = vld [vmem:[#allocation5 + $0x7e0] sm:$0xff]
    %v1199 = vld [vmem:[#allocation5 + $0x7e8] sm:$0xff]
    %v1200 = vld [vmem:[#allocation5 + $0x7f0] sm:$0xff]
    %v1201 = vld [vmem:[#allocation5 + $0x7f8] sm:$0xff]
    %v1203 = vlaneseq
    %v1204 = vshrl.u32 %v1203, 7
    %v1205 = vsub.s32 0, %v1204
    %v1206 = vrot.slane %v81, %v1205
    %v1207 = vlaneseq
    %v1208 = vshrl.u32 %v1207, 7
    %v1209 = vsub.s32 1, %v1208
    %v1210 = vrot.slane %v81, %v1209
    %v1211 = vlaneseq
    %v1212 = vshrl.u32 %v1211, 7
    %v1213 = vsub.s32 2, %v1212
    %v1214 = vrot.slane %v81, %v1213
    %v1215 = vlaneseq
    %v1216 = vshrl.u32 %v1215, 7
    %v1217 = vsub.s32 3, %v1216
    %v1218 = vrot.slane %v81, %v1217
    %v1479 = vunpack.c.l.b16 %v946
    %v1480 = vunpack.c.h.b16 %v946
    %v1481 = vunpack.c.l.b16 %v947
    %v1482 = vunpack.c.h.b16 %v947
    %v1483 = vunpack.c.l.b16 %v948
    %v1484 = vunpack.c.h.b16 %v948
    %v1485 = vunpack.c.l.b16 %v949
    %v1486 = vunpack.c.h.b16 %v949
    %v1487 = vunpack.c.l.b16 %v950
    %v1488 = vunpack.c.h.b16 %v950
    %v1489 = vunpack.c.l.b16 %v951
    %v1490 = vunpack.c.h.b16 %v951
    %v1491 = vunpack.c.l.b16 %v952
    %v1492 = vunpack.c.h.b16 %v952
    %v1493 = vunpack.c.l.b16 %v953
    %v1494 = vunpack.c.h.b16 %v953
    %v1495 = vunpack.c.l.b16 %v954
    %v1496 = vunpack.c.h.b16 %v954
    %v1497 = vunpack.c.l.b16 %v955
    %v1498 = vunpack.c.h.b16 %v955
    %v1499 = vunpack.c.l.b16 %v956
    %v1500 = vunpack.c.h.b16 %v956
    %v1501 = vunpack.c.l.b16 %v957
    %v1502 = vunpack.c.h.b16 %v957
    %v1503 = vunpack.c.l.b16 %v958
    %v1504 = vunpack.c.h.b16 %v958
    %v1505 = vunpack.c.l.b16 %v959
    %v1506 = vunpack.c.h.b16 %v959
    %v1507 = vunpack.c.l.b16 %v960
    %v1508 = vunpack.c.h.b16 %v960
    %v1509 = vunpack.c.l.b16 %v961
    %v1510 = vunpack.c.h.b16 %v961
    %v1511 = vunpack.c.l.b16 %v962
    %v1512 = vunpack.c.h.b16 %v962
    %v1513 = vunpack.c.l.b16 %v963
    %v1514 = vunpack.c.h.b16 %v963
    %v1515 = vunpack.c.l.b16 %v964
    %v1516 = vunpack.c.h.b16 %v964
    %v1517 = vunpack.c.l.b16 %v965
    %v1518 = vunpack.c.h.b16 %v965
    %v1519 = vunpack.c.l.b16 %v966
    %v1520 = vunpack.c.h.b16 %v966
    %v1521 = vunpack.c.l.b16 %v967
    %v1522 = vunpack.c.h.b16 %v967
    %v1523 = vunpack.c.l.b16 %v968
    %v1524 = vunpack.c.h.b16 %v968
    %v1525 = vunpack.c.l.b16 %v969
    %v1526 = vunpack.c.h.b16 %v969
    %v1527 = vunpack.c.l.b16 %v970
    %v1528 = vunpack.c.h.b16 %v970
    %v1529 = vunpack.c.l.b16 %v971
    %v1530 = vunpack.c.h.b16 %v971
    %v1531 = vunpack.c.l.b16 %v972
    %v1532 = vunpack.c.h.b16 %v972
    %v1533 = vunpack.c.l.b16 %v973
    %v1534 = vunpack.c.h.b16 %v973
    %v1535 = vunpack.c.l.b16 %v974
    %v1536 = vunpack.c.h.b16 %v974
    %v1537 = vunpack.c.l.b16 %v975
    %v1538 = vunpack.c.h.b16 %v975
    %v1539 = vunpack.c.l.b16 %v976
    %v1540 = vunpack.c.h.b16 %v976
    %v1541 = vunpack.c.l.b16 %v977
    %v1542 = vunpack.c.h.b16 %v977
    %v1543 = vunpack.c.l.b16 %v978
    %v1544 = vunpack.c.h.b16 %v978
    %v1545 = vunpack.c.l.b16 %v979
    %v1546 = vunpack.c.h.b16 %v979
    %v1547 = vunpack.c.l.b16 %v980
    %v1548 = vunpack.c.h.b16 %v980
    %v1549 = vunpack.c.l.b16 %v981
    %v1550 = vunpack.c.h.b16 %v981
    %v1551 = vunpack.c.l.b16 %v982
    %v1552 = vunpack.c.h.b16 %v982
    %v1553 = vunpack.c.l.b16 %v983
    %v1554 = vunpack.c.h.b16 %v983
    %v1555 = vunpack.c.l.b16 %v984
    %v1556 = vunpack.c.h.b16 %v984
    %v1557 = vunpack.c.l.b16 %v985
    %v1558 = vunpack.c.h.b16 %v985
    %v1559 = vunpack.c.l.b16 %v986
    %v1560 = vunpack.c.h.b16 %v986
    %v1561 = vunpack.c.l.b16 %v987
    %v1562 = vunpack.c.h.b16 %v987
    %v1563 = vunpack.c.l.b16 %v988
    %v1564 = vunpack.c.h.b16 %v988
    %v1565 = vunpack.c.l.b16 %v989
    %v1566 = vunpack.c.h.b16 %v989
    %v1567 = vunpack.c.l.b16 %v990
    %v1568 = vunpack.c.h.b16 %v990
    %v1569 = vunpack.c.l.b16 %v991
    %v1570 = vunpack.c.h.b16 %v991
    %v1571 = vunpack.c.l.b16 %v992
    %v1572 = vunpack.c.h.b16 %v992
    %v1573 = vunpack.c.l.b16 %v993
    %v1574 = vunpack.c.h.b16 %v993
    %v1575 = vunpack.c.l.b16 %v994
    %v1576 = vunpack.c.h.b16 %v994
    %v1577 = vunpack.c.l.b16 %v995
    %v1578 = vunpack.c.h.b16 %v995
    %v1579 = vunpack.c.l.b16 %v996
    %v1580 = vunpack.c.h.b16 %v996
    %v1581 = vunpack.c.l.b16 %v997
    %v1582 = vunpack.c.h.b16 %v997
    %v1583 = vunpack.c.l.b16 %v998
    %v1584 = vunpack.c.h.b16 %v998
    %v1585 = vunpack.c.l.b16 %v999
    %v1586 = vunpack.c.h.b16 %v999
    %v1587 = vunpack.c.l.b16 %v1000
    %v1588 = vunpack.c.h.b16 %v1000
    %v1589 = vunpack.c.l.b16 %v1001
    %v1590 = vunpack.c.h.b16 %v1001
    %v1591 = vunpack.c.l.b16 %v1002
    %v1592 = vunpack.c.h.b16 %v1002
    %v1593 = vunpack.c.l.b16 %v1003
    %v1594 = vunpack.c.h.b16 %v1003
    %v1595 = vunpack.c.l.b16 %v1004
    %v1596 = vunpack.c.h.b16 %v1004
    %v1597 = vunpack.c.l.b16 %v1005
    %v1598 = vunpack.c.h.b16 %v1005
    %v1599 = vunpack.c.l.b16 %v1006
    %v1600 = vunpack.c.h.b16 %v1006
    %v1601 = vunpack.c.l.b16 %v1007
    %v1602 = vunpack.c.h.b16 %v1007
    %v1603 = vunpack.c.l.b16 %v1008
    %v1604 = vunpack.c.h.b16 %v1008
    %v1605 = vunpack.c.l.b16 %v1009
    %v1606 = vunpack.c.h.b16 %v1009
    %v1607 = vunpack.c.l.b16 %v1010
    %v1608 = vunpack.c.h.b16 %v1010
    %v1609 = vunpack.c.l.b16 %v1011
    %v1610 = vunpack.c.h.b16 %v1011
    %v1611 = vunpack.c.l.b16 %v1012
    %v1612 = vunpack.c.h.b16 %v1012
    %v1613 = vunpack.c.l.b16 %v1013
    %v1614 = vunpack.c.h.b16 %v1013
    %v1615 = vunpack.c.l.b16 %v1014
    %v1616 = vunpack.c.h.b16 %v1014
    %v1617 = vunpack.c.l.b16 %v1015
    %v1618 = vunpack.c.h.b16 %v1015
    %v1619 = vunpack.c.l.b16 %v1016
    %v1620 = vunpack.c.h.b16 %v1016
    %v1621 = vunpack.c.l.b16 %v1017
    %v1622 = vunpack.c.h.b16 %v1017
    %v1623 = vunpack.c.l.b16 %v1018
    %v1624 = vunpack.c.h.b16 %v1018
    %v1625 = vunpack.c.l.b16 %v1019
    %v1626 = vunpack.c.h.b16 %v1019
    %v1627 = vunpack.c.l.b16 %v1020
    %v1628 = vunpack.c.h.b16 %v1020
    %v1629 = vunpack.c.l.b16 %v1021
    %v1630 = vunpack.c.h.b16 %v1021
    %v1631 = vunpack.c.l.b16 %v1022
    %v1632 = vunpack.c.h.b16 %v1022
    %v1633 = vunpack.c.l.b16 %v1023
    %v1634 = vunpack.c.h.b16 %v1023
    %v1635 = vunpack.c.l.b16 %v1024
    %v1636 = vunpack.c.h.b16 %v1024
    %v1637 = vunpack.c.l.b16 %v1025
    %v1638 = vunpack.c.h.b16 %v1025
    %v1639 = vunpack.c.l.b16 %v1026
    %v1640 = vunpack.c.h.b16 %v1026
    %v1641 = vunpack.c.l.b16 %v1027
    %v1642 = vunpack.c.h.b16 %v1027
    %v1643 = vunpack.c.l.b16 %v1028
    %v1644 = vunpack.c.h.b16 %v1028
    %v1645 = vunpack.c.l.b16 %v1029
    %v1646 = vunpack.c.h.b16 %v1029
    %v1647 = vunpack.c.l.b16 %v1030
    %v1648 = vunpack.c.h.b16 %v1030
    %v1649 = vunpack.c.l.b16 %v1031
    %v1650 = vunpack.c.h.b16 %v1031
    %v1651 = vunpack.c.l.b16 %v1032
    %v1652 = vunpack.c.h.b16 %v1032
    %v1653 = vunpack.c.l.b16 %v1033
    %v1654 = vunpack.c.h.b16 %v1033
    %v1655 = vunpack.c.l.b16 %v1034
    %v1656 = vunpack.c.h.b16 %v1034
    %v1657 = vunpack.c.l.b16 %v1035
    %v1658 = vunpack.c.h.b16 %v1035
    %v1659 = vunpack.c.l.b16 %v1036
    %v1660 = vunpack.c.h.b16 %v1036
    %v1661 = vunpack.c.l.b16 %v1037
    %v1662 = vunpack.c.h.b16 %v1037
    %v1663 = vunpack.c.l.b16 %v1038
    %v1664 = vunpack.c.h.b16 %v1038
    %v1665 = vunpack.c.l.b16 %v1039
    %v1666 = vunpack.c.h.b16 %v1039
    %v1667 = vunpack.c.l.b16 %v1040
    %v1668 = vunpack.c.h.b16 %v1040
    %v1669 = vunpack.c.l.b16 %v1041
    %v1670 = vunpack.c.h.b16 %v1041
    %v1671 = vunpack.c.l.b16 %v1042
    %v1672 = vunpack.c.h.b16 %v1042
    %v1673 = vunpack.c.l.b16 %v1043
    %v1674 = vunpack.c.h.b16 %v1043
    %v1675 = vunpack.c.l.b16 %v1044
    %v1676 = vunpack.c.h.b16 %v1044
    %v1677 = vunpack.c.l.b16 %v1045
    %v1678 = vunpack.c.h.b16 %v1045
    %v1679 = vunpack.c.l.b16 %v1046
    %v1680 = vunpack.c.h.b16 %v1046
    %v1681 = vunpack.c.l.b16 %v1047
    %v1682 = vunpack.c.h.b16 %v1047
    %v1683 = vunpack.c.l.b16 %v1048
    %v1684 = vunpack.c.h.b16 %v1048
    %v1685 = vunpack.c.l.b16 %v1049
    %v1686 = vunpack.c.h.b16 %v1049
    %v1687 = vunpack.c.l.b16 %v1050
    %v1688 = vunpack.c.h.b16 %v1050
    %v1689 = vunpack.c.l.b16 %v1051
    %v1690 = vunpack.c.h.b16 %v1051
    %v1691 = vunpack.c.l.b16 %v1052
    %v1692 = vunpack.c.h.b16 %v1052
    %v1693 = vunpack.c.l.b16 %v1053
    %v1694 = vunpack.c.h.b16 %v1053
    %v1695 = vunpack.c.l.b16 %v1054
    %v1696 = vunpack.c.h.b16 %v1054
    %v1697 = vunpack.c.l.b16 %v1055
    %v1698 = vunpack.c.h.b16 %v1055
    %v1699 = vunpack.c.l.b16 %v1056
    %v1700 = vunpack.c.h.b16 %v1056
    %v1701 = vunpack.c.l.b16 %v1057
    %v1702 = vunpack.c.h.b16 %v1057
    %v1703 = vunpack.c.l.b16 %v1058
    %v1704 = vunpack.c.h.b16 %v1058
    %v1705 = vunpack.c.l.b16 %v1059
    %v1706 = vunpack.c.h.b16 %v1059
    %v1707 = vunpack.c.l.b16 %v1060
    %v1708 = vunpack.c.h.b16 %v1060
    %v1709 = vunpack.c.l.b16 %v1061
    %v1710 = vunpack.c.h.b16 %v1061
    %v1711 = vunpack.c.l.b16 %v1062
    %v1712 = vunpack.c.h.b16 %v1062
    %v1713 = vunpack.c.l.b16 %v1063
    %v1714 = vunpack.c.h.b16 %v1063
    %v1715 = vunpack.c.l.b16 %v1064
    %v1716 = vunpack.c.h.b16 %v1064
    %v1717 = vunpack.c.l.b16 %v1065
    %v1718 = vunpack.c.h.b16 %v1065
    %v1719 = vunpack.c.l.b16 %v1066
    %v1720 = vunpack.c.h.b16 %v1066
    %v1721 = vunpack.c.l.b16 %v1067
    %v1722 = vunpack.c.h.b16 %v1067
    %v1723 = vunpack.c.l.b16 %v1068
    %v1724 = vunpack.c.h.b16 %v1068
    %v1725 = vunpack.c.l.b16 %v1069
    %v1726 = vunpack.c.h.b16 %v1069
    %v1727 = vunpack.c.l.b16 %v1070
    %v1728 = vunpack.c.h.b16 %v1070
    %v1729 = vunpack.c.l.b16 %v1071
    %v1730 = vunpack.c.h.b16 %v1071
    %v1731 = vunpack.c.l.b16 %v1072
    %v1732 = vunpack.c.h.b16 %v1072
    %v1733 = vunpack.c.l.b16 %v1073
    %v1734 = vunpack.c.h.b16 %v1073
    %v1735 = vunpack.c.l.b16 %v1074
    %v1736 = vunpack.c.h.b16 %v1074
    %v1737 = vunpack.c.l.b16 %v1075
    %v1738 = vunpack.c.h.b16 %v1075
    %v1739 = vunpack.c.l.b16 %v1076
    %v1740 = vunpack.c.h.b16 %v1076
    %v1741 = vunpack.c.l.b16 %v1077
    %v1742 = vunpack.c.h.b16 %v1077
    %v1743 = vunpack.c.l.b16 %v1078
    %v1744 = vunpack.c.h.b16 %v1078
    %v1745 = vunpack.c.l.b16 %v1079
    %v1746 = vunpack.c.h.b16 %v1079
    %v1747 = vunpack.c.l.b16 %v1080
    %v1748 = vunpack.c.h.b16 %v1080
    %v1749 = vunpack.c.l.b16 %v1081
    %v1750 = vunpack.c.h.b16 %v1081
    %v1751 = vunpack.c.l.b16 %v1082
    %v1752 = vunpack.c.h.b16 %v1082
    %v1753 = vunpack.c.l.b16 %v1083
    %v1754 = vunpack.c.h.b16 %v1083
    %v1755 = vunpack.c.l.b16 %v1084
    %v1756 = vunpack.c.h.b16 %v1084
    %v1757 = vunpack.c.l.b16 %v1085
    %v1758 = vunpack.c.h.b16 %v1085
    %v1759 = vunpack.c.l.b16 %v1086
    %v1760 = vunpack.c.h.b16 %v1086
    %v1761 = vunpack.c.l.b16 %v1087
    %v1762 = vunpack.c.h.b16 %v1087
    %v1763 = vunpack.c.l.b16 %v1088
    %v1764 = vunpack.c.h.b16 %v1088
    %v1765 = vunpack.c.l.b16 %v1089
    %v1766 = vunpack.c.h.b16 %v1089
    %v1767 = vunpack.c.l.b16 %v1090
    %v1768 = vunpack.c.h.b16 %v1090
    %v1769 = vunpack.c.l.b16 %v1091
    %v1770 = vunpack.c.h.b16 %v1091
    %v1771 = vunpack.c.l.b16 %v1092
    %v1772 = vunpack.c.h.b16 %v1092
    %v1773 = vunpack.c.l.b16 %v1093
    %v1774 = vunpack.c.h.b16 %v1093
    %v1775 = vunpack.c.l.b16 %v1094
    %v1776 = vunpack.c.h.b16 %v1094
    %v1777 = vunpack.c.l.b16 %v1095
    %v1778 = vunpack.c.h.b16 %v1095
    %v1779 = vunpack.c.l.b16 %v1096
    %v1780 = vunpack.c.h.b16 %v1096
    %v1781 = vunpack.c.l.b16 %v1097
    %v1782 = vunpack.c.h.b16 %v1097
    %v1783 = vunpack.c.l.b16 %v1098
    %v1784 = vunpack.c.h.b16 %v1098
    %v1785 = vunpack.c.l.b16 %v1099
    %v1786 = vunpack.c.h.b16 %v1099
    %v1787 = vunpack.c.l.b16 %v1100
    %v1788 = vunpack.c.h.b16 %v1100
    %v1789 = vunpack.c.l.b16 %v1101
    %v1790 = vunpack.c.h.b16 %v1101
    %v1791 = vunpack.c.l.b16 %v1102
    %v1792 = vunpack.c.h.b16 %v1102
    %v1793 = vunpack.c.l.b16 %v1103
    %v1794 = vunpack.c.h.b16 %v1103
    %v1795 = vunpack.c.l.b16 %v1104
    %v1796 = vunpack.c.h.b16 %v1104
    %v1797 = vunpack.c.l.b16 %v1105
    %v1798 = vunpack.c.h.b16 %v1105
    %v1799 = vunpack.c.l.b16 %v1106
    %v1800 = vunpack.c.h.b16 %v1106
    %v1801 = vunpack.c.l.b16 %v1107
    %v1802 = vunpack.c.h.b16 %v1107
    %v1803 = vunpack.c.l.b16 %v1108
    %v1804 = vunpack.c.h.b16 %v1108
    %v1805 = vunpack.c.l.b16 %v1109
    %v1806 = vunpack.c.h.b16 %v1109
    %v1807 = vunpack.c.l.b16 %v1110
    %v1808 = vunpack.c.h.b16 %v1110
    %v1809 = vunpack.c.l.b16 %v1111
    %v1810 = vunpack.c.h.b16 %v1111
    %v1811 = vunpack.c.l.b16 %v1112
    %v1812 = vunpack.c.h.b16 %v1112
    %v1813 = vunpack.c.l.b16 %v1113
    %v1814 = vunpack.c.h.b16 %v1113
    %v1815 = vunpack.c.l.b16 %v1114
    %v1816 = vunpack.c.h.b16 %v1114
    %v1817 = vunpack.c.l.b16 %v1115
    %v1818 = vunpack.c.h.b16 %v1115
    %v1819 = vunpack.c.l.b16 %v1116
    %v1820 = vunpack.c.h.b16 %v1116
    %v1821 = vunpack.c.l.b16 %v1117
    %v1822 = vunpack.c.h.b16 %v1117
    %v1823 = vunpack.c.l.b16 %v1118
    %v1824 = vunpack.c.h.b16 %v1118
    %v1825 = vunpack.c.l.b16 %v1119
    %v1826 = vunpack.c.h.b16 %v1119
    %v1827 = vunpack.c.l.b16 %v1120
    %v1828 = vunpack.c.h.b16 %v1120
    %v1829 = vunpack.c.l.b16 %v1121
    %v1830 = vunpack.c.h.b16 %v1121
    %v1831 = vunpack.c.l.b16 %v1122
    %v1832 = vunpack.c.h.b16 %v1122
    %v1833 = vunpack.c.l.b16 %v1123
    %v1834 = vunpack.c.h.b16 %v1123
    %v1835 = vunpack.c.l.b16 %v1124
    %v1836 = vunpack.c.h.b16 %v1124
    %v1837 = vunpack.c.l.b16 %v1125
    %v1838 = vunpack.c.h.b16 %v1125
    %v1839 = vunpack.c.l.b16 %v1126
    %v1840 = vunpack.c.h.b16 %v1126
    %v1841 = vunpack.c.l.b16 %v1127
    %v1842 = vunpack.c.h.b16 %v1127
    %v1843 = vunpack.c.l.b16 %v1128
    %v1844 = vunpack.c.h.b16 %v1128
    %v1845 = vunpack.c.l.b16 %v1129
    %v1846 = vunpack.c.h.b16 %v1129
    %v1847 = vunpack.c.l.b16 %v1130
    %v1848 = vunpack.c.h.b16 %v1130
    %v1849 = vunpack.c.l.b16 %v1131
    %v1850 = vunpack.c.h.b16 %v1131
    %v1851 = vunpack.c.l.b16 %v1132
    %v1852 = vunpack.c.h.b16 %v1132
    %v1853 = vunpack.c.l.b16 %v1133
    %v1854 = vunpack.c.h.b16 %v1133
    %v1855 = vunpack.c.l.b16 %v1134
    %v1856 = vunpack.c.h.b16 %v1134
    %v1857 = vunpack.c.l.b16 %v1135
    %v1858 = vunpack.c.h.b16 %v1135
    %v1859 = vunpack.c.l.b16 %v1136
    %v1860 = vunpack.c.h.b16 %v1136
    %v1861 = vunpack.c.l.b16 %v1137
    %v1862 = vunpack.c.h.b16 %v1137
    %v1863 = vunpack.c.l.b16 %v1138
    %v1864 = vunpack.c.h.b16 %v1138
    %v1865 = vunpack.c.l.b16 %v1139
    %v1866 = vunpack.c.h.b16 %v1139
    %v1867 = vunpack.c.l.b16 %v1140
    %v1868 = vunpack.c.h.b16 %v1140
    %v1869 = vunpack.c.l.b16 %v1141
    %v1870 = vunpack.c.h.b16 %v1141
    %v1871 = vunpack.c.l.b16 %v1142
    %v1872 = vunpack.c.h.b16 %v1142
    %v1873 = vunpack.c.l.b16 %v1143
    %v1874 = vunpack.c.h.b16 %v1143
    %v1875 = vunpack.c.l.b16 %v1144
    %v1876 = vunpack.c.h.b16 %v1144
    %v1877 = vunpack.c.l.b16 %v1145
    %v1878 = vunpack.c.h.b16 %v1145
    %v1879 = vunpack.c.l.b16 %v1146
    %v1880 = vunpack.c.h.b16 %v1146
    %v1881 = vunpack.c.l.b16 %v1147
    %v1882 = vunpack.c.h.b16 %v1147
    %v1883 = vunpack.c.l.b16 %v1148
    %v1884 = vunpack.c.h.b16 %v1148
    %v1885 = vunpack.c.l.b16 %v1149
    %v1886 = vunpack.c.h.b16 %v1149
    %v1887 = vunpack.c.l.b16 %v1150
    %v1888 = vunpack.c.h.b16 %v1150
    %v1889 = vunpack.c.l.b16 %v1151
    %v1890 = vunpack.c.h.b16 %v1151
    %v1891 = vunpack.c.l.b16 %v1152
    %v1892 = vunpack.c.h.b16 %v1152
    %v1893 = vunpack.c.l.b16 %v1153
    %v1894 = vunpack.c.h.b16 %v1153
    %v1895 = vunpack.c.l.b16 %v1154
    %v1896 = vunpack.c.h.b16 %v1154
    %v1897 = vunpack.c.l.b16 %v1155
    %v1898 = vunpack.c.h.b16 %v1155
    %v1899 = vunpack.c.l.b16 %v1156
    %v1900 = vunpack.c.h.b16 %v1156
    %v1901 = vunpack.c.l.b16 %v1157
    %v1902 = vunpack.c.h.b16 %v1157
    %v1903 = vunpack.c.l.b16 %v1158
    %v1904 = vunpack.c.h.b16 %v1158
    %v1905 = vunpack.c.l.b16 %v1159
    %v1906 = vunpack.c.h.b16 %v1159
    %v1907 = vunpack.c.l.b16 %v1160
    %v1908 = vunpack.c.h.b16 %v1160
    %v1909 = vunpack.c.l.b16 %v1161
    %v1910 = vunpack.c.h.b16 %v1161
    %v1911 = vunpack.c.l.b16 %v1162
    %v1912 = vunpack.c.h.b16 %v1162
    %v1913 = vunpack.c.l.b16 %v1163
    %v1914 = vunpack.c.h.b16 %v1163
    %v1915 = vunpack.c.l.b16 %v1164
    %v1916 = vunpack.c.h.b16 %v1164
    %v1917 = vunpack.c.l.b16 %v1165
    %v1918 = vunpack.c.h.b16 %v1165
    %v1919 = vunpack.c.l.b16 %v1166
    %v1920 = vunpack.c.h.b16 %v1166
    %v1921 = vunpack.c.l.b16 %v1167
    %v1922 = vunpack.c.h.b16 %v1167
    %v1923 = vunpack.c.l.b16 %v1168
    %v1924 = vunpack.c.h.b16 %v1168
    %v1925 = vunpack.c.l.b16 %v1169
    %v1926 = vunpack.c.h.b16 %v1169
    %v1927 = vunpack.c.l.b16 %v1170
    %v1928 = vunpack.c.h.b16 %v1170
    %v1929 = vunpack.c.l.b16 %v1171
    %v1930 = vunpack.c.h.b16 %v1171
    %v1931 = vunpack.c.l.b16 %v1172
    %v1932 = vunpack.c.h.b16 %v1172
    %v1933 = vunpack.c.l.b16 %v1173
    %v1934 = vunpack.c.h.b16 %v1173
    %v1935 = vunpack.c.l.b16 %v1174
    %v1936 = vunpack.c.h.b16 %v1174
    %v1937 = vunpack.c.l.b16 %v1175
    %v1938 = vunpack.c.h.b16 %v1175
    %v1939 = vunpack.c.l.b16 %v1176
    %v1940 = vunpack.c.h.b16 %v1176
    %v1941 = vunpack.c.l.b16 %v1177
    %v1942 = vunpack.c.h.b16 %v1177
    %v1943 = vunpack.c.l.b16 %v1178
    %v1944 = vunpack.c.h.b16 %v1178
    %v1945 = vunpack.c.l.b16 %v1179
    %v1946 = vunpack.c.h.b16 %v1179
    %v1947 = vunpack.c.l.b16 %v1180
    %v1948 = vunpack.c.h.b16 %v1180
    %v1949 = vunpack.c.l.b16 %v1181
    %v1950 = vunpack.c.h.b16 %v1181
    %v1951 = vunpack.c.l.b16 %v1182
    %v1952 = vunpack.c.h.b16 %v1182
    %v1953 = vunpack.c.l.b16 %v1183
    %v1954 = vunpack.c.h.b16 %v1183
    %v1955 = vunpack.c.l.b16 %v1184
    %v1956 = vunpack.c.h.b16 %v1184
    %v1957 = vunpack.c.l.b16 %v1185
    %v1958 = vunpack.c.h.b16 %v1185
    %v1959 = vunpack.c.l.b16 %v1186
    %v1960 = vunpack.c.h.b16 %v1186
    %v1961 = vunpack.c.l.b16 %v1187
    %v1962 = vunpack.c.h.b16 %v1187
    %v1963 = vunpack.c.l.b16 %v1188
    %v1964 = vunpack.c.h.b16 %v1188
    %v1965 = vunpack.c.l.b16 %v1189
    %v1966 = vunpack.c.h.b16 %v1189
    %v1967 = vunpack.c.l.b16 %v1190
    %v1968 = vunpack.c.h.b16 %v1190
    %v1969 = vunpack.c.l.b16 %v1191
    %v1970 = vunpack.c.h.b16 %v1191
    %v1971 = vunpack.c.l.b16 %v1192
    %v1972 = vunpack.c.h.b16 %v1192
    %v1973 = vunpack.c.l.b16 %v1193
    %v1974 = vunpack.c.h.b16 %v1193
    %v1975 = vunpack.c.l.b16 %v1194
    %v1976 = vunpack.c.h.b16 %v1194
    %v1977 = vunpack.c.l.b16 %v1195
    %v1978 = vunpack.c.h.b16 %v1195
    %v1979 = vunpack.c.l.b16 %v1196
    %v1980 = vunpack.c.h.b16 %v1196
    %v1981 = vunpack.c.l.b16 %v1197
    %v1982 = vunpack.c.h.b16 %v1197
    %v1983 = vunpack.c.l.b16 %v1198
    %v1984 = vunpack.c.h.b16 %v1198
    %v1985 = vunpack.c.l.b16 %v1199
    %v1986 = vunpack.c.h.b16 %v1199
    %v1987 = vunpack.c.l.b16 %v1200
    %v1988 = vunpack.c.h.b16 %v1200
    %v1989 = vunpack.c.l.b16 %v1201
    %v1990 = vunpack.c.h.b16 %v1201
    %v1991 = vpack.c.b16 %v1483, %v1479
    %v1992 = vpack.c.b16 %v1484, %v1480
    %v1993 = vpack.c.b16 %v1485, %v1481
    %v1994 = vpack.c.b16 %v1486, %v1482
    %v1995 = vpack.c.b16 %v1491, %v1487
    %v1996 = vpack.c.b16 %v1492, %v1488
    %v1997 = vpack.c.b16 %v1493, %v1489
    %v1998 = vpack.c.b16 %v1494, %v1490
    %v1999 = vpack.c.b16 %v1499, %v1495
    %v2000 = vpack.c.b16 %v1500, %v1496
    %v2001 = vpack.c.b16 %v1501, %v1497
    %v2002 = vpack.c.b16 %v1502, %v1498
    %v2003 = vpack.c.b16 %v1507, %v1503
    %v2004 = vpack.c.b16 %v1508, %v1504
    %v2005 = vpack.c.b16 %v1509, %v1505
    %v2006 = vpack.c.b16 %v1510, %v1506
    %v2007 = vpack.c.b16 %v1515, %v1511
    %v2008 = vpack.c.b16 %v1516, %v1512
    %v2009 = vpack.c.b16 %v1517, %v1513
    %v2010 = vpack.c.b16 %v1518, %v1514
    %v2011 = vpack.c.b16 %v1523, %v1519
    %v2012 = vpack.c.b16 %v1524, %v1520
    %v2013 = vpack.c.b16 %v1525, %v1521
    %v2014 = vpack.c.b16 %v1526, %v1522
    %v2015 = vpack.c.b16 %v1531, %v1527
    %v2016 = vpack.c.b16 %v1532, %v1528
    %v2017 = vpack.c.b16 %v1533, %v1529
    %v2018 = vpack.c.b16 %v1534, %v1530
    %v2019 = vpack.c.b16 %v1539, %v1535
    %v2020 = vpack.c.b16 %v1540, %v1536
    %v2021 = vpack.c.b16 %v1541, %v1537
    %v2022 = vpack.c.b16 %v1542, %v1538
    %v2023 = vpack.c.b16 %v1547, %v1543
    %v2024 = vpack.c.b16 %v1548, %v1544
    %v2025 = vpack.c.b16 %v1549, %v1545
    %v2026 = vpack.c.b16 %v1550, %v1546
    %v2027 = vpack.c.b16 %v1555, %v1551
    %v2028 = vpack.c.b16 %v1556, %v1552
    %v2029 = vpack.c.b16 %v1557, %v1553
    %v2030 = vpack.c.b16 %v1558, %v1554
    %v2031 = vpack.c.b16 %v1563, %v1559
    %v2032 = vpack.c.b16 %v1564, %v1560
    %v2033 = vpack.c.b16 %v1565, %v1561
    %v2034 = vpack.c.b16 %v1566, %v1562
    %v2035 = vpack.c.b16 %v1571, %v1567
    %v2036 = vpack.c.b16 %v1572, %v1568
    %v2037 = vpack.c.b16 %v1573, %v1569
    %v2038 = vpack.c.b16 %v1574, %v1570
    %v2039 = vpack.c.b16 %v1579, %v1575
    %v2040 = vpack.c.b16 %v1580, %v1576
    %v2041 = vpack.c.b16 %v1581, %v1577
    %v2042 = vpack.c.b16 %v1582, %v1578
    %v2043 = vpack.c.b16 %v1587, %v1583
    %v2044 = vpack.c.b16 %v1588, %v1584
    %v2045 = vpack.c.b16 %v1589, %v1585
    %v2046 = vpack.c.b16 %v1590, %v1586
    %v2047 = vpack.c.b16 %v1595, %v1591
    %v2048 = vpack.c.b16 %v1596, %v1592
    %v2049 = vpack.c.b16 %v1597, %v1593
    %v2050 = vpack.c.b16 %v1598, %v1594
    %v2051 = vpack.c.b16 %v1603, %v1599
    %v2052 = vpack.c.b16 %v1604, %v1600
    %v2053 = vpack.c.b16 %v1605, %v1601
    %v2054 = vpack.c.b16 %v1606, %v1602
    %v2055 = vpack.c.b16 %v1611, %v1607
    %v2056 = vpack.c.b16 %v1612, %v1608
    %v2057 = vpack.c.b16 %v1613, %v1609
    %v2058 = vpack.c.b16 %v1614, %v1610
    %v2059 = vpack.c.b16 %v1619, %v1615
    %v2060 = vpack.c.b16 %v1620, %v1616
    %v2061 = vpack.c.b16 %v1621, %v1617
    %v2062 = vpack.c.b16 %v1622, %v1618
    %v2063 = vpack.c.b16 %v1627, %v1623
    %v2064 = vpack.c.b16 %v1628, %v1624
    %v2065 = vpack.c.b16 %v1629, %v1625
    %v2066 = vpack.c.b16 %v1630, %v1626
    %v2067 = vpack.c.b16 %v1635, %v1631
    %v2068 = vpack.c.b16 %v1636, %v1632
    %v2069 = vpack.c.b16 %v1637, %v1633
    %v2070 = vpack.c.b16 %v1638, %v1634
    %v2071 = vpack.c.b16 %v1643, %v1639
    %v2072 = vpack.c.b16 %v1644, %v1640
    %v2073 = vpack.c.b16 %v1645, %v1641
    %v2074 = vpack.c.b16 %v1646, %v1642
    %v2075 = vpack.c.b16 %v1651, %v1647
    %v2076 = vpack.c.b16 %v1652, %v1648
    %v2077 = vpack.c.b16 %v1653, %v1649
    %v2078 = vpack.c.b16 %v1654, %v1650
    %v2079 = vpack.c.b16 %v1659, %v1655
    %v2080 = vpack.c.b16 %v1660, %v1656
    %v2081 = vpack.c.b16 %v1661, %v1657
    %v2082 = vpack.c.b16 %v1662, %v1658
    %v2083 = vpack.c.b16 %v1667, %v1663
    %v2084 = vpack.c.b16 %v1668, %v1664
    %v2085 = vpack.c.b16 %v1669, %v1665
    %v2086 = vpack.c.b16 %v1670, %v1666
    %v2087 = vpack.c.b16 %v1675, %v1671
    %v2088 = vpack.c.b16 %v1676, %v1672
    %v2089 = vpack.c.b16 %v1677, %v1673
    %v2090 = vpack.c.b16 %v1678, %v1674
    %v2091 = vpack.c.b16 %v1683, %v1679
    %v2092 = vpack.c.b16 %v1684, %v1680
    %v2093 = vpack.c.b16 %v1685, %v1681
    %v2094 = vpack.c.b16 %v1686, %v1682
    %v2095 = vpack.c.b16 %v1691, %v1687
    %v2096 = vpack.c.b16 %v1692, %v1688
    %v2097 = vpack.c.b16 %v1693, %v1689
    %v2098 = vpack.c.b16 %v1694, %v1690
    %v2099 = vpack.c.b16 %v1699, %v1695
    %v2100 = vpack.c.b16 %v1700, %v1696
    %v2101 = vpack.c.b16 %v1701, %v1697
    %v2102 = vpack.c.b16 %v1702, %v1698
    %v2103 = vpack.c.b16 %v1707, %v1703
    %v2104 = vpack.c.b16 %v1708, %v1704
    %v2105 = vpack.c.b16 %v1709, %v1705
    %v2106 = vpack.c.b16 %v1710, %v1706
    %v2107 = vpack.c.b16 %v1715, %v1711
    %v2108 = vpack.c.b16 %v1716, %v1712
    %v2109 = vpack.c.b16 %v1717, %v1713
    %v2110 = vpack.c.b16 %v1718, %v1714
    %v2111 = vpack.c.b16 %v1723, %v1719
    %v2112 = vpack.c.b16 %v1724, %v1720
    %v2113 = vpack.c.b16 %v1725, %v1721
    %v2114 = vpack.c.b16 %v1726, %v1722
    %v2115 = vpack.c.b16 %v1731, %v1727
    %v2116 = vpack.c.b16 %v1732, %v1728
    %v2117 = vpack.c.b16 %v1733, %v1729
    %v2118 = vpack.c.b16 %v1734, %v1730
    %v2119 = vpack.c.b16 %v1739, %v1735
    %v2120 = vpack.c.b16 %v1740, %v1736
    %v2121 = vpack.c.b16 %v1741, %v1737
    %v2122 = vpack.c.b16 %v1742, %v1738
    %v2123 = vpack.c.b16 %v1747, %v1743
    %v2124 = vpack.c.b16 %v1748, %v1744
    %v2125 = vpack.c.b16 %v1749, %v1745
    %v2126 = vpack.c.b16 %v1750, %v1746
    %v2127 = vpack.c.b16 %v1755, %v1751
    %v2128 = vpack.c.b16 %v1756, %v1752
    %v2129 = vpack.c.b16 %v1757, %v1753
    %v2130 = vpack.c.b16 %v1758, %v1754
    %v2131 = vpack.c.b16 %v1763, %v1759
    %v2132 = vpack.c.b16 %v1764, %v1760
    %v2133 = vpack.c.b16 %v1765, %v1761
    %v2134 = vpack.c.b16 %v1766, %v1762
    %v2135 = vpack.c.b16 %v1771, %v1767
    %v2136 = vpack.c.b16 %v1772, %v1768
    %v2137 = vpack.c.b16 %v1773, %v1769
    %v2138 = vpack.c.b16 %v1774, %v1770
    %v2139 = vpack.c.b16 %v1779, %v1775
    %v2140 = vpack.c.b16 %v1780, %v1776
    %v2141 = vpack.c.b16 %v1781, %v1777
    %v2142 = vpack.c.b16 %v1782, %v1778
    %v2143 = vpack.c.b16 %v1787, %v1783
    %v2144 = vpack.c.b16 %v1788, %v1784
    %v2145 = vpack.c.b16 %v1789, %v1785
    %v2146 = vpack.c.b16 %v1790, %v1786
    %v2147 = vpack.c.b16 %v1795, %v1791
    %v2148 = vpack.c.b16 %v1796, %v1792
    %v2149 = vpack.c.b16 %v1797, %v1793
    %v2150 = vpack.c.b16 %v1798, %v1794
    %v2151 = vpack.c.b16 %v1803, %v1799
    %v2152 = vpack.c.b16 %v1804, %v1800
    %v2153 = vpack.c.b16 %v1805, %v1801
    %v2154 = vpack.c.b16 %v1806, %v1802
    %v2155 = vpack.c.b16 %v1811, %v1807
    %v2156 = vpack.c.b16 %v1812, %v1808
    %v2157 = vpack.c.b16 %v1813, %v1809
    %v2158 = vpack.c.b16 %v1814, %v1810
    %v2159 = vpack.c.b16 %v1819, %v1815
    %v2160 = vpack.c.b16 %v1820, %v1816
    %v2161 = vpack.c.b16 %v1821, %v1817
    %v2162 = vpack.c.b16 %v1822, %v1818
    %v2163 = vpack.c.b16 %v1827, %v1823
    %v2164 = vpack.c.b16 %v1828, %v1824
    %v2165 = vpack.c.b16 %v1829, %v1825
    %v2166 = vpack.c.b16 %v1830, %v1826
    %v2167 = vpack.c.b16 %v1835, %v1831
    %v2168 = vpack.c.b16 %v1836, %v1832
    %v2169 = vpack.c.b16 %v1837, %v1833
    %v2170 = vpack.c.b16 %v1838, %v1834
    %v2171 = vpack.c.b16 %v1843, %v1839
    %v2172 = vpack.c.b16 %v1844, %v1840
    %v2173 = vpack.c.b16 %v1845, %v1841
    %v2174 = vpack.c.b16 %v1846, %v1842
    %v2175 = vpack.c.b16 %v1851, %v1847
    %v2176 = vpack.c.b16 %v1852, %v1848
    %v2177 = vpack.c.b16 %v1853, %v1849
    %v2178 = vpack.c.b16 %v1854, %v1850
    %v2179 = vpack.c.b16 %v1859, %v1855
    %v2180 = vpack.c.b16 %v1860, %v1856
    %v2181 = vpack.c.b16 %v1861, %v1857
    %v2182 = vpack.c.b16 %v1862, %v1858
    %v2183 = vpack.c.b16 %v1867, %v1863
    %v2184 = vpack.c.b16 %v1868, %v1864
    %v2185 = vpack.c.b16 %v1869, %v1865
    %v2186 = vpack.c.b16 %v1870, %v1866
    %v2187 = vpack.c.b16 %v1875, %v1871
    %v2188 = vpack.c.b16 %v1876, %v1872
    %v2189 = vpack.c.b16 %v1877, %v1873
    %v2190 = vpack.c.b16 %v1878, %v1874
    %v2191 = vpack.c.b16 %v1883, %v1879
    %v2192 = vpack.c.b16 %v1884, %v1880
    %v2193 = vpack.c.b16 %v1885, %v1881
    %v2194 = vpack.c.b16 %v1886, %v1882
    %v2195 = vpack.c.b16 %v1891, %v1887
    %v2196 = vpack.c.b16 %v1892, %v1888
    %v2197 = vpack.c.b16 %v1893, %v1889
    %v2198 = vpack.c.b16 %v1894, %v1890
    %v2199 = vpack.c.b16 %v1899, %v1895
    %v2200 = vpack.c.b16 %v1900, %v1896
    %v2201 = vpack.c.b16 %v1901, %v1897
    %v2202 = vpack.c.b16 %v1902, %v1898
    %v2203 = vpack.c.b16 %v1907, %v1903
    %v2204 = vpack.c.b16 %v1908, %v1904
    %v2205 = vpack.c.b16 %v1909, %v1905
    %v2206 = vpack.c.b16 %v1910, %v1906
    %v2207 = vpack.c.b16 %v1915, %v1911
    %v2208 = vpack.c.b16 %v1916, %v1912
    %v2209 = vpack.c.b16 %v1917, %v1913
    %v2210 = vpack.c.b16 %v1918, %v1914
    %v2211 = vpack.c.b16 %v1923, %v1919
    %v2212 = vpack.c.b16 %v1924, %v1920
    %v2213 = vpack.c.b16 %v1925, %v1921
    %v2214 = vpack.c.b16 %v1926, %v1922
    %v2215 = vpack.c.b16 %v1931, %v1927
    %v2216 = vpack.c.b16 %v1932, %v1928
    %v2217 = vpack.c.b16 %v1933, %v1929
    %v2218 = vpack.c.b16 %v1934, %v1930
    %v2219 = vpack.c.b16 %v1939, %v1935
    %v2220 = vpack.c.b16 %v1940, %v1936
    %v2221 = vpack.c.b16 %v1941, %v1937
    %v2222 = vpack.c.b16 %v1942, %v1938
    %v2223 = vpack.c.b16 %v1947, %v1943
    %v2224 = vpack.c.b16 %v1948, %v1944
    %v2225 = vpack.c.b16 %v1949, %v1945
    %v2226 = vpack.c.b16 %v1950, %v1946
    %v2227 = vpack.c.b16 %v1955, %v1951
    %v2228 = vpack.c.b16 %v1956, %v1952
    %v2229 = vpack.c.b16 %v1957, %v1953
    %v2230 = vpack.c.b16 %v1958, %v1954
    %v2231 = vpack.c.b16 %v1963, %v1959
    %v2232 = vpack.c.b16 %v1964, %v1960
    %v2233 = vpack.c.b16 %v1965, %v1961
    %v2234 = vpack.c.b16 %v1966, %v1962
    %v2235 = vpack.c.b16 %v1971, %v1967
    %v2236 = vpack.c.b16 %v1972, %v1968
    %v2237 = vpack.c.b16 %v1973, %v1969
    %v2238 = vpack.c.b16 %v1974, %v1970
    %v2239 = vpack.c.b16 %v1979, %v1975
    %v2240 = vpack.c.b16 %v1980, %v1976
    %v2241 = vpack.c.b16 %v1981, %v1977
    %v2242 = vpack.c.b16 %v1982, %v1978
    %v2243 = vpack.c.b16 %v1987, %v1983
    %v2244 = vpack.c.b16 %v1988, %v1984
    %v2245 = vpack.c.b16 %v1989, %v1985
    %v2246 = vpack.c.b16 %v1990, %v1986
    %2503 = vmatprep.subr.bf16.mxu0 %v1992
    %2504 = vmatpush1.bf16.msra.mxu0 %v1991
    %2505 = vmatprep.subr.bf16.mxu0 %v1996
    %2506 = vmatpush1.bf16.msra.mxu0 %v1995
    %2507 = vmatprep.subr.bf16.mxu0 %v2000
    %2508 = vmatpush1.bf16.msra.mxu0 %v1999
    %2509 = vmatprep.subr.bf16.mxu0 %v2004
    %2510 = vmatpush1.bf16.msra.mxu0 %v2003
    %2511 = vmatprep.subr.bf16.mxu0 %v2008
    %2512 = vmatpush1.bf16.msra.mxu0 %v2007
    %2513 = vmatprep.subr.bf16.mxu0 %v2012
    %2514 = vmatpush1.bf16.msra.mxu0 %v2011
    %2515 = vmatprep.subr.bf16.mxu0 %v2016
    %2516 = vmatpush1.bf16.msra.mxu0 %v2015
    %2517 = vmatprep.subr.bf16.mxu0 %v2020
    %2518 = vmatpush1.bf16.msra.mxu0 %v2019
    %2519 = vmatprep.subr.bf16.mxu0 %v2024
    %2520 = vmatpush1.bf16.msra.mxu0 %v2023
    %2521 = vmatprep.subr.bf16.mxu0 %v2028
    %2522 = vmatpush1.bf16.msra.mxu0 %v2027
    %2523 = vmatprep.subr.bf16.mxu0 %v2032
    %2524 = vmatpush1.bf16.msra.mxu0 %v2031
    %2525 = vmatprep.subr.bf16.mxu0 %v2036
    %2526 = vmatpush1.bf16.msra.mxu0 %v2035
    %2527 = vmatprep.subr.bf16.mxu0 %v2040
    %2528 = vmatpush1.bf16.msra.mxu0 %v2039
    %2529 = vmatprep.subr.bf16.mxu0 %v2044
    %2530 = vmatpush1.bf16.msra.mxu0 %v2043
    %2531 = vmatprep.subr.bf16.mxu0 %v2048
    %2532 = vmatpush1.bf16.msra.mxu0 %v2047
    %2533 = vmatprep.subr.bf16.mxu0 %v2052
    %2534 = vmatpush1.bf16.msra.mxu0 %v2051
    %2535 = vmatprep.mubr.bf16.mxu0 %v883
    %2536 = vmatmul.mubr.bf16.gmra.mrb[0].mxu0 %v882
    %v2537 = vpop.f32.mrb[0].mxu0
    %v2538 = vadd.f32 %v1206, %v2537
    %v2539 = vpop.f32.mrb[0].mxu0
    %v2540 = vadd.f32 %v1210, %v2539
    %v2541 = vpop.f32.mrb[0].mxu0
    %v2542 = vadd.f32 %v1206, %v2541
    %v2543 = vpop.f32.mrb[0].mxu0
    %v2544 = vadd.f32 %v1210, %v2543
    %2545 = vmatprep.mubr.bf16.mxu0 %v891
    %2546 = vmatmul.mubr.bf16.gmra.mrb[0].mxu0 %v890
    %v2547 = vpop.f32.mrb[0].mxu0
    %v2548 = vadd.f32 %v1206, %v2547
    %v2549 = vpop.f32.mrb[0].mxu0
    %v2550 = vadd.f32 %v1210, %v2549
    %v2551 = vpop.f32.mrb[0].mxu0
    %v2552 = vadd.f32 %v1206, %v2551
    %v2553 = vpop.f32.mrb[0].mxu0
    %v2554 = vadd.f32 %v1210, %v2553
    %2555 = vmatprep.mubr.bf16.mxu0 %v899
    %2556 = vmatmul.mubr.bf16.gmra.mrb[0].mxu0 %v898
    %v2557 = vpop.f32.mrb[0].mxu0
    %v2558 = vadd.f32 %v1206, %v2557
    %v2559 = vpop.f32.mrb[0].mxu0
    %v2560 = vadd.f32 %v1210, %v2559
    %v2561 = vpop.f32.mrb[0].mxu0
    %v2562 = vadd.f32 %v1206, %v2561
    %v2563 = vpop.f32.mrb[0].mxu0
    %v2564 = vadd.f32 %v1210, %v2563
    %2565 = vmatprep.mubr.bf16.mxu0 %v907
    %2566 = vmatmul.mubr.bf16.gmra.mrb[0].mxu0 %v906
    %v2567 = vpop.f32.mrb[0].mxu0
    %v2568 = vadd.f32 %v1206, %v2567
    %v2569 = vpop.f32.mrb[0].mxu0
    %v2570 = vadd.f32 %v1210, %v2569
    %v2571 = vpop.f32.mrb[0].mxu0
    %v2572 = vadd.f32 %v1206, %v2571
    %v2573 = vpop.f32.mrb[0].mxu0
    %v2574 = vadd.f32 %v1210, %v2573
    %2575 = vmatprep.mubr.bf16.mxu0 %v915
    %2576 = vmatmul.mubr.bf16.gmra.mrb[0].mxu0 %v914
    %v2577 = vpop.f32.mrb[0].mxu0
    %v2578 = vadd.f32 %v1206, %v2577
    %v2579 = vpop.f32.mrb[0].mxu0
    %v2580 = vadd.f32 %v1210, %v2579
    %v2581 = vpop.f32.mrb[0].mxu0
    %v2582 = vadd.f32 %v1206, %v2581
    %v2583 = vpop.f32.mrb[0].mxu0
    %v2584 = vadd.f32 %v1210, %v2583
    %2585 = vmatprep.mubr.bf16.mxu0 %v923
    %2586 = vmatmul.mubr.bf16.gmra.mrb[0].mxu0 %v922
    %v2587 = vpop.f32.mrb[0].mxu0
    %v2588 = vadd.f32 %v1206, %v2587
    %v2589 = vpop.f32.mrb[0].mxu0
    %v2590 = vadd.f32 %v1210, %v2589
    %v2591 = vpop.f32.mrb[0].mxu0
    %v2592 = vadd.f32 %v1206, %v2591
    %v2593 = vpop.f32.mrb[0].mxu0
    %v2594 = vadd.f32 %v1210, %v2593
    %2595 = vmatprep.mubr.bf16.mxu0 %v931
    %2596 = vmatmul.mubr.bf16.gmra.mrb[0].mxu0 %v930
    %v2597 = vpop.f32.mrb[0].mxu0
    %v2598 = vadd.f32 %v1206, %v2597
    %v2599 = vpop.f32.mrb[0].mxu0
    %v2600 = vadd.f32 %v1210, %v2599
    %v2601 = vpop.f32.mrb[0].mxu0
    %v2602 = vadd.f32 %v1206, %v2601
    %v2603 = vpop.f32.mrb[0].mxu0
    %v2604 = vadd.f32 %v1210, %v2603
    %2605 = vmatprep.mubr.bf16.mxu0 %v939
    %2606 = vmatmul.mubr.bf16.gmra.mrb[0].mxu0 %v938
    %v2607 = vpop.f32.mrb[0].mxu0
    %v2608 = vadd.f32 %v1206, %v2607
    %v2609 = vpop.f32.mrb[0].mxu0
    %v2610 = vadd.f32 %v1210, %v2609
    %v2611 = vpop.f32.mrb[0].mxu0
    %v2612 = vadd.f32 %v1206, %v2611
    %v2613 = vpop.f32.mrb[0].mxu0
    %v2614 = vadd.f32 %v1210, %v2613
    %2615 = vdwg.mxu0
    %2616 = vmatprep.subr.bf16.mxu0 %v2056
    %2617 = vmatpush1.bf16.msra.mxu0 %v2055
    %2618 = vmatprep.subr.bf16.mxu0 %v2060
    %2619 = vmatpush1.bf16.msra.mxu0 %v2059
    %2620 = vmatprep.subr.bf16.mxu0 %v2064
    %2621 = vmatpush1.bf16.msra.mxu0 %v2063
    %2622 = vmatprep.subr.bf16.mxu0 %v2068
    %2623 = vmatpush1.bf16.msra.mxu0 %v2067
    %2624 = vmatprep.subr.bf16.mxu0 %v2072
    %2625 = vmatpush1.bf16.msra.mxu0 %v2071
    %2626 = vmatprep.subr.bf16.mxu0 %v2076
    %2627 = vmatpush1.bf16.msra.mxu0 %v2075
    %2628 = vmatprep.subr.bf16.mxu0 %v2080
    %2629 = vmatpush1.bf16.msra.mxu0 %v2079
    %2630 = vmatprep.subr.bf16.mxu0 %v2084
    %2631 = vmatpush1.bf16.msra.mxu0 %v2083
    %2632 = vmatprep.subr.bf16.mxu0 %v2088
    %2633 = vmatpush1.bf16.msra.mxu0 %v2087
    %2634 = vmatprep.subr.bf16.mxu0 %v2092
    %2635 = vmatpush1.bf16.msra.mxu0 %v2091
    %2636 = vmatprep.subr.bf16.mxu0 %v2096
    %2637 = vmatpush1.bf16.msra.mxu0 %v2095
    %2638 = vmatprep.subr.bf16.mxu0 %v2100
    %2639 = vmatpush1.bf16.msra.mxu0 %v2099
    %2640 = vmatprep.subr.bf16.mxu0 %v2104
    %2641 = vmatpush1.bf16.msra.mxu0 %v2103
    %2642 = vmatprep.subr.bf16.mxu0 %v2108
    %2643 = vmatpush1.bf16.msra.mxu0 %v2107
    %2644 = vmatprep.subr.bf16.mxu0 %v2112
    %2645 = vmatpush1.bf16.msra.mxu0 %v2111
    %2646 = vmatprep.subr.bf16.mxu0 %v2116
    %2647 = vmatpush1.bf16.msra.mxu0 %v2115
    %2648 = vmatprep.mubr.bf16.mxu0 %v885
    %2649 = vmatmul.mubr.bf16.gmra.mrb[0].mxu0 %v884
    %v2650 = vpop.f32.mrb[0].mxu0
    %v2651 = vadd.f32 %v2538, %v2650
    %v2652 = vpop.f32.mrb[0].mxu0
    %v2653 = vadd.f32 %v2540, %v2652
    %v2654 = vpop.f32.mrb[0].mxu0
    %v2655 = vadd.f32 %v2542, %v2654
    %v2656 = vpop.f32.mrb[0].mxu0
    %v2657 = vadd.f32 %v2544, %v2656
    %2658 = vmatprep.mubr.bf16.mxu0 %v893
    %2659 = vmatmul.mubr.bf16.gmra.mrb[0].mxu0 %v892
    %v2660 = vpop.f32.mrb[0].mxu0
    %v2661 = vadd.f32 %v2548, %v2660
    %v2662 = vpop.f32.mrb[0].mxu0
    %v2663 = vadd.f32 %v2550, %v2662
    %v2664 = vpop.f32.mrb[0].mxu0
    %v2665 = vadd.f32 %v2552, %v2664
    %v2666 = vpop.f32.mrb[0].mxu0
    %v2667 = vadd.f32 %v2554, %v2666
    %2668 = vmatprep.mubr.bf16.mxu0 %v901
    %2669 = vmatmul.mubr.bf16.gmra.mrb[0].mxu0 %v900
    %v2670 = vpop.f32.mrb[0].mxu0
    %v2671 = vadd.f32 %v2558, %v2670
    %v2672 = vpop.f32.mrb[0].mxu0
    %v2673 = vadd.f32 %v2560, %v2672
    %v2674 = vpop.f32.mrb[0].mxu0
    %v2675 = vadd.f32 %v2562, %v2674
    %v2676 = vpop.f32.mrb[0].mxu0
    %v2677 = vadd.f32 %v2564, %v2676
    %2678 = vmatprep.mubr.bf16.mxu0 %v909
    %2679 = vmatmul.mubr.bf16.gmra.mrb[0].mxu0 %v908
    %v2680 = vpop.f32.mrb[0].mxu0
    %v2681 = vadd.f32 %v2568, %v2680
    %v2682 = vpop.f32.mrb[0].mxu0
    %v2683 = vadd.f32 %v2570, %v2682
    %v2684 = vpop.f32.mrb[0].mxu0
    %v2685 = vadd.f32 %v2572, %v2684
    %v2686 = vpop.f32.mrb[0].mxu0
    %v2687 = vadd.f32 %v2574, %v2686
    %2688 = vmatprep.mubr.bf16.mxu0 %v917
    %2689 = vmatmul.mubr.bf16.gmra.mrb[0].mxu0 %v916
    %v2690 = vpop.f32.mrb[0].mxu0
    %v2691 = vadd.f32 %v2578, %v2690
    %v2692 = vpop.f32.mrb[0].mxu0
    %v2693 = vadd.f32 %v2580, %v2692
    %v2694 = vpop.f32.mrb[0].mxu0
    %v2695 = vadd.f32 %v2582, %v2694
    %v2696 = vpop.f32.mrb[0].mxu0
    %v2697 = vadd.f32 %v2584, %v2696
    %2698 = vmatprep.mubr.bf16.mxu0 %v925
    %2699 = vmatmul.mubr.bf16.gmra.mrb[0].mxu0 %v924
    %v2700 = vpop.f32.mrb[0].mxu0
    %v2701 = vadd.f32 %v2588, %v2700
    %v2702 = vpop.f32.mrb[0].mxu0
    %v2703 = vadd.f32 %v2590, %v2702
    %v2704 = vpop.f32.mrb[0].mxu0
    %v2705 = vadd.f32 %v2592, %v2704
    %v2706 = vpop.f32.mrb[0].mxu0
    %v2707 = vadd.f32 %v2594, %v2706
    %2708 = vmatprep.mubr.bf16.mxu0 %v933
    %2709 = vmatmul.mubr.bf16.gmra.mrb[0].mxu0 %v932
    %v2710 = vpop.f32.mrb[0].mxu0
    %v2711 = vadd.f32 %v2598, %v2710
    %v2712 = vpop.f32.mrb[0].mxu0
    %v2713 = vadd.f32 %v2600, %v2712
    %v2714 = vpop.f32.mrb[0].mxu0
    %v2715 = vadd.f32 %v2602, %v2714
    %v2716 = vpop.f32.mrb[0].mxu0
    %v2717 = vadd.f32 %v2604, %v2716
    %2718 = vmatprep.mubr.bf16.mxu0 %v941
    %2719 = vmatmul.mubr.bf16.gmra.mrb[0].mxu0 %v940
    %v2720 = vpop.f32.mrb[0].mxu0
    %v2721 = vadd.f32 %v2608, %v2720
    %v2722 = vpop.f32.mrb[0].mxu0
    %v2723 = vadd.f32 %v2610, %v2722
    %v2724 = vpop.f32.mrb[0].mxu0
    %v2725 = vadd.f32 %v2612, %v2724
    %v2726 = vpop.f32.mrb[0].mxu0
    %v2727 = vadd.f32 %v2614, %v2726
    %2728 = vdwg.mxu0
    %2729 = vmatprep.subr.bf16.mxu0 %v2120
    %2730 = vmatpush1.bf16.msra.mxu0 %v2119
    %2731 = vmatprep.subr.bf16.mxu0 %v2124
    %2732 = vmatpush1.bf16.msra.mxu0 %v2123
    %2733 = vmatprep.subr.bf16.mxu0 %v2128
    %2734 = vmatpush1.bf16.msra.mxu0 %v2127
    %2735 = vmatprep.subr.bf16.mxu0 %v2132
    %2736 = vmatpush1.bf16.msra.mxu0 %v2131
    %2737 = vmatprep.subr.bf16.mxu0 %v2136
    %2738 = vmatpush1.bf16.msra.mxu0 %v2135
    %2739 = vmatprep.subr.bf16.mxu0 %v2140
    %2740 = vmatpush1.bf16.msra.mxu0 %v2139
    %2741 = vmatprep.subr.bf16.mxu0 %v2144
    %2742 = vmatpush1.bf16.msra.mxu0 %v2143
    %2743 = vmatprep.subr.bf16.mxu0 %v2148
    %2744 = vmatpush1.bf16.msra.mxu0 %v2147
    %2745 = vmatprep.subr.bf16.mxu0 %v2152
    %2746 = vmatpush1.bf16.msra.mxu0 %v2151
    %2747 = vmatprep.subr.bf16.mxu0 %v2156
    %2748 = vmatpush1.bf16.msra.mxu0 %v2155
    %2749 = vmatprep.subr.bf16.mxu0 %v2160
    %2750 = vmatpush1.bf16.msra.mxu0 %v2159
    %2751 = vmatprep.subr.bf16.mxu0 %v2164
    %2752 = vmatpush1.bf16.msra.mxu0 %v2163
    %2753 = vmatprep.subr.bf16.mxu0 %v2168
    %2754 = vmatpush1.bf16.msra.mxu0 %v2167
    %2755 = vmatprep.subr.bf16.mxu0 %v2172
    %2756 = vmatpush1.bf16.msra.mxu0 %v2171
    %2757 = vmatprep.subr.bf16.mxu0 %v2176
    %2758 = vmatpush1.bf16.msra.mxu0 %v2175
    %2759 = vmatprep.subr.bf16.mxu0 %v2180
    %2760 = vmatpush1.bf16.msra.mxu0 %v2179
    %2761 = vmatprep.mubr.bf16.mxu0 %v887
    %2762 = vmatmul.mubr.bf16.gmra.mrb[0].mxu0 %v886
    %v2763 = vpop.f32.mrb[0].mxu0
    %v2764 = vadd.f32 %v2651, %v2763
    %v2765 = vpop.f32.mrb[0].mxu0
    %v2766 = vadd.f32 %v2653, %v2765
    %v2767 = vpop.f32.mrb[0].mxu0
    %v2768 = vadd.f32 %v2655, %v2767
    %v2769 = vpop.f32.mrb[0].mxu0
    %v2770 = vadd.f32 %v2657, %v2769
    %2771 = vmatprep.mubr.bf16.mxu0 %v895
    %2772 = vmatmul.mubr.bf16.gmra.mrb[0].mxu0 %v894
    %v2773 = vpop.f32.mrb[0].mxu0
    %v2774 = vadd.f32 %v2661, %v2773
    %v2775 = vpop.f32.mrb[0].mxu0
    %v2776 = vadd.f32 %v2663, %v2775
    %v2777 = vpop.f32.mrb[0].mxu0
    %v2778 = vadd.f32 %v2665, %v2777
    %v2779 = vpop.f32.mrb[0].mxu0
    %v2780 = vadd.f32 %v2667, %v2779
    %2781 = vmatprep.mubr.bf16.mxu0 %v903
    %2782 = vmatmul.mubr.bf16.gmra.mrb[0].mxu0 %v902
    %v2783 = vpop.f32.mrb[0].mxu0
    %v2784 = vadd.f32 %v2671, %v2783
    %v2785 = vpop.f32.mrb[0].mxu0
    %v2786 = vadd.f32 %v2673, %v2785
    %v2787 = vpop.f32.mrb[0].mxu0
    %v2788 = vadd.f32 %v2675, %v2787
    %v2789 = vpop.f32.mrb[0].mxu0
    %v2790 = vadd.f32 %v2677, %v2789
    %2791 = vmatprep.mubr.bf16.mxu0 %v911
    %2792 = vmatmul.mubr.bf16.gmra.mrb[0].mxu0 %v910
    %v2793 = vpop.f32.mrb[0].mxu0
    %v2794 = vadd.f32 %v2681, %v2793
    %v2795 = vpop.f32.mrb[0].mxu0
    %v2796 = vadd.f32 %v2683, %v2795
    %v2797 = vpop.f32.mrb[0].mxu0
    %v2798 = vadd.f32 %v2685, %v2797
    %v2799 = vpop.f32.mrb[0].mxu0
    %v2800 = vadd.f32 %v2687, %v2799
    %2801 = vmatprep.mubr.bf16.mxu0 %v919
    %2802 = vmatmul.mubr.bf16.gmra.mrb[0].mxu0 %v918
    %v2803 = vpop.f32.mrb[0].mxu0
    %v2804 = vadd.f32 %v2691, %v2803
    %v2805 = vpop.f32.mrb[0].mxu0
    %v2806 = vadd.f32 %v2693, %v2805
    %v2807 = vpop.f32.mrb[0].mxu0
    %v2808 = vadd.f32 %v2695, %v2807
    %v2809 = vpop.f32.mrb[0].mxu0
    %v2810 = vadd.f32 %v2697, %v2809
    %2811 = vmatprep.mubr.bf16.mxu0 %v927
    %2812 = vmatmul.mubr.bf16.gmra.mrb[0].mxu0 %v926
    %v2813 = vpop.f32.mrb[0].mxu0
    %v2814 = vadd.f32 %v2701, %v2813
    %v2815 = vpop.f32.mrb[0].mxu0
    %v2816 = vadd.f32 %v2703, %v2815
    %v2817 = vpop.f32.mrb[0].mxu0
    %v2818 = vadd.f32 %v2705, %v2817
    %v2819 = vpop.f32.mrb[0].mxu0
    %v2820 = vadd.f32 %v2707, %v2819
    %2821 = vmatprep.mubr.bf16.mxu0 %v935
    %2822 = vmatmul.mubr.bf16.gmra.mrb[0].mxu0 %v934
    %v2823 = vpop.f32.mrb[0].mxu0
    %v2824 = vadd.f32 %v2711, %v2823
    %v2825 = vpop.f32.mrb[0].mxu0
    %v2826 = vadd.f32 %v2713, %v2825
    %v2827 = vpop.f32.mrb[0].mxu0
    %v2828 = vadd.f32 %v2715, %v2827
    %v2829 = vpop.f32.mrb[0].mxu0
    %v2830 = vadd.f32 %v2717, %v2829
    %2831 = vmatprep.mubr.bf16.mxu0 %v943
    %2832 = vmatmul.mubr.bf16.gmra.mrb[0].mxu0 %v942
    %v2833 = vpop.f32.mrb[0].mxu0
    %v2834 = vadd.f32 %v2721, %v2833
    %v2835 = vpop.f32.mrb[0].mxu0
    %v2836 = vadd.f32 %v2723, %v2835
    %v2837 = vpop.f32.mrb[0].mxu0
    %v2838 = vadd.f32 %v2725, %v2837
    %v2839 = vpop.f32.mrb[0].mxu0
    %v2840 = vadd.f32 %v2727, %v2839
    %2841 = vdwg.mxu0
    %2842 = vmatprep.subr.bf16.mxu0 %v2184
    %2843 = vmatpush1.bf16.msra.mxu0 %v2183
    %2844 = vmatprep.subr.bf16.mxu0 %v2188
    %2845 = vmatpush1.bf16.msra.mxu0 %v2187
    %2846 = vmatprep.subr.bf16.mxu0 %v2192
    %2847 = vmatpush1.bf16.msra.mxu0 %v2191
    %2848 = vmatprep.subr.bf16.mxu0 %v2196
    %2849 = vmatpush1.bf16.msra.mxu0 %v2195
    %2850 = vmatprep.subr.bf16.mxu0 %v2200
    %2851 = vmatpush1.bf16.msra.mxu0 %v2199
    %2852 = vmatprep.subr.bf16.mxu0 %v2204
    %2853 = vmatpush1.bf16.msra.mxu0 %v2203
    %2854 = vmatprep.subr.bf16.mxu0 %v2208
    %2855 = vmatpush1.bf16.msra.mxu0 %v2207
    %2856 = vmatprep.subr.bf16.mxu0 %v2212
    %2857 = vmatpush1.bf16.msra.mxu0 %v2211
    %2858 = vmatprep.subr.bf16.mxu0 %v2216
    %2859 = vmatpush1.bf16.msra.mxu0 %v2215
    %2860 = vmatprep.subr.bf16.mxu0 %v2220
    %2861 = vmatpush1.bf16.msra.mxu0 %v2219
    %2862 = vmatprep.subr.bf16.mxu0 %v2224
    %2863 = vmatpush1.bf16.msra.mxu0 %v2223
    %2864 = vmatprep.subr.bf16.mxu0 %v2228
    %2865 = vmatpush1.bf16.msra.mxu0 %v2227
    %2866 = vmatprep.subr.bf16.mxu0 %v2232
    %2867 = vmatpush1.bf16.msra.mxu0 %v2231
    %2868 = vmatprep.subr.bf16.mxu0 %v2236
    %2869 = vmatpush1.bf16.msra.mxu0 %v2235
    %2870 = vmatprep.subr.bf16.mxu0 %v2240
    %2871 = vmatpush1.bf16.msra.mxu0 %v2239
    %2872 = vmatprep.subr.bf16.mxu0 %v2244
    %2873 = vmatpush1.bf16.msra.mxu0 %v2243
    %2874 = vmatprep.mubr.bf16.mxu0 %v889
    %2875 = vmatmul.mubr.bf16.gmra.mrb[0].mxu0 %v888
    %v2876 = vpop.f32.mrb[0].mxu0
    %v2877 = vadd.f32 %v2764, %v2876
    %v2878 = vpop.f32.mrb[0].mxu0
    %v2879 = vadd.f32 %v2766, %v2878
    %v2880 = vpop.f32.mrb[0].mxu0
    %v2881 = vadd.f32 %v2768, %v2880
    %v2882 = vpop.f32.mrb[0].mxu0
    %v2883 = vadd.f32 %v2770, %v2882
    %2884 = vmatprep.mubr.bf16.mxu0 %v897
    %2885 = vmatmul.mubr.bf16.gmra.mrb[0].mxu0 %v896
    %v2886 = vpop.f32.mrb[0].mxu0
    %v2887 = vadd.f32 %v2774, %v2886
    %v2888 = vpop.f32.mrb[0].mxu0
    %v2889 = vadd.f32 %v2776, %v2888
    %v2890 = vpop.f32.mrb[0].mxu0
    %v2891 = vadd.f32 %v2778, %v2890
    %v2892 = vpop.f32.mrb[0].mxu0
    %v2893 = vadd.f32 %v2780, %v2892
    %2894 = vmatprep.mubr.bf16.mxu0 %v905
    %2895 = vmatmul.mubr.bf16.gmra.mrb[0].mxu0 %v904
    %v2896 = vpop.f32.mrb[0].mxu0
    %v2897 = vadd.f32 %v2784, %v2896
    %v2898 = vpop.f32.mrb[0].mxu0
    %v2899 = vadd.f32 %v2786, %v2898
    %v2900 = vpop.f32.mrb[0].mxu0
    %v2901 = vadd.f32 %v2788, %v2900
    %v2902 = vpop.f32.mrb[0].mxu0
    %v2903 = vadd.f32 %v2790, %v2902
    %2904 = vmatprep.mubr.bf16.mxu0 %v913
    %2905 = vmatmul.mubr.bf16.gmra.mrb[0].mxu0 %v912
    %v2906 = vpop.f32.mrb[0].mxu0
    %v2907 = vadd.f32 %v2794, %v2906
    %v2908 = vpop.f32.mrb[0].mxu0
    %v2909 = vadd.f32 %v2796, %v2908
    %v2910 = vpop.f32.mrb[0].mxu0
    %v2911 = vadd.f32 %v2798, %v2910
    %v2912 = vpop.f32.mrb[0].mxu0
    %v2913 = vadd.f32 %v2800, %v2912
    %2914 = vmatprep.mubr.bf16.mxu0 %v921
    %2915 = vmatmul.mubr.bf16.gmra.mrb[0].mxu0 %v920
    %v2916 = vpop.f32.mrb[0].mxu0
    %v2917 = vadd.f32 %v2804, %v2916
    %v2918 = vpop.f32.mrb[0].mxu0
    %v2919 = vadd.f32 %v2806, %v2918
    %v2920 = vpop.f32.mrb[0].mxu0
    %v2921 = vadd.f32 %v2808, %v2920
    %v2922 = vpop.f32.mrb[0].mxu0
    %v2923 = vadd.f32 %v2810, %v2922
    %2924 = vmatprep.mubr.bf16.mxu0 %v929
    %2925 = vmatmul.mubr.bf16.gmra.mrb[0].mxu0 %v928
    %v2926 = vpop.f32.mrb[0].mxu0
    %v2927 = vadd.f32 %v2814, %v2926
    %v2928 = vpop.f32.mrb[0].mxu0
    %v2929 = vadd.f32 %v2816, %v2928
    %v2930 = vpop.f32.mrb[0].mxu0
    %v2931 = vadd.f32 %v2818, %v2930
    %v2932 = vpop.f32.mrb[0].mxu0
    %v2933 = vadd.f32 %v2820, %v2932
    %2934 = vmatprep.mubr.bf16.mxu0 %v937
    %2935 = vmatmul.mubr.bf16.gmra.mrb[0].mxu0 %v936
    %v2936 = vpop.f32.mrb[0].mxu0
    %v2937 = vadd.f32 %v2824, %v2936
    %v2938 = vpop.f32.mrb[0].mxu0
    %v2939 = vadd.f32 %v2826, %v2938
    %v2940 = vpop.f32.mrb[0].mxu0
    %v2941 = vadd.f32 %v2828, %v2940
    %v2942 = vpop.f32.mrb[0].mxu0
    %v2943 = vadd.f32 %v2830, %v2942
    %2944 = vmatprep.mubr.bf16.mxu0 %v945
    %2945 = vmatmul.mubr.bf16.gmra.mrb[0].mxu0 %v944
    %v2946 = vpop.f32.mrb[0].mxu0
    %v2947 = vadd.f32 %v2834, %v2946
    %v2948 = vpop.f32.mrb[0].mxu0
    %v2949 = vadd.f32 %v2836, %v2948
    %v2950 = vpop.f32.mrb[0].mxu0
    %v2951 = vadd.f32 %v2838, %v2950
    %v2952 = vpop.f32.mrb[0].mxu0
    %v2953 = vadd.f32 %v2840, %v2952
    %2954 = vdwg.mxu0
    %2955 = vmatprep.subr.bf16.mxu0 %v1994
    %2956 = vmatpush1.bf16.msra.mxu0 %v1993
    %2957 = vmatprep.subr.bf16.mxu0 %v1998
    %2958 = vmatpush1.bf16.msra.mxu0 %v1997
    %2959 = vmatprep.subr.bf16.mxu0 %v2002
    %2960 = vmatpush1.bf16.msra.mxu0 %v2001
    %2961 = vmatprep.subr.bf16.mxu0 %v2006
    %2962 = vmatpush1.bf16.msra.mxu0 %v2005
    %2963 = vmatprep.subr.bf16.mxu0 %v2010
    %2964 = vmatpush1.bf16.msra.mxu0 %v2009
    %2965 = vmatprep.subr.bf16.mxu0 %v2014
    %2966 = vmatpush1.bf16.msra.mxu0 %v2013
    %2967 = vmatprep.subr.bf16.mxu0 %v2018
    %2968 = vmatpush1.bf16.msra.mxu0 %v2017
    %2969 = vmatprep.subr.bf16.mxu0 %v2022
    %2970 = vmatpush1.bf16.msra.mxu0 %v2021
    %2971 = vmatprep.subr.bf16.mxu0 %v2026
    %2972 = vmatpush1.bf16.msra.mxu0 %v2025
    %2973 = vmatprep.subr.bf16.mxu0 %v2030
    %2974 = vmatpush1.bf16.msra.mxu0 %v2029
    %2975 = vmatprep.subr.bf16.mxu0 %v2034
    %2976 = vmatpush1.bf16.msra.mxu0 %v2033
    %2977 = vmatprep.subr.bf16.mxu0 %v2038
    %2978 = vmatpush1.bf16.msra.mxu0 %v2037
    %2979 = vmatprep.subr.bf16.mxu0 %v2042
    %2980 = vmatpush1.bf16.msra.mxu0 %v2041
    %2981 = vmatprep.subr.bf16.mxu0 %v2046
    %2982 = vmatpush1.bf16.msra.mxu0 %v2045
    %2983 = vmatprep.subr.bf16.mxu0 %v2050
    %2984 = vmatpush1.bf16.msra.mxu0 %v2049
    %2985 = vmatprep.subr.bf16.mxu0 %v2054
    %2986 = vmatpush1.bf16.msra.mxu0 %v2053
    %2987 = vmatprep.mubr.bf16.mxu0 %v883
    %2988 = vmatmul.mubr.bf16.gmra.mrb[0].mxu0 %v882
    %v2989 = vpop.f32.mrb[0].mxu0
    %v2990 = vadd.f32 %v1214, %v2989
    %v2991 = vpop.f32.mrb[0].mxu0
    %v2992 = vadd.f32 %v1218, %v2991
    %v2993 = vpop.f32.mrb[0].mxu0
    %v2994 = vadd.f32 %v1214, %v2993
    %v2995 = vpop.f32.mrb[0].mxu0
    %v2996 = vadd.f32 %v1218, %v2995
    %2997 = vmatprep.mubr.bf16.mxu0 %v891
    %2998 = vmatmul.mubr.bf16.gmra.mrb[0].mxu0 %v890
    %v2999 = vpop.f32.mrb[0].mxu0
    %v3000 = vadd.f32 %v1214, %v2999
    %v3001 = vpop.f32.mrb[0].mxu0
    %v3002 = vadd.f32 %v1218, %v3001
    %v3003 = vpop.f32.mrb[0].mxu0
    %v3004 = vadd.f32 %v1214, %v3003
    %v3005 = vpop.f32.mrb[0].mxu0
    %v3006 = vadd.f32 %v1218, %v3005
    %3007 = vmatprep.mubr.bf16.mxu0 %v899
    %3008 = vmatmul.mubr.bf16.gmra.mrb[0].mxu0 %v898
    %v3009 = vpop.f32.mrb[0].mxu0
    %v3010 = vadd.f32 %v1214, %v3009
    %v3011 = vpop.f32.mrb[0].mxu0
    %v3012 = vadd.f32 %v1218, %v3011
    %v3013 = vpop.f32.mrb[0].mxu0
    %v3014 = vadd.f32 %v1214, %v3013
    %v3015 = vpop.f32.mrb[0].mxu0
    %v3016 = vadd.f32 %v1218, %v3015
    %3017 = vmatprep.mubr.bf16.mxu0 %v907
    %3018 = vmatmul.mubr.bf16.gmra.mrb[0].mxu0 %v906
    %v3019 = vpop.f32.mrb[0].mxu0
    %v3020 = vadd.f32 %v1214, %v3019
    %v3021 = vpop.f32.mrb[0].mxu0
    %v3022 = vadd.f32 %v1218, %v3021
    %v3023 = vpop.f32.mrb[0].mxu0
    %v3024 = vadd.f32 %v1214, %v3023
    %v3025 = vpop.f32.mrb[0].mxu0
    %v3026 = vadd.f32 %v1218, %v3025
    %3027 = vmatprep.mubr.bf16.mxu0 %v915
    %3028 = vmatmul.mubr.bf16.gmra.mrb[0].mxu0 %v914
    %v3029 = vpop.f32.mrb[0].mxu0
    %v3030 = vadd.f32 %v1214, %v3029
    %v3031 = vpop.f32.mrb[0].mxu0
    %v3032 = vadd.f32 %v1218, %v3031
    %v3033 = vpop.f32.mrb[0].mxu0
    %v3034 = vadd.f32 %v1214, %v3033
    %v3035 = vpop.f32.mrb[0].mxu0
    %v3036 = vadd.f32 %v1218, %v3035
    %3037 = vmatprep.mubr.bf16.mxu0 %v923
    %3038 = vmatmul.mubr.bf16.gmra.mrb[0].mxu0 %v922
    %v3039 = vpop.f32.mrb[0].mxu0
    %v3040 = vadd.f32 %v1214, %v3039
    %v3041 = vpop.f32.mrb[0].mxu0
    %v3042 = vadd.f32 %v1218, %v3041
    %v3043 = vpop.f32.mrb[0].mxu0
    %v3044 = vadd.f32 %v1214, %v3043
    %v3045 = vpop.f32.mrb[0].mxu0
    %v3046 = vadd.f32 %v1218, %v3045
    %3047 = vmatprep.mubr.bf16.mxu0 %v931
    %3048 = vmatmul.mubr.bf16.gmra.mrb[0].mxu0 %v930
    %v3049 = vpop.f32.mrb[0].mxu0
    %v3050 = vadd.f32 %v1214, %v3049
    %v3051 = vpop.f32.mrb[0].mxu0
    %v3052 = vadd.f32 %v1218, %v3051
    %v3053 = vpop.f32.mrb[0].mxu0
    %v3054 = vadd.f32 %v1214, %v3053
    %v3055 = vpop.f32.mrb[0].mxu0
    %v3056 = vadd.f32 %v1218, %v3055
    %3057 = vmatprep.mubr.bf16.mxu0 %v939
    %3058 = vmatmul.mubr.bf16.gmra.mrb[0].mxu0 %v938
    %v3059 = vpop.f32.mrb[0].mxu0
    %v3060 = vadd.f32 %v1214, %v3059
    %v3061 = vpop.f32.mrb[0].mxu0
    %v3062 = vadd.f32 %v1218, %v3061
    %v3063 = vpop.f32.mrb[0].mxu0
    %v3064 = vadd.f32 %v1214, %v3063
    %v3065 = vpop.f32.mrb[0].mxu0
    %v3066 = vadd.f32 %v1218, %v3065
    %3067 = vdwg.mxu0
    %3068 = vmatprep.subr.bf16.mxu0 %v2058
    %3069 = vmatpush1.bf16.msra.mxu0 %v2057
    %3070 = vmatprep.subr.bf16.mxu0 %v2062
    %3071 = vmatpush1.bf16.msra.mxu0 %v2061
    %3072 = vmatprep.subr.bf16.mxu0 %v2066
    %3073 = vmatpush1.bf16.msra.mxu0 %v2065
    %3074 = vmatprep.subr.bf16.mxu0 %v2070
    %3075 = vmatpush1.bf16.msra.mxu0 %v2069
    %3076 = vmatprep.subr.bf16.mxu0 %v2074
    %3077 = vmatpush1.bf16.msra.mxu0 %v2073
    %3078 = vmatprep.subr.bf16.mxu0 %v2078
    %3079 = vmatpush1.bf16.msra.mxu0 %v2077
    %3080 = vmatprep.subr.bf16.mxu0 %v2082
    %3081 = vmatpush1.bf16.msra.mxu0 %v2081
    %3082 = vmatprep.subr.bf16.mxu0 %v2086
    %3083 = vmatpush1.bf16.msra.mxu0 %v2085
    %3084 = vmatprep.subr.bf16.mxu0 %v2090
    %3085 = vmatpush1.bf16.msra.mxu0 %v2089
    %3086 = vmatprep.subr.bf16.mxu0 %v2094
    %3087 = vmatpush1.bf16.msra.mxu0 %v2093
    %3088 = vmatprep.subr.bf16.mxu0 %v2098
    %3089 = vmatpush1.bf16.msra.mxu0 %v2097
    %3090 = vmatprep.subr.bf16.mxu0 %v2102
    %3091 = vmatpush1.bf16.msra.mxu0 %v2101
    %3092 = vmatprep.subr.bf16.mxu0 %v2106
    %3093 = vmatpush1.bf16.msra.mxu0 %v2105
    %3094 = vmatprep.subr.bf16.mxu0 %v2110
    %3095 = vmatpush1.bf16.msra.mxu0 %v2109
    %3096 = vmatprep.subr.bf16.mxu0 %v2114
    %3097 = vmatpush1.bf16.msra.mxu0 %v2113
    %3098 = vmatprep.subr.bf16.mxu0 %v2118
    %3099 = vmatpush1.bf16.msra.mxu0 %v2117
    %3100 = vmatprep.mubr.bf16.mxu0 %v885
    %3101 = vmatmul.mubr.bf16.gmra.mrb[0].mxu0 %v884
    %v3102 = vpop.f32.mrb[0].mxu0
    %v3103 = vadd.f32 %v2990, %v3102
    %v3104 = vpop.f32.mrb[0].mxu0
    %v3105 = vadd.f32 %v2992, %v3104
    %v3106 = vpop.f32.mrb[0].mxu0
    %v3107 = vadd.f32 %v2994, %v3106
    %v3108 = vpop.f32.mrb[0].mxu0
    %v3109 = vadd.f32 %v2996, %v3108
    %3110 = vmatprep.mubr.bf16.mxu0 %v893
    %3111 = vmatmul.mubr.bf16.gmra.mrb[0].mxu0 %v892
    %v3112 = vpop.f32.mrb[0].mxu0
    %v3113 = vadd.f32 %v3000, %v3112
    %v3114 = vpop.f32.mrb[0].mxu0
    %v3115 = vadd.f32 %v3002, %v3114
    %v3116 = vpop.f32.mrb[0].mxu0
    %v3117 = vadd.f32 %v3004, %v3116
    %v3118 = vpop.f32.mrb[0].mxu0
    %v3119 = vadd.f32 %v3006, %v3118
    %3120 = vmatprep.mubr.bf16.mxu0 %v901
    %3121 = vmatmul.mubr.bf16.gmra.mrb[0].mxu0 %v900
    %v3122 = vpop.f32.mrb[0].mxu0
    %v3123 = vadd.f32 %v3010, %v3122
    %v3124 = vpop.f32.mrb[0].mxu0
    %v3125 = vadd.f32 %v3012, %v3124
    %v3126 = vpop.f32.mrb[0].mxu0
    %v3127 = vadd.f32 %v3014, %v3126
    %v3128 = vpop.f32.mrb[0].mxu0
    %v3129 = vadd.f32 %v3016, %v3128
    %3130 = vmatprep.mubr.bf16.mxu0 %v909
    %3131 = vmatmul.mubr.bf16.gmra.mrb[0].mxu0 %v908
    %v3132 = vpop.f32.mrb[0].mxu0
    %v3133 = vadd.f32 %v3020, %v3132
    %v3134 = vpop.f32.mrb[0].mxu0
    %v3135 = vadd.f32 %v3022, %v3134
    %v3136 = vpop.f32.mrb[0].mxu0
    %v3137 = vadd.f32 %v3024, %v3136
    %v3138 = vpop.f32.mrb[0].mxu0
    %v3139 = vadd.f32 %v3026, %v3138
    %3140 = vmatprep.mubr.bf16.mxu0 %v917
    %3141 = vmatmul.mubr.bf16.gmra.mrb[0].mxu0 %v916
    %v3142 = vpop.f32.mrb[0].mxu0
    %v3143 = vadd.f32 %v3030, %v3142
    %v3144 = vpop.f32.mrb[0].mxu0
    %v3145 = vadd.f32 %v3032, %v3144
    %v3146 = vpop.f32.mrb[0].mxu0
    %v3147 = vadd.f32 %v3034, %v3146
    %v3148 = vpop.f32.mrb[0].mxu0
    %v3149 = vadd.f32 %v3036, %v3148
    %3150 = vmatprep.mubr.bf16.mxu0 %v925
    %3151 = vmatmul.mubr.bf16.gmra.mrb[0].mxu0 %v924
    %v3152 = vpop.f32.mrb[0].mxu0
    %v3153 = vadd.f32 %v3040, %v3152
    %v3154 = vpop.f32.mrb[0].mxu0
    %v3155 = vadd.f32 %v3042, %v3154
    %v3156 = vpop.f32.mrb[0].mxu0
    %v3157 = vadd.f32 %v3044, %v3156
    %v3158 = vpop.f32.mrb[0].mxu0
    %v3159 = vadd.f32 %v3046, %v3158
    %3160 = vmatprep.mubr.bf16.mxu0 %v933
    %3161 = vmatmul.mubr.bf16.gmra.mrb[0].mxu0 %v932
    %v3162 = vpop.f32.mrb[0].mxu0
    %v3163 = vadd.f32 %v3050, %v3162
    %v3164 = vpop.f32.mrb[0].mxu0
    %v3165 = vadd.f32 %v3052, %v3164
    %v3166 = vpop.f32.mrb[0].mxu0
    %v3167 = vadd.f32 %v3054, %v3166
    %v3168 = vpop.f32.mrb[0].mxu0
    %v3169 = vadd.f32 %v3056, %v3168
    %3170 = vmatprep.mubr.bf16.mxu0 %v941
    %3171 = vmatmul.mubr.bf16.gmra.mrb[0].mxu0 %v940
    %v3172 = vpop.f32.mrb[0].mxu0
    %v3173 = vadd.f32 %v3060, %v3172
    %v3174 = vpop.f32.mrb[0].mxu0
    %v3175 = vadd.f32 %v3062, %v3174
    %v3176 = vpop.f32.mrb[0].mxu0
    %v3177 = vadd.f32 %v3064, %v3176
    %v3178 = vpop.f32.mrb[0].mxu0
    %v3179 = vadd.f32 %v3066, %v3178
    %3180 = vdwg.mxu0
    %3181 = vmatprep.subr.bf16.mxu0 %v2122
    %3182 = vmatpush1.bf16.msra.mxu0 %v2121
    %3183 = vmatprep.subr.bf16.mxu0 %v2126
    %3184 = vmatpush1.bf16.msra.mxu0 %v2125
    %3185 = vmatprep.subr.bf16.mxu0 %v2130
    %3186 = vmatpush1.bf16.msra.mxu0 %v2129
    %3187 = vmatprep.subr.bf16.mxu0 %v2134
    %3188 = vmatpush1.bf16.msra.mxu0 %v2133
    %3189 = vmatprep.subr.bf16.mxu0 %v2138
    %3190 = vmatpush1.bf16.msra.mxu0 %v2137
    %3191 = vmatprep.subr.bf16.mxu0 %v2142
    %3192 = vmatpush1.bf16.msra.mxu0 %v2141
    %3193 = vmatprep.subr.bf16.mxu0 %v2146
    %3194 = vmatpush1.bf16.msra.mxu0 %v2145
    %3195 = vmatprep.subr.bf16.mxu0 %v2150
    %3196 = vmatpush1.bf16.msra.mxu0 %v2149
    %3197 = vmatprep.subr.bf16.mxu0 %v2154
    %3198 = vmatpush1.bf16.msra.mxu0 %v2153
    %3199 = vmatprep.subr.bf16.mxu0 %v2158
    %3200 = vmatpush1.bf16.msra.mxu0 %v2157
    %3201 = vmatprep.subr.bf16.mxu0 %v2162
    %3202 = vmatpush1.bf16.msra.mxu0 %v2161
    %3203 = vmatprep.subr.bf16.mxu0 %v2166
    %3204 = vmatpush1.bf16.msra.mxu0 %v2165
    %3205 = vmatprep.subr.bf16.mxu0 %v2170
    %3206 = vmatpush1.bf16.msra.mxu0 %v2169
    %3207 = vmatprep.subr.bf16.mxu0 %v2174
    %3208 = vmatpush1.bf16.msra.mxu0 %v2173
    %3209 = vmatprep.subr.bf16.mxu0 %v2178
    %3210 = vmatpush1.bf16.msra.mxu0 %v2177
    %3211 = vmatprep.subr.bf16.mxu0 %v2182
    %3212 = vmatpush1.bf16.msra.mxu0 %v2181
    %3213 = vmatprep.mubr.bf16.mxu0 %v887
    %3214 = vmatmul.mubr.bf16.gmra.mrb[0].mxu0 %v886
    %v3215 = vpop.f32.mrb[0].mxu0
    %v3216 = vadd.f32 %v3103, %v3215
    %v3217 = vpop.f32.mrb[0].mxu0
    %v3218 = vadd.f32 %v3105, %v3217
    %v3219 = vpop.f32.mrb[0].mxu0
    %v3220 = vadd.f32 %v3107, %v3219
    %v3221 = vpop.f32.mrb[0].mxu0
    %v3222 = vadd.f32 %v3109, %v3221
    %3223 = vmatprep.mubr.bf16.mxu0 %v895
    %3224 = vmatmul.mubr.bf16.gmra.mrb[0].mxu0 %v894
    %v3225 = vpop.f32.mrb[0].mxu0
    %v3226 = vadd.f32 %v3113, %v3225
    %v3227 = vpop.f32.mrb[0].mxu0
    %v3228 = vadd.f32 %v3115, %v3227
    %v3229 = vpop.f32.mrb[0].mxu0
    %v3230 = vadd.f32 %v3117, %v3229
    %v3231 = vpop.f32.mrb[0].mxu0
    %v3232 = vadd.f32 %v3119, %v3231
    %3233 = vmatprep.mubr.bf16.mxu0 %v903
    %3234 = vmatmul.mubr.bf16.gmra.mrb[0].mxu0 %v902
    %v3235 = vpop.f32.mrb[0].mxu0
    %v3236 = vadd.f32 %v3123, %v3235
    %v3237 = vpop.f32.mrb[0].mxu0
    %v3238 = vadd.f32 %v3125, %v3237
    %v3239 = vpop.f32.mrb[0].mxu0
    %v3240 = vadd.f32 %v3127, %v3239
    %v3241 = vpop.f32.mrb[0].mxu0
    %v3242 = vadd.f32 %v3129, %v3241
    %3243 = vmatprep.mubr.bf16.mxu0 %v911
    %3244 = vmatmul.mubr.bf16.gmra.mrb[0].mxu0 %v910
    %v3245 = vpop.f32.mrb[0].mxu0
    %v3246 = vadd.f32 %v3133, %v3245
    %v3247 = vpop.f32.mrb[0].mxu0
    %v3248 = vadd.f32 %v3135, %v3247
    %v3249 = vpop.f32.mrb[0].mxu0
    %v3250 = vadd.f32 %v3137, %v3249
    %v3251 = vpop.f32.mrb[0].mxu0
    %v3252 = vadd.f32 %v3139, %v3251
    %3253 = vmatprep.mubr.bf16.mxu0 %v919
    %3254 = vmatmul.mubr.bf16.gmra.mrb[0].mxu0 %v918
    %v3255 = vpop.f32.mrb[0].mxu0
    %v3256 = vadd.f32 %v3143, %v3255
    %v3257 = vpop.f32.mrb[0].mxu0
    %v3258 = vadd.f32 %v3145, %v3257
    %v3259 = vpop.f32.mrb[0].mxu0
    %v3260 = vadd.f32 %v3147, %v3259
    %v3261 = vpop.f32.mrb[0].mxu0
    %v3262 = vadd.f32 %v3149, %v3261
    %3263 = vmatprep.mubr.bf16.mxu0 %v927
    %3264 = vmatmul.mubr.bf16.gmra.mrb[0].mxu0 %v926
    %v3265 = vpop.f32.mrb[0].mxu0
    %v3266 = vadd.f32 %v3153, %v3265
    %v3267 = vpop.f32.mrb[0].mxu0
    %v3268 = vadd.f32 %v3155, %v3267
    %v3269 = vpop.f32.mrb[0].mxu0
    %v3270 = vadd.f32 %v3157, %v3269
    %v3271 = vpop.f32.mrb[0].mxu0
    %v3272 = vadd.f32 %v3159, %v3271
    %3273 = vmatprep.mubr.bf16.mxu0 %v935
    %3274 = vmatmul.mubr.bf16.gmra.mrb[0].mxu0 %v934
    %v3275 = vpop.f32.mrb[0].mxu0
    %v3276 = vadd.f32 %v3163, %v3275
    %v3277 = vpop.f32.mrb[0].mxu0
    %v3278 = vadd.f32 %v3165, %v3277
    %v3279 = vpop.f32.mrb[0].mxu0
    %v3280 = vadd.f32 %v3167, %v3279
    %v3281 = vpop.f32.mrb[0].mxu0
    %v3282 = vadd.f32 %v3169, %v3281
    %3283 = vmatprep.mubr.bf16.mxu0 %v943
    %3284 = vmatmul.mubr.bf16.gmra.mrb[0].mxu0 %v942
    %v3285 = vpop.f32.mrb[0].mxu0
    %v3286 = vadd.f32 %v3173, %v3285
    %v3287 = vpop.f32.mrb[0].mxu0
    %v3288 = vadd.f32 %v3175, %v3287
    %v3289 = vpop.f32.mrb[0].mxu0
    %v3290 = vadd.f32 %v3177, %v3289
    %v3291 = vpop.f32.mrb[0].mxu0
    %v3292 = vadd.f32 %v3179, %v3291
    %3293 = vdwg.mxu0
    %3294 = vmatprep.subr.bf16.mxu0 %v2186
    %3295 = vmatpush1.bf16.msra.mxu0 %v2185
    %3296 = vmatprep.subr.bf16.mxu0 %v2190
    %3297 = vmatpush1.bf16.msra.mxu0 %v2189
    %3298 = vmatprep.subr.bf16.mxu0 %v2194
    %3299 = vmatpush1.bf16.msra.mxu0 %v2193
    %3300 = vmatprep.subr.bf16.mxu0 %v2198
    %3301 = vmatpush1.bf16.msra.mxu0 %v2197
    %3302 = vmatprep.subr.bf16.mxu0 %v2202
    %3303 = vmatpush1.bf16.msra.mxu0 %v2201
    %3304 = vmatprep.subr.bf16.mxu0 %v2206
    %3305 = vmatpush1.bf16.msra.mxu0 %v2205
    %3306 = vmatprep.subr.bf16.mxu0 %v2210
    %3307 = vmatpush1.bf16.msra.mxu0 %v2209
    %3308 = vmatprep.subr.bf16.mxu0 %v2214
    %3309 = vmatpush1.bf16.msra.mxu0 %v2213
    %3310 = vmatprep.subr.bf16.mxu0 %v2218
    %3311 = vmatpush1.bf16.msra.mxu0 %v2217
    %3312 = vmatprep.subr.bf16.mxu0 %v2222
    %3313 = vmatpush1.bf16.msra.mxu0 %v2221
    %3314 = vmatprep.subr.bf16.mxu0 %v2226
    %3315 = vmatpush1.bf16.msra.mxu0 %v2225
    %3316 = vmatprep.subr.bf16.mxu0 %v2230
    %3317 = vmatpush1.bf16.msra.mxu0 %v2229
    %3318 = vmatprep.subr.bf16.mxu0 %v2234
    %3319 = vmatpush1.bf16.msra.mxu0 %v2233
    %3320 = vmatprep.subr.bf16.mxu0 %v2238
    %3321 = vmatpush1.bf16.msra.mxu0 %v2237
    %3322 = vmatprep.subr.bf16.mxu0 %v2242
    %3323 = vmatpush1.bf16.msra.mxu0 %v2241
    %3324 = vmatprep.subr.bf16.mxu0 %v2246
    %3325 = vmatpush1.bf16.msra.mxu0 %v2245
    %3326 = vmatprep.mubr.bf16.mxu0 %v889
    %3327 = vmatmul.mubr.bf16.gmra.mrb[0].mxu0 %v888
    %v3328 = vpop.f32.mrb[0].mxu0
    %v3329 = vadd.f32 %v3216, %v3328
    %v3330 = vpop.f32.mrb[0].mxu0
    %v3331 = vadd.f32 %v3218, %v3330
    %v3332 = vpop.f32.mrb[0].mxu0
    %v3333 = vadd.f32 %v3220, %v3332
    %v3334 = vpop.f32.mrb[0].mxu0
    %v3335 = vadd.f32 %v3222, %v3334
    %3336 = vmatprep.mubr.bf16.mxu0 %v897
    %3337 = vmatmul.mubr.bf16.gmra.mrb[0].mxu0 %v896
    %v3338 = vpop.f32.mrb[0].mxu0
    %v3339 = vadd.f32 %v3226, %v3338
    %v3340 = vpop.f32.mrb[0].mxu0
    %v3341 = vadd.f32 %v3228, %v3340
    %v3342 = vpop.f32.mrb[0].mxu0
    %v3343 = vadd.f32 %v3230, %v3342
    %v3344 = vpop.f32.mrb[0].mxu0
    %v3345 = vadd.f32 %v3232, %v3344
    %3346 = vmatprep.mubr.bf16.mxu0 %v905
    %3347 = vmatmul.mubr.bf16.gmra.mrb[0].mxu0 %v904
    %v3348 = vpop.f32.mrb[0].mxu0
    %v3349 = vadd.f32 %v3236, %v3348
    %v3350 = vpop.f32.mrb[0].mxu0
    %v3351 = vadd.f32 %v3238, %v3350
    %v3352 = vpop.f32.mrb[0].mxu0
    %v3353 = vadd.f32 %v3240, %v3352
    %v3354 = vpop.f32.mrb[0].mxu0
    %v3355 = vadd.f32 %v3242, %v3354
    %3356 = vmatprep.mubr.bf16.mxu0 %v913
    %3357 = vmatmul.mubr.bf16.gmra.mrb[0].mxu0 %v912
    %v3358 = vpop.f32.mrb[0].mxu0
    %v3359 = vadd.f32 %v3246, %v3358
    %v3360 = vpop.f32.mrb[0].mxu0
    %v3361 = vadd.f32 %v3248, %v3360
    %v3362 = vpop.f32.mrb[0].mxu0
    %v3363 = vadd.f32 %v3250, %v3362
    %v3364 = vpop.f32.mrb[0].mxu0
    %v3365 = vadd.f32 %v3252, %v3364
    %3366 = vmatprep.mubr.bf16.mxu0 %v921
    %3367 = vmatmul.mubr.bf16.gmra.mrb[0].mxu0 %v920
    %v3368 = vpop.f32.mrb[0].mxu0
    %v3369 = vadd.f32 %v3256, %v3368
    %v3370 = vpop.f32.mrb[0].mxu0
    %v3371 = vadd.f32 %v3258, %v3370
    %v3372 = vpop.f32.mrb[0].mxu0
    %v3373 = vadd.f32 %v3260, %v3372
    %v3374 = vpop.f32.mrb[0].mxu0
    %v3375 = vadd.f32 %v3262, %v3374
    %3376 = vmatprep.mubr.bf16.mxu0 %v929
    %3377 = vmatmul.mubr.bf16.gmra.mrb[0].mxu0 %v928
    %v3378 = vpop.f32.mrb[0].mxu0
    %v3379 = vadd.f32 %v3266, %v3378
    %v3380 = vpop.f32.mrb[0].mxu0
    %v3381 = vadd.f32 %v3268, %v3380
    %v3382 = vpop.f32.mrb[0].mxu0
    %v3383 = vadd.f32 %v3270, %v3382
    %v3384 = vpop.f32.mrb[0].mxu0
    %v3385 = vadd.f32 %v3272, %v3384
    %3386 = vmatprep.mubr.bf16.mxu0 %v937
    %3387 = vmatmul.mubr.bf16.gmra.mrb[0].mxu0 %v936
    %v3388 = vpop.f32.mrb[0].mxu0
    %v3389 = vadd.f32 %v3276, %v3388
    %v3390 = vpop.f32.mrb[0].mxu0
    %v3391 = vadd.f32 %v3278, %v3390
    %v3392 = vpop.f32.mrb[0].mxu0
    %v3393 = vadd.f32 %v3280, %v3392
    %v3394 = vpop.f32.mrb[0].mxu0
    %v3395 = vadd.f32 %v3282, %v3394
    %3396 = vmatprep.mubr.bf16.mxu0 %v945
    %3397 = vmatmul.mubr.bf16.gmra.mrb[0].mxu0 %v944
    %v3398 = vpop.f32.mrb[0].mxu0
    %v3399 = vadd.f32 %v3286, %v3398
    %v3400 = vpop.f32.mrb[0].mxu0
    %v3401 = vadd.f32 %v3288, %v3400
    %v3402 = vpop.f32.mrb[0].mxu0
    %v3403 = vadd.f32 %v3290, %v3402
    %v3404 = vpop.f32.mrb[0].mxu0
    %v3405 = vadd.f32 %v3292, %v3404
    %3406 = vdwg.mxu0
    %v3407 = vmax.f32 %v2877, 0.0
    %v3408 = vmax.f32 %v2879, 0.0
    %v3409 = vmax.f32 %v3329, 0.0
    %v3410 = vmax.f32 %v3331, 0.0
    %v3411 = vmax.f32 %v2881, 0.0
    %v3412 = vmax.f32 %v2883, 0.0
    %v3413 = vmax.f32 %v3333, 0.0
    %v3414 = vmax.f32 %v3335, 0.0
    %v3415 = vmax.f32 %v2887, 0.0
    %v3416 = vmax.f32 %v2889, 0.0
    %v3417 = vmax.f32 %v3339, 0.0
    %v3418 = vmax.f32 %v3341, 0.0
    %v3419 = vmax.f32 %v2891, 0.0
    %v3420 = vmax.f32 %v2893, 0.0
    %v3421 = vmax.f32 %v3343, 0.0
    %v3422 = vmax.f32 %v3345, 0.0
    %v3423 = vmax.f32 %v2897, 0.0
    %v3424 = vmax.f32 %v2899, 0.0
    %v3425 = vmax.f32 %v3349, 0.0
    %v3426 = vmax.f32 %v3351, 0.0
    %v3427 = vmax.f32 %v2901, 0.0
    %v3428 = vmax.f32 %v2903, 0.0
    %v3429 = vmax.f32 %v3353, 0.0
    %v3430 = vmax.f32 %v3355, 0.0
    %v3431 = vmax.f32 %v2907, 0.0
    %v3432 = vmax.f32 %v2909, 0.0
    %v3433 = vmax.f32 %v3359, 0.0
    %v3434 = vmax.f32 %v3361, 0.0
    %v3435 = vmax.f32 %v2911, 0.0
    %v3436 = vmax.f32 %v2913, 0.0
    %v3437 = vmax.f32 %v3363, 0.0
    %v3438 = vmax.f32 %v3365, 0.0
    %v3439 = vmax.f32 %v2917, 0.0
    %v3440 = vmax.f32 %v2919, 0.0
    %v3441 = vmax.f32 %v3369, 0.0
    %v3442 = vmax.f32 %v3371, 0.0
    %v3443 = vmax.f32 %v2921, 0.0
    %v3444 = vmax.f32 %v2923, 0.0
    %v3445 = vmax.f32 %v3373, 0.0
    %v3446 = vmax.f32 %v3375, 0.0
    %v3447 = vmax.f32 %v2927, 0.0
    %v3448 = vmax.f32 %v2929, 0.0
    %v3449 = vmax.f32 %v3379, 0.0
    %v3450 = vmax.f32 %v3381, 0.0
    %v3451 = vmax.f32 %v2931, 0.0
    %v3452 = vmax.f32 %v2933, 0.0
    %v3453 = vmax.f32 %v3383, 0.0
    %v3454 = vmax.f32 %v3385, 0.0
    %v3455 = vmax.f32 %v2937, 0.0
    %v3456 = vmax.f32 %v2939, 0.0
    %v3457 = vmax.f32 %v3389, 0.0
    %v3458 = vmax.f32 %v3391, 0.0
    %v3459 = vmax.f32 %v2941, 0.0
    %v3460 = vmax.f32 %v2943, 0.0
    %v3461 = vmax.f32 %v3393, 0.0
    %v3462 = vmax.f32 %v3395, 0.0
    %v3463 = vmax.f32 %v2947, 0.0
    %v3464 = vmax.f32 %v2949, 0.0
    %v3465 = vmax.f32 %v3399, 0.0
    %v3466 = vmax.f32 %v3401, 0.0
    %v3467 = vmax.f32 %v2951, 0.0
    %v3468 = vmax.f32 %v2953, 0.0
    %v3469 = vmax.f32 %v3403, 0.0
    %v3470 = vmax.f32 %v3405, 0.0
    %v3471 = vpack.c.bf16 %v3411, %v3407
    %v3472 = vpack.c.bf16 %v3412, %v3408
    %v3473 = vpack.c.bf16 %v3413, %v3409
    %v3474 = vpack.c.bf16 %v3414, %v3410
    %v3475 = vpack.c.bf16 %v3419, %v3415
    %v3476 = vpack.c.bf16 %v3420, %v3416
    %v3477 = vpack.c.bf16 %v3421, %v3417
    %v3478 = vpack.c.bf16 %v3422, %v3418
    %v3479 = vpack.c.bf16 %v3427, %v3423
    %v3480 = vpack.c.bf16 %v3428, %v3424
    %v3481 = vpack.c.bf16 %v3429, %v3425
    %v3482 = vpack.c.bf16 %v3430, %v3426
    %v3483 = vpack.c.bf16 %v3435, %v3431
    %v3484 = vpack.c.bf16 %v3436, %v3432
    %v3485 = vpack.c.bf16 %v3437, %v3433
    %v3486 = vpack.c.bf16 %v3438, %v3434
    %v3487 = vpack.c.bf16 %v3443, %v3439
    %v3488 = vpack.c.bf16 %v3444, %v3440
    %v3489 = vpack.c.bf16 %v3445, %v3441
    %v3490 = vpack.c.bf16 %v3446, %v3442
    %v3491 = vpack.c.bf16 %v3451, %v3447
    %v3492 = vpack.c.bf16 %v3452, %v3448
    %v3493 = vpack.c.bf16 %v3453, %v3449
    %v3494 = vpack.c.bf16 %v3454, %v3450
    %v3495 = vpack.c.bf16 %v3459, %v3455
    %v3496 = vpack.c.bf16 %v3460, %v3456
    %v3497 = vpack.c.bf16 %v3461, %v3457
    %v3498 = vpack.c.bf16 %v3462, %v3458
    %v3499 = vpack.c.bf16 %v3467, %v3463
    %v3500 = vpack.c.bf16 %v3468, %v3464
    %v3501 = vpack.c.bf16 %v3469, %v3465
    %v3502 = vpack.c.bf16 %v3470, %v3466
    %v3503 = vld [vmem:[#allocation7] sm:$0xff]
    %v3504 = vld [vmem:[#allocation7 + $0x8] sm:$0xff]
    %v3505 = vld [vmem:[#allocation7 + $0x10] sm:$0xff]
    %v3506 = vld [vmem:[#allocation7 + $0x18] sm:$0xff]
    %v3507 = vld [vmem:[#allocation7 + $0x20] sm:$0xff]
    %v3508 = vld [vmem:[#allocation7 + $0x28] sm:$0xff]
    %v3509 = vld [vmem:[#allocation7 + $0x30] sm:$0xff]
    %v3510 = vld [vmem:[#allocation7 + $0x38] sm:$0xff]
    %v3511 = vld [vmem:[#allocation7 + $0x40] sm:$0xff]
    %v3512 = vld [vmem:[#allocation7 + $0x48] sm:$0xff]
    %v3513 = vld [vmem:[#allocation7 + $0x50] sm:$0xff]
    %v3514 = vld [vmem:[#allocation7 + $0x58] sm:$0xff]
    %v3515 = vld [vmem:[#allocation7 + $0x60] sm:$0xff]
    %v3516 = vld [vmem:[#allocation7 + $0x68] sm:$0xff]
    %v3517 = vld [vmem:[#allocation7 + $0x70] sm:$0xff]
    %v3518 = vld [vmem:[#allocation7 + $0x78] sm:$0xff]
    %v3519 = vld [vmem:[#allocation7 + $0x80] sm:$0xff]
    %v3520 = vld [vmem:[#allocation7 + $0x88] sm:$0xff]
    %v3521 = vld [vmem:[#allocation7 + $0x90] sm:$0xff]
    %v3522 = vld [vmem:[#allocation7 + $0x98] sm:$0xff]
    %v3523 = vld [vmem:[#allocation7 + $0xa0] sm:$0xff]
    %v3524 = vld [vmem:[#allocation7 + $0xa8] sm:$0xff]
    %v3525 = vld [vmem:[#allocation7 + $0xb0] sm:$0xff]
    %v3526 = vld [vmem:[#allocation7 + $0xb8] sm:$0xff]
    %v3527 = vld [vmem:[#allocation7 + $0xc0] sm:$0xff]
    %v3528 = vld [vmem:[#allocation7 + $0xc8] sm:$0xff]
    %v3529 = vld [vmem:[#allocation7 + $0xd0] sm:$0xff]
    %v3530 = vld [vmem:[#allocation7 + $0xd8] sm:$0xff]
    %v3531 = vld [vmem:[#allocation7 + $0xe0] sm:$0xff]
    %v3532 = vld [vmem:[#allocation7 + $0xe8] sm:$0xff]
    %v3533 = vld [vmem:[#allocation7 + $0xf0] sm:$0xff]
    %v3534 = vld [vmem:[#allocation7 + $0xf8] sm:$0xff]
    %v3535 = vld [vmem:[#allocation7 + $0x100] sm:$0xff]
    %v3536 = vld [vmem:[#allocation7 + $0x108] sm:$0xff]
    %v3537 = vld [vmem:[#allocation7 + $0x110] sm:$0xff]
    %v3538 = vld [vmem:[#allocation7 + $0x118] sm:$0xff]
    %v3539 = vld [vmem:[#allocation7 + $0x120] sm:$0xff]
    %v3540 = vld [vmem:[#allocation7 + $0x128] sm:$0xff]
    %v3541 = vld [vmem:[#allocation7 + $0x130] sm:$0xff]
    %v3542 = vld [vmem:[#allocation7 + $0x138] sm:$0xff]
    %v3543 = vld [vmem:[#allocation7 + $0x140] sm:$0xff]
    %v3544 = vld [vmem:[#allocation7 + $0x148] sm:$0xff]
    %v3545 = vld [vmem:[#allocation7 + $0x150] sm:$0xff]
    %v3546 = vld [vmem:[#allocation7 + $0x158] sm:$0xff]
    %v3547 = vld [vmem:[#allocation7 + $0x160] sm:$0xff]
    %v3548 = vld [vmem:[#allocation7 + $0x168] sm:$0xff]
    %v3549 = vld [vmem:[#allocation7 + $0x170] sm:$0xff]
    %v3550 = vld [vmem:[#allocation7 + $0x178] sm:$0xff]
    %v3551 = vld [vmem:[#allocation7 + $0x180] sm:$0xff]
    %v3552 = vld [vmem:[#allocation7 + $0x188] sm:$0xff]
    %v3553 = vld [vmem:[#allocation7 + $0x190] sm:$0xff]
    %v3554 = vld [vmem:[#allocation7 + $0x198] sm:$0xff]
    %v3555 = vld [vmem:[#allocation7 + $0x1a0] sm:$0xff]
    %v3556 = vld [vmem:[#allocation7 + $0x1a8] sm:$0xff]
    %v3557 = vld [vmem:[#allocation7 + $0x1b0] sm:$0xff]
    %v3558 = vld [vmem:[#allocation7 + $0x1b8] sm:$0xff]
    %v3559 = vld [vmem:[#allocation7 + $0x1c0] sm:$0xff]
    %v3560 = vld [vmem:[#allocation7 + $0x1c8] sm:$0xff]
    %v3561 = vld [vmem:[#allocation7 + $0x1d0] sm:$0xff]
    %v3562 = vld [vmem:[#allocation7 + $0x1d8] sm:$0xff]
    %v3563 = vld [vmem:[#allocation7 + $0x1e0] sm:$0xff]
    %v3564 = vld [vmem:[#allocation7 + $0x1e8] sm:$0xff]
    %v3565 = vld [vmem:[#allocation7 + $0x1f0] sm:$0xff]
    %v3566 = vld [vmem:[#allocation7 + $0x1f8] sm:$0xff]
    %v3568 = vlaneseq
    %v3569 = vshrl.u32 %v3568, 7
    %v3570 = vsub.s32 0, %v3569
    %v3571 = vrot.slane %v82, %v3570
    %v3572 = vlaneseq
    %v3573 = vshrl.u32 %v3572, 7
    %v3574 = vsub.s32 1, %v3573
    %v3575 = vrot.slane %v82, %v3574
    %v3642 = vunpack.c.l.b16 %v3503
    %v3643 = vunpack.c.h.b16 %v3503
    %v3644 = vunpack.c.l.b16 %v3504
    %v3645 = vunpack.c.h.b16 %v3504
    %v3646 = vunpack.c.l.b16 %v3505
    %v3647 = vunpack.c.h.b16 %v3505
    %v3648 = vunpack.c.l.b16 %v3506
    %v3649 = vunpack.c.h.b16 %v3506
    %v3650 = vunpack.c.l.b16 %v3507
    %v3651 = vunpack.c.h.b16 %v3507
    %v3652 = vunpack.c.l.b16 %v3508
    %v3653 = vunpack.c.h.b16 %v3508
    %v3654 = vunpack.c.l.b16 %v3509
    %v3655 = vunpack.c.h.b16 %v3509
    %v3656 = vunpack.c.l.b16 %v3510
    %v3657 = vunpack.c.h.b16 %v3510
    %v3658 = vunpack.c.l.b16 %v3511
    %v3659 = vunpack.c.h.b16 %v3511
    %v3660 = vunpack.c.l.b16 %v3512
    %v3661 = vunpack.c.h.b16 %v3512
    %v3662 = vunpack.c.l.b16 %v3513
    %v3663 = vunpack.c.h.b16 %v3513
    %v3664 = vunpack.c.l.b16 %v3514
    %v3665 = vunpack.c.h.b16 %v3514
    %v3666 = vunpack.c.l.b16 %v3515
    %v3667 = vunpack.c.h.b16 %v3515
    %v3668 = vunpack.c.l.b16 %v3516
    %v3669 = vunpack.c.h.b16 %v3516
    %v3670 = vunpack.c.l.b16 %v3517
    %v3671 = vunpack.c.h.b16 %v3517
    %v3672 = vunpack.c.l.b16 %v3518
    %v3673 = vunpack.c.h.b16 %v3518
    %v3674 = vunpack.c.l.b16 %v3519
    %v3675 = vunpack.c.h.b16 %v3519
    %v3676 = vunpack.c.l.b16 %v3520
    %v3677 = vunpack.c.h.b16 %v3520
    %v3678 = vunpack.c.l.b16 %v3521
    %v3679 = vunpack.c.h.b16 %v3521
    %v3680 = vunpack.c.l.b16 %v3522
    %v3681 = vunpack.c.h.b16 %v3522
    %v3682 = vunpack.c.l.b16 %v3523
    %v3683 = vunpack.c.h.b16 %v3523
    %v3684 = vunpack.c.l.b16 %v3524
    %v3685 = vunpack.c.h.b16 %v3524
    %v3686 = vunpack.c.l.b16 %v3525
    %v3687 = vunpack.c.h.b16 %v3525
    %v3688 = vunpack.c.l.b16 %v3526
    %v3689 = vunpack.c.h.b16 %v3526
    %v3690 = vunpack.c.l.b16 %v3527
    %v3691 = vunpack.c.h.b16 %v3527
    %v3692 = vunpack.c.l.b16 %v3528
    %v3693 = vunpack.c.h.b16 %v3528
    %v3694 = vunpack.c.l.b16 %v3529
    %v3695 = vunpack.c.h.b16 %v3529
    %v3696 = vunpack.c.l.b16 %v3530
    %v3697 = vunpack.c.h.b16 %v3530
    %v3698 = vunpack.c.l.b16 %v3531
    %v3699 = vunpack.c.h.b16 %v3531
    %v3700 = vunpack.c.l.b16 %v3532
    %v3701 = vunpack.c.h.b16 %v3532
    %v3702 = vunpack.c.l.b16 %v3533
    %v3703 = vunpack.c.h.b16 %v3533
    %v3704 = vunpack.c.l.b16 %v3534
    %v3705 = vunpack.c.h.b16 %v3534
    %v3706 = vunpack.c.l.b16 %v3535
    %v3707 = vunpack.c.h.b16 %v3535
    %v3708 = vunpack.c.l.b16 %v3536
    %v3709 = vunpack.c.h.b16 %v3536
    %v3710 = vunpack.c.l.b16 %v3537
    %v3711 = vunpack.c.h.b16 %v3537
    %v3712 = vunpack.c.l.b16 %v3538
    %v3713 = vunpack.c.h.b16 %v3538
    %v3714 = vunpack.c.l.b16 %v3539
    %v3715 = vunpack.c.h.b16 %v3539
    %v3716 = vunpack.c.l.b16 %v3540
    %v3717 = vunpack.c.h.b16 %v3540
    %v3718 = vunpack.c.l.b16 %v3541
    %v3719 = vunpack.c.h.b16 %v3541
    %v3720 = vunpack.c.l.b16 %v3542
    %v3721 = vunpack.c.h.b16 %v3542
    %v3722 = vunpack.c.l.b16 %v3543
    %v3723 = vunpack.c.h.b16 %v3543
    %v3724 = vunpack.c.l.b16 %v3544
    %v3725 = vunpack.c.h.b16 %v3544
    %v3726 = vunpack.c.l.b16 %v3545
    %v3727 = vunpack.c.h.b16 %v3545
    %v3728 = vunpack.c.l.b16 %v3546
    %v3729 = vunpack.c.h.b16 %v3546
    %v3730 = vunpack.c.l.b16 %v3547
    %v3731 = vunpack.c.h.b16 %v3547
    %v3732 = vunpack.c.l.b16 %v3548
    %v3733 = vunpack.c.h.b16 %v3548
    %v3734 = vunpack.c.l.b16 %v3549
    %v3735 = vunpack.c.h.b16 %v3549
    %v3736 = vunpack.c.l.b16 %v3550
    %v3737 = vunpack.c.h.b16 %v3550
    %v3738 = vunpack.c.l.b16 %v3551
    %v3739 = vunpack.c.h.b16 %v3551
    %v3740 = vunpack.c.l.b16 %v3552
    %v3741 = vunpack.c.h.b16 %v3552
    %v3742 = vunpack.c.l.b16 %v3553
    %v3743 = vunpack.c.h.b16 %v3553
    %v3744 = vunpack.c.l.b16 %v3554
    %v3745 = vunpack.c.h.b16 %v3554
    %v3746 = vunpack.c.l.b16 %v3555
    %v3747 = vunpack.c.h.b16 %v3555
    %v3748 = vunpack.c.l.b16 %v3556
    %v3749 = vunpack.c.h.b16 %v3556
    %v3750 = vunpack.c.l.b16 %v3557
    %v3751 = vunpack.c.h.b16 %v3557
    %v3752 = vunpack.c.l.b16 %v3558
    %v3753 = vunpack.c.h.b16 %v3558
    %v3754 = vunpack.c.l.b16 %v3559
    %v3755 = vunpack.c.h.b16 %v3559
    %v3756 = vunpack.c.l.b16 %v3560
    %v3757 = vunpack.c.h.b16 %v3560
    %v3758 = vunpack.c.l.b16 %v3561
    %v3759 = vunpack.c.h.b16 %v3561
    %v3760 = vunpack.c.l.b16 %v3562
    %v3761 = vunpack.c.h.b16 %v3562
    %v3762 = vunpack.c.l.b16 %v3563
    %v3763 = vunpack.c.h.b16 %v3563
    %v3764 = vunpack.c.l.b16 %v3564
    %v3765 = vunpack.c.h.b16 %v3564
    %v3766 = vunpack.c.l.b16 %v3565
    %v3767 = vunpack.c.h.b16 %v3565
    %v3768 = vunpack.c.l.b16 %v3566
    %v3769 = vunpack.c.h.b16 %v3566
    %v3770 = vpack.c.b16 %v3644, %v3642
    %v3771 = vpack.c.b16 %v3645, %v3643
    %v3772 = vpack.c.b16 %v3648, %v3646
    %v3773 = vpack.c.b16 %v3649, %v3647
    %v3774 = vpack.c.b16 %v3652, %v3650
    %v3775 = vpack.c.b16 %v3653, %v3651
    %v3776 = vpack.c.b16 %v3656, %v3654
    %v3777 = vpack.c.b16 %v3657, %v3655
    %v3778 = vpack.c.b16 %v3660, %v3658
    %v3779 = vpack.c.b16 %v3661, %v3659
    %v3780 = vpack.c.b16 %v3664, %v3662
    %v3781 = vpack.c.b16 %v3665, %v3663
    %v3782 = vpack.c.b16 %v3668, %v3666
    %v3783 = vpack.c.b16 %v3669, %v3667
    %v3784 = vpack.c.b16 %v3672, %v3670
    %v3785 = vpack.c.b16 %v3673, %v3671
    %v3786 = vpack.c.b16 %v3676, %v3674
    %v3787 = vpack.c.b16 %v3677, %v3675
    %v3788 = vpack.c.b16 %v3680, %v3678
    %v3789 = vpack.c.b16 %v3681, %v3679
    %v3790 = vpack.c.b16 %v3684, %v3682
    %v3791 = vpack.c.b16 %v3685, %v3683
    %v3792 = vpack.c.b16 %v3688, %v3686
    %v3793 = vpack.c.b16 %v3689, %v3687
    %v3794 = vpack.c.b16 %v3692, %v3690
    %v3795 = vpack.c.b16 %v3693, %v3691
    %v3796 = vpack.c.b16 %v3696, %v3694
    %v3797 = vpack.c.b16 %v3697, %v3695
    %v3798 = vpack.c.b16 %v3700, %v3698
    %v3799 = vpack.c.b16 %v3701, %v3699
    %v3800 = vpack.c.b16 %v3704, %v3702
    %v3801 = vpack.c.b16 %v3705, %v3703
    %v3802 = vpack.c.b16 %v3708, %v3706
    %v3803 = vpack.c.b16 %v3709, %v3707
    %v3804 = vpack.c.b16 %v3712, %v3710
    %v3805 = vpack.c.b16 %v3713, %v3711
    %v3806 = vpack.c.b16 %v3716, %v3714
    %v3807 = vpack.c.b16 %v3717, %v3715
    %v3808 = vpack.c.b16 %v3720, %v3718
    %v3809 = vpack.c.b16 %v3721, %v3719
    %v3810 = vpack.c.b16 %v3724, %v3722
    %v3811 = vpack.c.b16 %v3725, %v3723
    %v3812 = vpack.c.b16 %v3728, %v3726
    %v3813 = vpack.c.b16 %v3729, %v3727
    %v3814 = vpack.c.b16 %v3732, %v3730
    %v3815 = vpack.c.b16 %v3733, %v3731
    %v3816 = vpack.c.b16 %v3736, %v3734
    %v3817 = vpack.c.b16 %v3737, %v3735
    %v3818 = vpack.c.b16 %v3740, %v3738
    %v3819 = vpack.c.b16 %v3741, %v3739
    %v3820 = vpack.c.b16 %v3744, %v3742
    %v3821 = vpack.c.b16 %v3745, %v3743
    %v3822 = vpack.c.b16 %v3748, %v3746
    %v3823 = vpack.c.b16 %v3749, %v3747
    %v3824 = vpack.c.b16 %v3752, %v3750
    %v3825 = vpack.c.b16 %v3753, %v3751
    %v3826 = vpack.c.b16 %v3756, %v3754
    %v3827 = vpack.c.b16 %v3757, %v3755
    %v3828 = vpack.c.b16 %v3760, %v3758
    %v3829 = vpack.c.b16 %v3761, %v3759
    %v3830 = vpack.c.b16 %v3764, %v3762
    %v3831 = vpack.c.b16 %v3765, %v3763
    %v3832 = vpack.c.b16 %v3768, %v3766
    %v3833 = vpack.c.b16 %v3769, %v3767
    %3898 = vmatprep.subr.bf16.mxu0 %v3771
    %3899 = vmatpush1.bf16.msra.mxu0 %v3770
    %3900 = vmatprep.subr.bf16.mxu0 %v3773
    %3901 = vmatpush1.bf16.msra.mxu0 %v3772
    %3902 = vmatprep.subr.bf16.mxu0 %v3775
    %3903 = vmatpush1.bf16.msra.mxu0 %v3774
    %3904 = vmatprep.subr.bf16.mxu0 %v3777
    %3905 = vmatpush1.bf16.msra.mxu0 %v3776
    %3906 = vmatprep.subr.bf16.mxu0 %v3779
    %3907 = vmatpush1.bf16.msra.mxu0 %v3778
    %3908 = vmatprep.subr.bf16.mxu0 %v3781
    %3909 = vmatpush1.bf16.msra.mxu0 %v3780
    %3910 = vmatprep.subr.bf16.mxu0 %v3783
    %3911 = vmatpush1.bf16.msra.mxu0 %v3782
    %3912 = vmatprep.subr.bf16.mxu0 %v3785
    %3913 = vmatpush1.bf16.msra.mxu0 %v3784
    %3914 = vmatprep.subr.bf16.mxu0 %v3787
    %3915 = vmatpush1.bf16.msra.mxu0 %v3786
    %3916 = vmatprep.subr.bf16.mxu0 %v3789
    %3917 = vmatpush1.bf16.msra.mxu0 %v3788
    %3918 = vmatprep.subr.bf16.mxu0 %v3791
    %3919 = vmatpush1.bf16.msra.mxu0 %v3790
    %3920 = vmatprep.subr.bf16.mxu0 %v3793
    %3921 = vmatpush1.bf16.msra.mxu0 %v3792
    %3922 = vmatprep.subr.bf16.mxu0 %v3795
    %3923 = vmatpush1.bf16.msra.mxu0 %v3794
    %3924 = vmatprep.subr.bf16.mxu0 %v3797
    %3925 = vmatpush1.bf16.msra.mxu0 %v3796
    %3926 = vmatprep.subr.bf16.mxu0 %v3799
    %3927 = vmatpush1.bf16.msra.mxu0 %v3798
    %3928 = vmatprep.subr.bf16.mxu0 %v3801
    %3929 = vmatpush1.bf16.msra.mxu0 %v3800
    %3930 = vmatprep.mubr.bf16.mxu0 %v3472
    %3931 = vmatmul.mubr.bf16.gmra.mrb[0].mxu0 %v3471
    %v3932 = vpop.f32.mrb[0].mxu0
    %v3933 = vadd.f32 %v3571, %v3932
    %v3934 = vpop.f32.mrb[0].mxu0
    %v3935 = vadd.f32 %v3575, %v3934
    %v3936 = vpop.f32.mrb[0].mxu0
    %v3937 = vadd.f32 %v3571, %v3936
    %v3938 = vpop.f32.mrb[0].mxu0
    %v3939 = vadd.f32 %v3575, %v3938
    %3940 = vmatprep.mubr.bf16.mxu0 %v3476
    %3941 = vmatmul.mubr.bf16.gmra.mrb[0].mxu0 %v3475
    %v3942 = vpop.f32.mrb[0].mxu0
    %v3943 = vadd.f32 %v3571, %v3942
    %v3944 = vpop.f32.mrb[0].mxu0
    %v3945 = vadd.f32 %v3575, %v3944
    %v3946 = vpop.f32.mrb[0].mxu0
    %v3947 = vadd.f32 %v3571, %v3946
    %v3948 = vpop.f32.mrb[0].mxu0
    %v3949 = vadd.f32 %v3575, %v3948
    %3950 = vmatprep.mubr.bf16.mxu0 %v3480
    %3951 = vmatmul.mubr.bf16.gmra.mrb[0].mxu0 %v3479
    %v3952 = vpop.f32.mrb[0].mxu0
    %v3953 = vadd.f32 %v3571, %v3952
    %v3954 = vpop.f32.mrb[0].mxu0
    %v3955 = vadd.f32 %v3575, %v3954
    %v3956 = vpop.f32.mrb[0].mxu0
    %v3957 = vadd.f32 %v3571, %v3956
    %v3958 = vpop.f32.mrb[0].mxu0
    %v3959 = vadd.f32 %v3575, %v3958
    %3960 = vmatprep.mubr.bf16.mxu0 %v3484
    %3961 = vmatmul.mubr.bf16.gmra.mrb[0].mxu0 %v3483
    %v3962 = vpop.f32.mrb[0].mxu0
    %v3963 = vadd.f32 %v3571, %v3962
    %v3964 = vpop.f32.mrb[0].mxu0
    %v3965 = vadd.f32 %v3575, %v3964
    %v3966 = vpop.f32.mrb[0].mxu0
    %v3967 = vadd.f32 %v3571, %v3966
    %v3968 = vpop.f32.mrb[0].mxu0
    %v3969 = vadd.f32 %v3575, %v3968
    %3970 = vmatprep.mubr.bf16.mxu0 %v3488
    %3971 = vmatmul.mubr.bf16.gmra.mrb[0].mxu0 %v3487
    %v3972 = vpop.f32.mrb[0].mxu0
    %v3973 = vadd.f32 %v3571, %v3972
    %v3974 = vpop.f32.mrb[0].mxu0
    %v3975 = vadd.f32 %v3575, %v3974
    %v3976 = vpop.f32.mrb[0].mxu0
    %v3977 = vadd.f32 %v3571, %v3976
    %v3978 = vpop.f32.mrb[0].mxu0
    %v3979 = vadd.f32 %v3575, %v3978
    %3980 = vmatprep.mubr.bf16.mxu0 %v3492
    %3981 = vmatmul.mubr.bf16.gmra.mrb[0].mxu0 %v3491
    %v3982 = vpop.f32.mrb[0].mxu0
    %v3983 = vadd.f32 %v3571, %v3982
    %v3984 = vpop.f32.mrb[0].mxu0
    %v3985 = vadd.f32 %v3575, %v3984
    %v3986 = vpop.f32.mrb[0].mxu0
    %v3987 = vadd.f32 %v3571, %v3986
    %v3988 = vpop.f32.mrb[0].mxu0
    %v3989 = vadd.f32 %v3575, %v3988
    %3990 = vmatprep.mubr.bf16.mxu0 %v3496
    %3991 = vmatmul.mubr.bf16.gmra.mrb[0].mxu0 %v3495
    %v3992 = vpop.f32.mrb[0].mxu0
    %v3993 = vadd.f32 %v3571, %v3992
    %v3994 = vpop.f32.mrb[0].mxu0
    %v3995 = vadd.f32 %v3575, %v3994
    %v3996 = vpop.f32.mrb[0].mxu0
    %v3997 = vadd.f32 %v3571, %v3996
    %v3998 = vpop.f32.mrb[0].mxu0
    %v3999 = vadd.f32 %v3575, %v3998
    %4000 = vmatprep.mubr.bf16.mxu0 %v3500
    %4001 = vmatmul.mubr.bf16.gmra.mrb[0].mxu0 %v3499
    %v4002 = vpop.f32.mrb[0].mxu0
    %v4003 = vadd.f32 %v3571, %v4002
    %v4004 = vpop.f32.mrb[0].mxu0
    %v4005 = vadd.f32 %v3575, %v4004
    %v4006 = vpop.f32.mrb[0].mxu0
    %v4007 = vadd.f32 %v3571, %v4006
    %v4008 = vpop.f32.mrb[0].mxu0
    %v4009 = vadd.f32 %v3575, %v4008
    %4010 = vdwg.mxu0
    %4011 = vmatprep.subr.bf16.mxu0 %v3803
    %4012 = vmatpush1.bf16.msra.mxu0 %v3802
    %4013 = vmatprep.subr.bf16.mxu0 %v3805
    %4014 = vmatpush1.bf16.msra.mxu0 %v3804
    %4015 = vmatprep.subr.bf16.mxu0 %v3807
    %4016 = vmatpush1.bf16.msra.mxu0 %v3806
    %4017 = vmatprep.subr.bf16.mxu0 %v3809
    %4018 = vmatpush1.bf16.msra.mxu0 %v3808
    %4019 = vmatprep.subr.bf16.mxu0 %v3811
    %4020 = vmatpush1.bf16.msra.mxu0 %v3810
    %4021 = vmatprep.subr.bf16.mxu0 %v3813
    %4022 = vmatpush1.bf16.msra.mxu0 %v3812
    %4023 = vmatprep.subr.bf16.mxu0 %v3815
    %4024 = vmatpush1.bf16.msra.mxu0 %v3814
    %4025 = vmatprep.subr.bf16.mxu0 %v3817
    %4026 = vmatpush1.bf16.msra.mxu0 %v3816
    %4027 = vmatprep.subr.bf16.mxu0 %v3819
    %4028 = vmatpush1.bf16.msra.mxu0 %v3818
    %4029 = vmatprep.subr.bf16.mxu0 %v3821
    %4030 = vmatpush1.bf16.msra.mxu0 %v3820
    %4031 = vmatprep.subr.bf16.mxu0 %v3823
    %4032 = vmatpush1.bf16.msra.mxu0 %v3822
    %4033 = vmatprep.subr.bf16.mxu0 %v3825
    %4034 = vmatpush1.bf16.msra.mxu0 %v3824
    %4035 = vmatprep.subr.bf16.mxu0 %v3827
    %4036 = vmatpush1.bf16.msra.mxu0 %v3826
    %4037 = vmatprep.subr.bf16.mxu0 %v3829
    %4038 = vmatpush1.bf16.msra.mxu0 %v3828
    %4039 = vmatprep.subr.bf16.mxu0 %v3831
    %4040 = vmatpush1.bf16.msra.mxu0 %v3830
    %4041 = vmatprep.subr.bf16.mxu0 %v3833
    %4042 = vmatpush1.bf16.msra.mxu0 %v3832
    %4043 = vmatprep.mubr.bf16.mxu0 %v3474
    %4044 = vmatmul.mubr.bf16.gmra.mrb[0].mxu0 %v3473
    %v4045 = vpop.f32.mrb[0].mxu0
    %v4046 = vadd.f32 %v3933, %v4045
    %v4047 = vpop.f32.mrb[0].mxu0
    %v4048 = vadd.f32 %v3935, %v4047
    %v4049 = vpop.f32.mrb[0].mxu0
    %v4050 = vadd.f32 %v3937, %v4049
    %v4051 = vpop.f32.mrb[0].mxu0
    %v4052 = vadd.f32 %v3939, %v4051
    %4053 = vmatprep.mubr.bf16.mxu0 %v3478
    %4054 = vmatmul.mubr.bf16.gmra.mrb[0].mxu0 %v3477
    %v4055 = vpop.f32.mrb[0].mxu0
    %v4056 = vadd.f32 %v3943, %v4055
    %v4057 = vpop.f32.mrb[0].mxu0
    %v4058 = vadd.f32 %v3945, %v4057
    %v4059 = vpop.f32.mrb[0].mxu0
    %v4060 = vadd.f32 %v3947, %v4059
    %v4061 = vpop.f32.mrb[0].mxu0
    %v4062 = vadd.f32 %v3949, %v4061
    %4063 = vmatprep.mubr.bf16.mxu0 %v3482
    %4064 = vmatmul.mubr.bf16.gmra.mrb[0].mxu0 %v3481
    %v4065 = vpop.f32.mrb[0].mxu0
    %v4066 = vadd.f32 %v3953, %v4065
    %v4067 = vpop.f32.mrb[0].mxu0
    %v4068 = vadd.f32 %v3955, %v4067
    %v4069 = vpop.f32.mrb[0].mxu0
    %v4070 = vadd.f32 %v3957, %v4069
    %v4071 = vpop.f32.mrb[0].mxu0
    %v4072 = vadd.f32 %v3959, %v4071
    %4073 = vmatprep.mubr.bf16.mxu0 %v3486
    %4074 = vmatmul.mubr.bf16.gmra.mrb[0].mxu0 %v3485
    %v4075 = vpop.f32.mrb[0].mxu0
    %v4076 = vadd.f32 %v3963, %v4075
    %v4077 = vpop.f32.mrb[0].mxu0
    %v4078 = vadd.f32 %v3965, %v4077
    %v4079 = vpop.f32.mrb[0].mxu0
    %v4080 = vadd.f32 %v3967, %v4079
    %v4081 = vpop.f32.mrb[0].mxu0
    %v4082 = vadd.f32 %v3969, %v4081
    %4083 = vmatprep.mubr.bf16.mxu0 %v3490
    %4084 = vmatmul.mubr.bf16.gmra.mrb[0].mxu0 %v3489
    %v4085 = vpop.f32.mrb[0].mxu0
    %v4086 = vadd.f32 %v3973, %v4085
    %v4087 = vpop.f32.mrb[0].mxu0
    %v4088 = vadd.f32 %v3975, %v4087
    %v4089 = vpop.f32.mrb[0].mxu0
    %v4090 = vadd.f32 %v3977, %v4089
    %v4091 = vpop.f32.mrb[0].mxu0
    %v4092 = vadd.f32 %v3979, %v4091
    %4093 = vmatprep.mubr.bf16.mxu0 %v3494
    %4094 = vmatmul.mubr.bf16.gmra.mrb[0].mxu0 %v3493
    %v4095 = vpop.f32.mrb[0].mxu0
    %v4096 = vadd.f32 %v3983, %v4095
    %v4097 = vpop.f32.mrb[0].mxu0
    %v4098 = vadd.f32 %v3985, %v4097
    %v4099 = vpop.f32.mrb[0].mxu0
    %v4100 = vadd.f32 %v3987, %v4099
    %v4101 = vpop.f32.mrb[0].mxu0
    %v4102 = vadd.f32 %v3989, %v4101
    %4103 = vmatprep.mubr.bf16.mxu0 %v3498
    %4104 = vmatmul.mubr.bf16.gmra.mrb[0].mxu0 %v3497
    %v4105 = vpop.f32.mrb[0].mxu0
    %v4106 = vadd.f32 %v3993, %v4105
    %v4107 = vpop.f32.mrb[0].mxu0
    %v4108 = vadd.f32 %v3995, %v4107
    %v4109 = vpop.f32.mrb[0].mxu0
    %v4110 = vadd.f32 %v3997, %v4109
    %v4111 = vpop.f32.mrb[0].mxu0
    %v4112 = vadd.f32 %v3999, %v4111
    %4113 = vmatprep.mubr.bf16.mxu0 %v3502
    %4114 = vmatmul.mubr.bf16.gmra.mrb[0].mxu0 %v3501
    %v4115 = vpop.f32.mrb[0].mxu0
    %v4116 = vadd.f32 %v4003, %v4115
    %v4117 = vpop.f32.mrb[0].mxu0
    %v4118 = vadd.f32 %v4005, %v4117
    %v4119 = vpop.f32.mrb[0].mxu0
    %v4120 = vadd.f32 %v4007, %v4119
    %v4121 = vpop.f32.mrb[0].mxu0
    %v4122 = vadd.f32 %v4009, %v4121
    %4123 = vdwg.mxu0
    %v4124 = vmax.f32 %v4046, 0.0
    %v4125 = vmax.f32 %v4048, 0.0
    %v4126 = vmax.f32 %v4050, 0.0
    %v4127 = vmax.f32 %v4052, 0.0
    %v4128 = vmax.f32 %v4056, 0.0
    %v4129 = vmax.f32 %v4058, 0.0
    %v4130 = vmax.f32 %v4060, 0.0
    %v4131 = vmax.f32 %v4062, 0.0
    %v4132 = vmax.f32 %v4066, 0.0
    %v4133 = vmax.f32 %v4068, 0.0
    %v4134 = vmax.f32 %v4070, 0.0
    %v4135 = vmax.f32 %v4072, 0.0
    %v4136 = vmax.f32 %v4076, 0.0
    %v4137 = vmax.f32 %v4078, 0.0
    %v4138 = vmax.f32 %v4080, 0.0
    %v4139 = vmax.f32 %v4082, 0.0
    %v4140 = vmax.f32 %v4086, 0.0
    %v4141 = vmax.f32 %v4088, 0.0
    %v4142 = vmax.f32 %v4090, 0.0
    %v4143 = vmax.f32 %v4092, 0.0
    %v4144 = vmax.f32 %v4096, 0.0
    %v4145 = vmax.f32 %v4098, 0.0
    %v4146 = vmax.f32 %v4100, 0.0
    %v4147 = vmax.f32 %v4102, 0.0
    %v4148 = vmax.f32 %v4106, 0.0
    %v4149 = vmax.f32 %v4108, 0.0
    %v4150 = vmax.f32 %v4110, 0.0
    %v4151 = vmax.f32 %v4112, 0.0
    %v4152 = vmax.f32 %v4116, 0.0
    %v4153 = vmax.f32 %v4118, 0.0
    %v4154 = vmax.f32 %v4120, 0.0
    %v4155 = vmax.f32 %v4122, 0.0
    %v4156 = vpack.c.bf16 %v4126, %v4124
    %v4157 = vpack.c.bf16 %v4127, %v4125
    %v4158 = vpack.c.bf16 %v4130, %v4128
    %v4159 = vpack.c.bf16 %v4131, %v4129
    %v4160 = vpack.c.bf16 %v4134, %v4132
    %v4161 = vpack.c.bf16 %v4135, %v4133
    %v4162 = vpack.c.bf16 %v4138, %v4136
    %v4163 = vpack.c.bf16 %v4139, %v4137
    %v4164 = vpack.c.bf16 %v4142, %v4140
    %v4165 = vpack.c.bf16 %v4143, %v4141
    %v4166 = vpack.c.bf16 %v4146, %v4144
    %v4167 = vpack.c.bf16 %v4147, %v4145
    %v4168 = vpack.c.bf16 %v4150, %v4148
    %v4169 = vpack.c.bf16 %v4151, %v4149
    %v4170 = vpack.c.bf16 %v4154, %v4152
    %v4171 = vpack.c.bf16 %v4155, %v4153
    %v4172 = vld [vmem:[#allocation8] sm:$0xf]
    %v4173 = vld [vmem:[#allocation8 + $0x4] sm:$0xf]
    %v4174 = vld [vmem:[#allocation8 + $0x8] sm:$0xf]
    %v4175 = vld [vmem:[#allocation8 + $0xc] sm:$0xf]
    %v4176 = vld [vmem:[#allocation8 + $0x10] sm:$0xf]
    %v4177 = vld [vmem:[#allocation8 + $0x14] sm:$0xf]
    %v4178 = vld [vmem:[#allocation8 + $0x18] sm:$0xf]
    %v4179 = vld [vmem:[#allocation8 + $0x1c] sm:$0xf]
    %v4180 = vld [vmem:[#allocation8 + $0x20] sm:$0xf]
    %v4181 = vld [vmem:[#allocation8 + $0x24] sm:$0xf]
    %v4182 = vld [vmem:[#allocation8 + $0x28] sm:$0xf]
    %v4183 = vld [vmem:[#allocation8 + $0x2c] sm:$0xf]
    %v4184 = vld [vmem:[#allocation8 + $0x30] sm:$0xf]
    %v4185 = vld [vmem:[#allocation8 + $0x34] sm:$0xf]
    %v4186 = vld [vmem:[#allocation8 + $0x38] sm:$0xf]
    %v4187 = vld [vmem:[#allocation8 + $0x3c] sm:$0xf]
    %v4188 = vld [vmem:[#allocation8 + $0x40] sm:$0xf]
    %v4189 = vld [vmem:[#allocation8 + $0x44] sm:$0xf]
    %v4190 = vld [vmem:[#allocation8 + $0x48] sm:$0xf]
    %v4191 = vld [vmem:[#allocation8 + $0x4c] sm:$0xf]
    %v4192 = vld [vmem:[#allocation8 + $0x50] sm:$0xf]
    %v4193 = vld [vmem:[#allocation8 + $0x54] sm:$0xf]
    %v4194 = vld [vmem:[#allocation8 + $0x58] sm:$0xf]
    %v4195 = vld [vmem:[#allocation8 + $0x5c] sm:$0xf]
    %v4196 = vld [vmem:[#allocation8 + $0x60] sm:$0xf]
    %v4197 = vld [vmem:[#allocation8 + $0x64] sm:$0xf]
    %v4198 = vld [vmem:[#allocation8 + $0x68] sm:$0xf]
    %v4199 = vld [vmem:[#allocation8 + $0x6c] sm:$0xf]
    %v4200 = vld [vmem:[#allocation8 + $0x70] sm:$0xf]
    %v4201 = vld [vmem:[#allocation8 + $0x74] sm:$0xf]
    %v4202 = vld [vmem:[#allocation8 + $0x78] sm:$0xf]
    %v4203 = vld [vmem:[#allocation8 + $0x7c] sm:$0xf]
    %v4205 = vlaneseq
    %v4206 = vshrl.u32 %v4205, 7
    %v4207 = vsub.s32 0, %v4206
    %v4208 = vrot.slane %v83, %v4207
    %v4242 = vunpack.c.l.b16 %v4172
    %v4243 = vunpack.c.l.b16 %v4173
    %v4244 = vunpack.c.l.b16 %v4174
    %v4245 = vunpack.c.l.b16 %v4175
    %v4246 = vunpack.c.l.b16 %v4176
    %v4247 = vunpack.c.l.b16 %v4177
    %v4248 = vunpack.c.l.b16 %v4178
    %v4249 = vunpack.c.l.b16 %v4179
    %v4250 = vunpack.c.l.b16 %v4180
    %v4251 = vunpack.c.l.b16 %v4181
    %v4252 = vunpack.c.l.b16 %v4182
    %v4253 = vunpack.c.l.b16 %v4183
    %v4254 = vunpack.c.l.b16 %v4184
    %v4255 = vunpack.c.l.b16 %v4185
    %v4256 = vunpack.c.l.b16 %v4186
    %v4257 = vunpack.c.l.b16 %v4187
    %v4258 = vunpack.c.l.b16 %v4188
    %v4259 = vunpack.c.l.b16 %v4189
    %v4260 = vunpack.c.l.b16 %v4190
    %v4261 = vunpack.c.l.b16 %v4191
    %v4262 = vunpack.c.l.b16 %v4192
    %v4263 = vunpack.c.l.b16 %v4193
    %v4264 = vunpack.c.l.b16 %v4194
    %v4265 = vunpack.c.l.b16 %v4195
    %v4266 = vunpack.c.l.b16 %v4196
    %v4267 = vunpack.c.l.b16 %v4197
    %v4268 = vunpack.c.l.b16 %v4198
    %v4269 = vunpack.c.l.b16 %v4199
    %v4270 = vunpack.c.l.b16 %v4200
    %v4271 = vunpack.c.l.b16 %v4201
    %v4272 = vunpack.c.l.b16 %v4202
    %v4273 = vunpack.c.l.b16 %v4203
    %v4274 = vpack.c.b16 %v4243, %v4242
    %v4275 = vpack.c.b16 %v4245, %v4244
    %v4276 = vpack.c.b16 %v4247, %v4246
    %v4277 = vpack.c.b16 %v4249, %v4248
    %v4278 = vpack.c.b16 %v4251, %v4250
    %v4279 = vpack.c.b16 %v4253, %v4252
    %v4280 = vpack.c.b16 %v4255, %v4254
    %v4281 = vpack.c.b16 %v4257, %v4256
    %v4282 = vpack.c.b16 %v4259, %v4258
    %v4283 = vpack.c.b16 %v4261, %v4260
    %v4284 = vpack.c.b16 %v4263, %v4262
    %v4285 = vpack.c.b16 %v4265, %v4264
    %v4286 = vpack.c.b16 %v4267, %v4266
    %v4287 = vpack.c.b16 %v4269, %v4268
    %v4288 = vpack.c.b16 %v4271, %v4270
    %v4289 = vpack.c.b16 %v4273, %v4272
    %4306 = vmatprep.subr.bf16.mxu0 0
    %4307 = vmatpush1.bf16.msra.mxu0 %v4274
    %4308 = vmatprep.subr.bf16.mxu0 0
    %4309 = vmatpush1.bf16.msra.mxu0 %v4275
    %4310 = vmatprep.subr.bf16.mxu0 0
    %4311 = vmatpush1.bf16.msra.mxu0 %v4276
    %4312 = vmatprep.subr.bf16.mxu0 0
    %4313 = vmatpush1.bf16.msra.mxu0 %v4277
    %4314 = vmatprep.subr.bf16.mxu0 0
    %4315 = vmatpush1.bf16.msra.mxu0 %v4278
    %4316 = vmatprep.subr.bf16.mxu0 0
    %4317 = vmatpush1.bf16.msra.mxu0 %v4279
    %4318 = vmatprep.subr.bf16.mxu0 0
    %4319 = vmatpush1.bf16.msra.mxu0 %v4280
    %4320 = vmatprep.subr.bf16.mxu0 0
    %4321 = vmatpush1.bf16.msra.mxu0 %v4281
    %4322 = vmatprep.subr.bf16.mxu0 0
    %4323 = vmatpush1.bf16.msra.mxu0 %v4282
    %4324 = vmatprep.subr.bf16.mxu0 0
    %4325 = vmatpush1.bf16.msra.mxu0 %v4283
    %4326 = vmatprep.subr.bf16.mxu0 0
    %4327 = vmatpush1.bf16.msra.mxu0 %v4284
    %4328 = vmatprep.subr.bf16.mxu0 0
    %4329 = vmatpush1.bf16.msra.mxu0 %v4285
    %4330 = vmatprep.subr.bf16.mxu0 0
    %4331 = vmatpush1.bf16.msra.mxu0 %v4286
    %4332 = vmatprep.subr.bf16.mxu0 0
    %4333 = vmatpush1.bf16.msra.mxu0 %v4287
    %4334 = vmatprep.subr.bf16.mxu0 0
    %4335 = vmatpush1.bf16.msra.mxu0 %v4288
    %4336 = vmatprep.subr.bf16.mxu0 0
    %4337 = vmatpush1.bf16.msra.mxu0 %v4289
    %4338 = vmatprep.mubr.bf16.mxu0 %v4157
    %4339 = vmatmul.mubr.bf16.gmra.mrb[0].mxu0 %v4156
    %v4340 = vpop.f32.mrb[0].mxu0
    %v4341 = vadd.f32 %v4208, %v4340
    %v4342 = vpop.f32.mrb[0].mxu0
    %v4343 = vpop.f32.mrb[0].mxu0
    %v4344 = vadd.f32 %v4208, %v4343
    %v4345 = vpop.f32.mrb[0].mxu0
    %4346 = vmatprep.mubr.bf16.mxu0 %v4159
    %4347 = vmatmul.mubr.bf16.gmra.mrb[0].mxu0 %v4158
    %v4348 = vpop.f32.mrb[0].mxu0
    %v4349 = vadd.f32 %v4208, %v4348
    %v4350 = vpop.f32.mrb[0].mxu0
    %v4351 = vpop.f32.mrb[0].mxu0
    %v4352 = vadd.f32 %v4208, %v4351
    %v4353 = vpop.f32.mrb[0].mxu0
    %4354 = vmatprep.mubr.bf16.mxu0 %v4161
    %4355 = vmatmul.mubr.bf16.gmra.mrb[0].mxu0 %v4160
    %v4356 = vpop.f32.mrb[0].mxu0
    %v4357 = vadd.f32 %v4208, %v4356
    %v4358 = vpop.f32.mrb[0].mxu0
    %v4359 = vpop.f32.mrb[0].mxu0
    %v4360 = vadd.f32 %v4208, %v4359
    %v4361 = vpop.f32.mrb[0].mxu0
    %4362 = vmatprep.mubr.bf16.mxu0 %v4163
    %4363 = vmatmul.mubr.bf16.gmra.mrb[0].mxu0 %v4162
    %v4364 = vpop.f32.mrb[0].mxu0
    %v4365 = vadd.f32 %v4208, %v4364
    %v4366 = vpop.f32.mrb[0].mxu0
    %v4367 = vpop.f32.mrb[0].mxu0
    %v4368 = vadd.f32 %v4208, %v4367
    %v4369 = vpop.f32.mrb[0].mxu0
    %4370 = vmatprep.mubr.bf16.mxu0 %v4165
    %4371 = vmatmul.mubr.bf16.gmra.mrb[0].mxu0 %v4164
    %v4372 = vpop.f32.mrb[0].mxu0
    %v4373 = vadd.f32 %v4208, %v4372
    %v4374 = vpop.f32.mrb[0].mxu0
    %v4375 = vpop.f32.mrb[0].mxu0
    %v4376 = vadd.f32 %v4208, %v4375
    %v4377 = vpop.f32.mrb[0].mxu0
    %4378 = vmatprep.mubr.bf16.mxu0 %v4167
    %4379 = vmatmul.mubr.bf16.gmra.mrb[0].mxu0 %v4166
    %v4380 = vpop.f32.mrb[0].mxu0
    %v4381 = vadd.f32 %v4208, %v4380
    %v4382 = vpop.f32.mrb[0].mxu0
    %v4383 = vpop.f32.mrb[0].mxu0
    %v4384 = vadd.f32 %v4208, %v4383
    %v4385 = vpop.f32.mrb[0].mxu0
    %4386 = vmatprep.mubr.bf16.mxu0 %v4169
    %4387 = vmatmul.mubr.bf16.gmra.mrb[0].mxu0 %v4168
    %v4388 = vpop.f32.mrb[0].mxu0
    %v4389 = vadd.f32 %v4208, %v4388
    %v4390 = vpop.f32.mrb[0].mxu0
    %v4391 = vpop.f32.mrb[0].mxu0
    %v4392 = vadd.f32 %v4208, %v4391
    %v4393 = vpop.f32.mrb[0].mxu0
    %4394 = vmatprep.mubr.bf16.mxu0 %v4171
    %4395 = vmatmul.mubr.bf16.gmra.mrb[0].mxu0 %v4170
    %v4396 = vpop.f32.mrb[0].mxu0
    %v4397 = vadd.f32 %v4208, %v4396
    %v4398 = vpop.f32.mrb[0].mxu0
    %v4399 = vpop.f32.mrb[0].mxu0
    %v4400 = vadd.f32 %v4208, %v4399
    %v4401 = vpop.f32.mrb[0].mxu0
    %4402 = vdwg.mxu0
    %4403 = vst [vmem:[#allocation10] sm:$0xff] %v4341
    %4404 = vst [vmem:[#allocation10 + $0x8] sm:$0xff] %v4344
    %4405 = vst [vmem:[#allocation10 + $0x10] sm:$0xff] %v4349
    %4406 = vst [vmem:[#allocation10 + $0x18] sm:$0xff] %v4352
    %4407 = vst [vmem:[#allocation10 + $0x20] sm:$0xff] %v4357
    %4408 = vst [vmem:[#allocation10 + $0x28] sm:$0xff] %v4360
    %4409 = vst [vmem:[#allocation10 + $0x30] sm:$0xff] %v4365
    %4410 = vst [vmem:[#allocation10 + $0x38] sm:$0xff] %v4368
    %4411 = vst [vmem:[#allocation10 + $0x40] sm:$0xff] %v4373
    %4412 = vst [vmem:[#allocation10 + $0x48] sm:$0xff] %v4376
    %4413 = vst [vmem:[#allocation10 + $0x50] sm:$0xff] %v4381
    %4414 = vst [vmem:[#allocation10 + $0x58] sm:$0xff] %v4384
    %4415 = vst [vmem:[#allocation10 + $0x60] sm:$0xff] %v4389
    %4416 = vst [vmem:[#allocation10 + $0x68] sm:$0xff] %v4392
    %4417 = vst [vmem:[#allocation10 + $0x70] sm:$0xff] %v4397
    %4418 = vst [vmem:[#allocation10 + $0x78] sm:$0xff] %v4400
    // Predicated region
    $region42: #{tpu_custom_call.1} parent=1 // pred_check
      _
    $region43: #{tpu_custom_call.1} parent=1 // pred_check_branch
      %4420 = sbr.rel (0) target = $region45
    $region44: #{tpu_custom_call.1} parent=1 // pred_region
      %s4422 = ssub.s32 2048, 2048
      %4423 = vsyncadd [#allocation4], %s4422
      %s4424 = sshll.u32 [#allocation10], 4
      %s4425 = int_to_ptr.vmem [resolvable:$true] %s4424
      %4430 = dma.vmem_to_hbm [thread:$0]  %s4425, 2048, %s6, [#allocation4], 128, 128, 8
    $region45: #{tpu_custom_call.1} parent=1 // pred_fallthru
      _
    // Predicated region
    $region46: #{tpu_custom_call.1} parent=1 // pred_check
      _
    $region47: #{tpu_custom_call.1} parent=1 // pred_check_branch
      %4432 = sbr.rel (0) target = $region49
    $region48: #{tpu_custom_call.1} parent=1 // pred_region
      %4433 = dma.done [#allocation4], 2048
    $region49: #{tpu_custom_call.1} parent=1 // pred_fallthru
      _
    %4434 = vsyncpa [#allocation3], 1
    %4435 = vsyncpa [#allocation6], 1
    %4436 = vsyncpa [#allocation9], 1
    %4437 = vsyncpa [#allocation4], 1

</llo_original>
